<compile_context>
chip_gen: v7x
topology: tpu7x:2x2x1
jax: 0.10.0
libtpu: 0.0.40
codegen_flags: <defaults>
</compile_context>

<pallas_src>
import functools

import jax
import jax.numpy as jnp
from jax.experimental import pallas as pl
from jax.experimental.pallas import tpu as pltpu


# ---------------------------------------------------------------------------
# Phase 1: 3x3 conv (stride 1, halo'd input block) + per-block channel stats.
# ---------------------------------------------------------------------------
def conv_stats_kernel(x_ref, w_ref, y_ref, s_ref, *, block_rows, out_w, cin):
    """One (batch, row-block) grid step.

    x_ref: (block_rows+2, out_w+2, cin)  bf16  halo'd NHWC input block
    w_ref: (9*cin, Cp)                   bf16  im2col-ordered weights
    y_ref: (block_rows*out_w, Cp)        f32   conv output block (staging)
    s_ref: (2, Cp)                       f32   per-block [sum ; sum of squares]
    """
    m = block_rows * out_w
    x = x_ref[...]
    wmat = w_ref[...]

    # 9 accumulating MXU dots against shifted windows -- no im2col scratch.
    # Accumulation goes straight into the f32 output block (explicit
    # accumulator; the output ref doubles as the accumulator).
    def tap_dot(kh, kw):
        win = x[kh:kh + block_rows, kw:kw + out_w, :].reshape(m, cin)
        t = kh * 3 + kw
        w_tap = wmat[t * cin:(t + 1) * cin, :]
        return jnp.dot(win, w_tap, preferred_element_type=jnp.float32)

    y_ref[...] = tap_dot(0, 0)
    for kh in range(3):
        for kw in range(3):
            if kh == 0 and kw == 0:
                continue
            y_ref[...] += tap_dot(kh, kw)

    # Per-channel partial statistics for this block (f32). Could be moved onto
    # the otherwise-idle MXU as ones(1, m) @ acc if the XLU ever binds.
    acc = y_ref[...]
    s_ref[0:1, :] = jnp.sum(acc, axis=0, keepdims=True)
    s_ref[1:2, :] = jnp.sum(acc * acc, axis=0, keepdims=True)


# ---------------------------------------------------------------------------
# Phase 2: y * scale + shift, then ReLU (scale/shift folded from batch stats).
# ---------------------------------------------------------------------------
def bn_relu_kernel(y_ref, scale_ref, shift_ref, o_ref):
    o_ref[...] = jnp.maximum(y_ref[...] * scale_ref[...] + shift_ref[...], 0.0)


# ---------------------------------------------------------------------------
# Helpers
# ---------------------------------------------------------------------------
def _vmem_limit_bytes():
    """Generation-aware VMEM limit (v5e/v6e: 128 MiB, v7x: 64 MiB physical)."""
    try:
        cap = pltpu.get_tpu_info().vmem_capacity_bytes
        return int(cap * 3) // 4          # leave headroom for internal scratch
    except Exception:                     # fall back to compiler defaults
        return None


def _pick_row_block(h, w, cin, cp, budget_bytes):
    """Largest row tile (a divisor of H) whose per-step working set fits."""
    best = 1
    for th in range(1, h + 1):
        if h % th:
            continue
        x_blk = (th + 2) * (w + 2) * cin * 2      # bf16 halo'd input block
        y_blk = th * w * cp * 4                   # f32 conv staging block
        w_blk = 9 * cin * cp * 2                  # bf16 weights (resident)
        s_blk = 2 * cp * 4
        # inputs/outputs are double-buffered by the pipeline; keep one extra
        # output-block copy of headroom for in-kernel temporaries.
        need = 2 * (x_blk + y_blk + s_blk) + w_blk + y_blk
        if need <= budget_bytes:
            best = th
    return best


# ---------------------------------------------------------------------------
# Wrapper
# ---------------------------------------------------------------------------
def conv_block_forward(x_nchw, w_oihw, bias, gamma, beta, *, eps=1e-5,
                       row_block=None):
    """ConvBlock forward: (N, Cin, H, W) f32 -> (N, Cout, H, W) f32."""
    N, Cin, H, W = x_nchw.shape
    Cout = w_oihw.shape[0]
    del bias  # per-channel conv bias cancels exactly under training-mode BN

    LANE = 128
    Cp = ((Cout + LANE - 1) // LANE) * LANE       # lane-dense channel count

    vmem_limit = _vmem_limit_bytes()
    tile_budget = (vmem_limit // 2) if vmem_limit else (24 << 20)
    if row_block is None:
        row_block = _pick_row_block(H, W, Cin, Cp, tile_budget)
    TH = row_block
    assert H % TH == 0, "row_block must divide H"
    # TODO(synk): general H needs a remainder row-block (pl.BoundedSlice) path.
    nH = H // TH
    THW = TH * W

    cparams = pltpu.CompilerParams(
        dimension_semantics=("parallel", "parallel"),   # v7x megacore friendly
        vmem_limit_bytes=vmem_limit)

    # --- layout plumbing (plain JAX): NCHW->NHWC, pad, halo'd blocks, bf16 ---
    x = jnp.transpose(x_nchw, (0, 2, 3, 1)).astype(jnp.bfloat16)
    x_pad = jnp.pad(x, ((0, 0), (1, 1), (1, 1), (0, 0)))
    # TODO(synk): the 2 duplicated halo rows per block could be avoided with
    # pl.Element-indexed overlapping BlockSpecs.
    x_blocks = jnp.stack(
        [x_pad[:, i * TH:i * TH + TH + 2] for i in range(nH)], axis=1)
    # x_blocks: (N, nH, TH+2, W+2, Cin) bf16

    # OIHW -> (kh, kw, ci, co) -> (9*Cin, Cout) -> pad Cout -> Cp, bf16.
    w_mat = jnp.transpose(w_oihw, (2, 3, 1, 0)).reshape(9 * Cin, Cout)
    w_mat = jnp.pad(w_mat, ((0, 0), (0, Cp - Cout))).astype(jnp.bfloat16)

    # --- phase 1: conv + per-block channel statistics -----------------------
    y_conv, stats = pl.pallas_call(
        functools.partial(conv_stats_kernel, block_rows=TH, out_w=W, cin=Cin),
        out_shape=(jax.ShapeDtypeStruct((N, nH, THW, Cp), jnp.float32),
                   jax.ShapeDtypeStruct((N, nH, 2, Cp), jnp.float32)),
        grid_spec=pltpu.PrefetchScalarGridSpec(
            num_scalar_prefetch=0,
            grid=(N, nH),
            in_specs=[
                pl.BlockSpec((None, None, TH + 2, W + 2, Cin),
                             lambda i, j: (i, j, 0, 0, 0)),
                pl.BlockSpec((9 * Cin, Cp), lambda i, j: (0, 0)),
            ],
            out_specs=[
                pl.BlockSpec((None, None, THW, Cp), lambda i, j: (i, j, 0, 0)),
                pl.BlockSpec((None, None, 2, Cp), lambda i, j: (i, j, 0, 0)),
            ]),
        compiler_params=cparams,
    )(x_blocks, w_mat)

    # --- fold batch statistics into per-channel scale/shift (O(Cp), tiny) ---
    count = float(N * H * W)
    totals = jnp.sum(stats, axis=(0, 1))                   # (2, Cp)
    mean = totals[0] / count
    var = totals[1] / count - mean * mean
    var = jnp.maximum(var, 0.0)   # cancellation guard; TODO(synk): shifted sums
    inv_std = jax.lax.rsqrt(var + eps)
    gamma_p = jnp.pad(gamma.astype(jnp.float32), (0, Cp - Cout))
    beta_p = jnp.pad(beta.astype(jnp.float32), (0, Cp - Cout))
    scale = (gamma_p * inv_std).reshape(1, Cp)
    shift = (beta_p - mean * gamma_p * inv_std).reshape(1, Cp)

    # --- phase 2: normalize + ReLU, in place over the staging buffer --------
    out_blocks = pl.pallas_call(
        bn_relu_kernel,
        out_shape=jax.ShapeDtypeStruct((N, nH, THW, Cp), jnp.float32),
        grid_spec=pltpu.PrefetchScalarGridSpec(
            num_scalar_prefetch=0,
            grid=(N, nH),
            in_specs=[
                pl.BlockSpec((None, None, THW, Cp), lambda i, j: (i, j, 0, 0)),
                pl.BlockSpec((1, Cp), lambda i, j: (0, 0)),
                pl.BlockSpec((1, Cp), lambda i, j: (0, 0)),
            ],
            out_specs=pl.BlockSpec((None, None, THW, Cp),
                                   lambda i, j: (i, j, 0, 0))),
        compiler_params=cparams,
        input_output_aliases={0: 0},      # reuse the conv staging buffer
    )(y_conv, scale, shift)

    # blocks -> (N, H, W, Cp) -> strip channel padding -> NCHW.
    out = out_blocks.reshape(N, H, W, Cp)[..., :Cout]
    return jnp.transpose(out, (0, 3, 1, 2))


# ---------------------------------------------------------------------------
# Pure-JAX f32 reference (same math; bias included — it cancels under BN).
# ---------------------------------------------------------------------------
def conv_block_ref(x_nchw, w_oihw, bias, gamma, beta, *, eps=1e-5):
    y = jax.lax.conv_general_dilated(
        x_nchw, w_oihw, window_strides=(1, 1), padding=((1, 1), (1, 1)),
        dimension_numbers=("NCHW", "OIHW", "NCHW"))
    y = y + bias[None, :, None, None]
    mean = jnp.mean(y, axis=(0, 2, 3), keepdims=True)
    var = jnp.mean((y - mean) ** 2, axis=(0, 2, 3), keepdims=True)  # biased
    y = (y - mean) * jax.lax.rsqrt(var + eps)
    y = y * gamma[None, :, None, None] + beta[None, :, None, None]
    return jnp.maximum(y, 0.0)


if __name__ == "__main__":
    key = jax.random.PRNGKey(0)
    k1, k2, k3, k4, k5 = jax.random.split(key, 5)

    N, Cin, Cout, H, W = 2, 4, 8, 16, 16

    x = jax.random.normal(k1, (N, Cin, H, W), dtype=jnp.float32)
    # Deterministic "synthetic checkpoint" params (nn.Conv2d / BatchNorm2d).
    w = jax.random.normal(k2, (Cout, Cin, 3, 3), dtype=jnp.float32) * 0.1
    b = jax.random.normal(k3, (Cout,), dtype=jnp.float32) * 0.1
    gamma = 1.0 + 0.1 * jax.random.normal(k4, (Cout,), dtype=jnp.float32)
    beta = 0.1 * jax.random.normal(k5, (Cout,), dtype=jnp.float32)

    out = jax.jit(conv_block_forward)(x, w, b, gamma, beta)
    out = jax.block_until_ready(out)

    ref = conv_block_ref(x, w, b, gamma, beta)
    assert out.shape == (N, Cout, H, W)
    # bf16 activations/weights (f32 accumulation) vs. a pure-f32 reference:
    # loosened tolerance, as flagged in the perf review.
    max_err = float(jnp.max(jnp.abs(out - ref)))
    assert jnp.allclose(out, ref, atol=3e-2, rtol=3e-2), f"max |err| = {max_err}"

    print("KERNEL_OK")
</pallas_src>

<mosaic_0001>
module attributes {stable_mosaic.version = 11 : i64} {
  func.func @conv_stats_kernel(%arg0: i32, %arg1: i32, %arg2: memref<1x1x18x18x4xbf16, #tpu.memory_space<vmem>>, %arg3: memref<36x128xbf16, #tpu.memory_space<vmem>>, %arg4: memref<1x1x256x128xf32, #tpu.memory_space<vmem>>, %arg5: memref<1x1x2x128xf32, #tpu.memory_space<vmem>>) attributes {dimension_semantics = [#tpu.dimension_semantics<parallel>, #tpu.dimension_semantics<parallel>], iteration_bounds = array<i64: 2, 1>, scalar_prefetch = 0 : i64, scratch_operands = 0 : i64, tpu.core_type = #tpu.core_type<tc>, window_params = [{transform_indices = @transform_0, window_bounds = array<i64: 1, 1, 18, 18, 4>}, {pipeline_mode = #tpu.pipeline_mode<synchronous>, transform_indices = @transform_1, window_bounds = array<i64: 36, 128>}, {transform_indices = @transform_2, window_bounds = array<i64: 1, 1, 256, 128>}, {transform_indices = @transform_3, window_bounds = array<i64: 1, 1, 2, 128>}]} {
    %c0 = arith.constant 0 : index
    %c0_0 = arith.constant 0 : index
    %c0_1 = arith.constant 0 : index
    %c0_2 = arith.constant 0 : index
    %c0_3 = arith.constant 0 : index
    %0 = vector.load %arg2[%c0, %c0_0, %c0_1, %c0_2, %c0_3] : memref<1x1x18x18x4xbf16, #tpu.memory_space<vmem>>, vector<1x1x18x18x4xbf16>
    %1 = vector.shape_cast %0 : vector<1x1x18x18x4xbf16> to vector<18x18x4xbf16>
    %c0_4 = arith.constant 0 : index
    %c0_5 = arith.constant 0 : index
    %2 = vector.load %arg3[%c0_4, %c0_5] : memref<36x128xbf16, #tpu.memory_space<vmem>>, vector<36x128xbf16>
    %3 = vector.extract_strided_slice %1 {offsets = [0, 0, 0], sizes = [16, 16, 4], strides = [1, 1, 1]} : vector<18x18x4xbf16> to vector<16x16x4xbf16>
    %4 = vector.shape_cast %3 : vector<16x16x4xbf16> to vector<256x4xbf16>
    %5 = vector.extract_strided_slice %2 {offsets = [0, 0], sizes = [4, 128], strides = [1, 1]} : vector<36x128xbf16> to vector<4x128xbf16>
    %cst = arith.constant dense<0.000000e+00> : vector<256x128xf32>
    %6 = tpu.matmul %4, %5, %cst {dimension_numbers = #tpu.dot_dimension_numbers<[1], [0], [0], [1], [0, 0, 1, 1], [], []>} : vector<256x4xbf16>, vector<4x128xbf16>, vector<256x128xf32> -> vector<256x128xf32>
    %c0_6 = arith.constant 0 : index
    %c0_7 = arith.constant 0 : index
    %c0_8 = arith.constant 0 : index
    %c0_9 = arith.constant 0 : index
    %7 = vector.load %arg4[%c0_6, %c0_7, %c0_8, %c0_9] : memref<1x1x256x128xf32, #tpu.memory_space<vmem>>, vector<1x1x256x128xf32>
    %8 = vector.shape_cast %7 : vector<1x1x256x128xf32> to vector<256x128xf32>
    %9 = vector.shape_cast %6 : vector<256x128xf32> to vector<1x1x256x128xf32>
    tpu.vector_store %arg4[%c0_6, %c0_7, %c0_8, %c0_9], %9 {strides = array<i32>} : memref<1x1x256x128xf32, #tpu.memory_space<vmem>>, vector<1x1x256x128xf32>,
    %c0_10 = arith.constant 0 : index
    %c0_11 = arith.constant 0 : index
    %c0_12 = arith.constant 0 : index
    %c0_13 = arith.constant 0 : index
    %10 = vector.load %arg4[%c0_10, %c0_11, %c0_12, %c0_13] : memref<1x1x256x128xf32, #tpu.memory_space<vmem>>, vector<1x1x256x128xf32>
    %11 = vector.shape_cast %10 : vector<1x1x256x128xf32> to vector<256x128xf32>
    %12 = vector.extract_strided_slice %1 {offsets = [0, 1, 0], sizes = [16, 16, 4], strides = [1, 1, 1]} : vector<18x18x4xbf16> to vector<16x16x4xbf16>
    %13 = vector.shape_cast %12 : vector<16x16x4xbf16> to vector<256x4xbf16>
    %14 = vector.extract_strided_slice %2 {offsets = [4, 0], sizes = [4, 128], strides = [1, 1]} : vector<36x128xbf16> to vector<4x128xbf16>
    %cst_14 = arith.constant dense<0.000000e+00> : vector<256x128xf32>
    %15 = tpu.matmul %13, %14, %cst_14 {dimension_numbers = #tpu.dot_dimension_numbers<[1], [0], [0], [1], [0, 0, 1, 1], [], []>} : vector<256x4xbf16>, vector<4x128xbf16>, vector<256x128xf32> -> vector<256x128xf32>
    %16 = arith.addf %11, %15 : vector<256x128xf32>
    %c0_15 = arith.constant 0 : index
    %c0_16 = arith.constant 0 : index
    %c0_17 = arith.constant 0 : index
    %c0_18 = arith.constant 0 : index
    %17 = vector.load %arg4[%c0_15, %c0_16, %c0_17, %c0_18] : memref<1x1x256x128xf32, #tpu.memory_space<vmem>>, vector<1x1x256x128xf32>
    %18 = vector.shape_cast %17 : vector<1x1x256x128xf32> to vector<256x128xf32>
    %19 = vector.shape_cast %16 : vector<256x128xf32> to vector<1x1x256x128xf32>
    tpu.vector_store %arg4[%c0_15, %c0_16, %c0_17, %c0_18], %19 {strides = array<i32>} : memref<1x1x256x128xf32, #tpu.memory_space<vmem>>, vector<1x1x256x128xf32>,
    %c0_19 = arith.constant 0 : index
    %c0_20 = arith.constant 0 : index
    %c0_21 = arith.constant 0 : index
    %c0_22 = arith.constant 0 : index
    %20 = vector.load %arg4[%c0_19, %c0_20, %c0_21, %c0_22] : memref<1x1x256x128xf32, #tpu.memory_space<vmem>>, vector<1x1x256x128xf32>
    %21 = vector.shape_cast %20 : vector<1x1x256x128xf32> to vector<256x128xf32>
    %22 = vector.extract_strided_slice %1 {offsets = [0, 2, 0], sizes = [16, 16, 4], strides = [1, 1, 1]} : vector<18x18x4xbf16> to vector<16x16x4xbf16>
    %23 = vector.shape_cast %22 : vector<16x16x4xbf16> to vector<256x4xbf16>
    %24 = vector.extract_strided_slice %2 {offsets = [8, 0], sizes = [4, 128], strides = [1, 1]} : vector<36x128xbf16> to vector<4x128xbf16>
    %cst_23 = arith.constant dense<0.000000e+00> : vector<256x128xf32>
    %25 = tpu.matmul %23, %24, %cst_23 {dimension_numbers = #tpu.dot_dimension_numbers<[1], [0], [0], [1], [0, 0, 1, 1], [], []>} : vector<256x4xbf16>, vector<4x128xbf16>, vector<256x128xf32> -> vector<256x128xf32>
    %26 = arith.addf %21, %25 : vector<256x128xf32>
    %c0_24 = arith.constant 0 : index
    %c0_25 = arith.constant 0 : index
    %c0_26 = arith.constant 0 : index
    %c0_27 = arith.constant 0 : index
    %27 = vector.load %arg4[%c0_24, %c0_25, %c0_26, %c0_27] : memref<1x1x256x128xf32, #tpu.memory_space<vmem>>, vector<1x1x256x128xf32>
    %28 = vector.shape_cast %27 : vector<1x1x256x128xf32> to vector<256x128xf32>
    %29 = vector.shape_cast %26 : vector<256x128xf32> to vector<1x1x256x128xf32>
    tpu.vector_store %arg4[%c0_24, %c0_25, %c0_26, %c0_27], %29 {strides = array<i32>} : memref<1x1x256x128xf32, #tpu.memory_space<vmem>>, vector<1x1x256x128xf32>,
    %c0_28 = arith.constant 0 : index
    %c0_29 = arith.constant 0 : index
    %c0_30 = arith.constant 0 : index
    %c0_31 = arith.constant 0 : index
    %30 = vector.load %arg4[%c0_28, %c0_29, %c0_30, %c0_31] : memref<1x1x256x128xf32, #tpu.memory_space<vmem>>, vector<1x1x256x128xf32>
    %31 = vector.shape_cast %30 : vector<1x1x256x128xf32> to vector<256x128xf32>
    %32 = vector.extract_strided_slice %1 {offsets = [1, 0, 0], sizes = [16, 16, 4], strides = [1, 1, 1]} : vector<18x18x4xbf16> to vector<16x16x4xbf16>
    %33 = vector.shape_cast %32 : vector<16x16x4xbf16> to vector<256x4xbf16>
    %34 = vector.extract_strided_slice %2 {offsets = [12, 0], sizes = [4, 128], strides = [1, 1]} : vector<36x128xbf16> to vector<4x128xbf16>
    %cst_32 = arith.constant dense<0.000000e+00> : vector<256x128xf32>
    %35 = tpu.matmul %33, %34, %cst_32 {dimension_numbers = #tpu.dot_dimension_numbers<[1], [0], [0], [1], [0, 0, 1, 1], [], []>} : vector<256x4xbf16>, vector<4x128xbf16>, vector<256x128xf32> -> vector<256x128xf32>
    %36 = arith.addf %31, %35 : vector<256x128xf32>
    %c0_33 = arith.constant 0 : index
    %c0_34 = arith.constant 0 : index
    %c0_35 = arith.constant 0 : index
    %c0_36 = arith.constant 0 : index
    %37 = vector.load %arg4[%c0_33, %c0_34, %c0_35, %c0_36] : memref<1x1x256x128xf32, #tpu.memory_space<vmem>>, vector<1x1x256x128xf32>
    %38 = vector.shape_cast %37 : vector<1x1x256x128xf32> to vector<256x128xf32>
    %39 = vector.shape_cast %36 : vector<256x128xf32> to vector<1x1x256x128xf32>
    tpu.vector_store %arg4[%c0_33, %c0_34, %c0_35, %c0_36], %39 {strides = array<i32>} : memref<1x1x256x128xf32, #tpu.memory_space<vmem>>, vector<1x1x256x128xf32>,
    %c0_37 = arith.constant 0 : index
    %c0_38 = arith.constant 0 : index
    %c0_39 = arith.constant 0 : index
    %c0_40 = arith.constant 0 : index
    %40 = vector.load %arg4[%c0_37, %c0_38, %c0_39, %c0_40] : memref<1x1x256x128xf32, #tpu.memory_space<vmem>>, vector<1x1x256x128xf32>
    %41 = vector.shape_cast %40 : vector<1x1x256x128xf32> to vector<256x128xf32>
    %42 = vector.extract_strided_slice %1 {offsets = [1, 1, 0], sizes = [16, 16, 4], strides = [1, 1, 1]} : vector<18x18x4xbf16> to vector<16x16x4xbf16>
    %43 = vector.shape_cast %42 : vector<16x16x4xbf16> to vector<256x4xbf16>
    %44 = vector.extract_strided_slice %2 {offsets = [16, 0], sizes = [4, 128], strides = [1, 1]} : vector<36x128xbf16> to vector<4x128xbf16>
    %cst_41 = arith.constant dense<0.000000e+00> : vector<256x128xf32>
    %45 = tpu.matmul %43, %44, %cst_41 {dimension_numbers = #tpu.dot_dimension_numbers<[1], [0], [0], [1], [0, 0, 1, 1], [], []>} : vector<256x4xbf16>, vector<4x128xbf16>, vector<256x128xf32> -> vector<256x128xf32>
    %46 = arith.addf %41, %45 : vector<256x128xf32>
    %c0_42 = arith.constant 0 : index
    %c0_43 = arith.constant 0 : index
    %c0_44 = arith.constant 0 : index
    %c0_45 = arith.constant 0 : index
    %47 = vector.load %arg4[%c0_42, %c0_43, %c0_44, %c0_45] : memref<1x1x256x128xf32, #tpu.memory_space<vmem>>, vector<1x1x256x128xf32>
    %48 = vector.shape_cast %47 : vector<1x1x256x128xf32> to vector<256x128xf32>
    %49 = vector.shape_cast %46 : vector<256x128xf32> to vector<1x1x256x128xf32>
    tpu.vector_store %arg4[%c0_42, %c0_43, %c0_44, %c0_45], %49 {strides = array<i32>} : memref<1x1x256x128xf32, #tpu.memory_space<vmem>>, vector<1x1x256x128xf32>,
    %c0_46 = arith.constant 0 : index
    %c0_47 = arith.constant 0 : index
    %c0_48 = arith.constant 0 : index
    %c0_49 = arith.constant 0 : index
    %50 = vector.load %arg4[%c0_46, %c0_47, %c0_48, %c0_49] : memref<1x1x256x128xf32, #tpu.memory_space<vmem>>, vector<1x1x256x128xf32>
    %51 = vector.shape_cast %50 : vector<1x1x256x128xf32> to vector<256x128xf32>
    %52 = vector.extract_strided_slice %1 {offsets = [1, 2, 0], sizes = [16, 16, 4], strides = [1, 1, 1]} : vector<18x18x4xbf16> to vector<16x16x4xbf16>
    %53 = vector.shape_cast %52 : vector<16x16x4xbf16> to vector<256x4xbf16>
    %54 = vector.extract_strided_slice %2 {offsets = [20, 0], sizes = [4, 128], strides = [1, 1]} : vector<36x128xbf16> to vector<4x128xbf16>
    %cst_50 = arith.constant dense<0.000000e+00> : vector<256x128xf32>
    %55 = tpu.matmul %53, %54, %cst_50 {dimension_numbers = #tpu.dot_dimension_numbers<[1], [0], [0], [1], [0, 0, 1, 1], [], []>} : vector<256x4xbf16>, vector<4x128xbf16>, vector<256x128xf32> -> vector<256x128xf32>
    %56 = arith.addf %51, %55 : vector<256x128xf32>
    %c0_51 = arith.constant 0 : index
    %c0_52 = arith.constant 0 : index
    %c0_53 = arith.constant 0 : index
    %c0_54 = arith.constant 0 : index
    %57 = vector.load %arg4[%c0_51, %c0_52, %c0_53, %c0_54] : memref<1x1x256x128xf32, #tpu.memory_space<vmem>>, vector<1x1x256x128xf32>
    %58 = vector.shape_cast %57 : vector<1x1x256x128xf32> to vector<256x128xf32>
    %59 = vector.shape_cast %56 : vector<256x128xf32> to vector<1x1x256x128xf32>
    tpu.vector_store %arg4[%c0_51, %c0_52, %c0_53, %c0_54], %59 {strides = array<i32>} : memref<1x1x256x128xf32, #tpu.memory_space<vmem>>, vector<1x1x256x128xf32>,
    %c0_55 = arith.constant 0 : index
    %c0_56 = arith.constant 0 : index
    %c0_57 = arith.constant 0 : index
    %c0_58 = arith.constant 0 : index
    %60 = vector.load %arg4[%c0_55, %c0_56, %c0_57, %c0_58] : memref<1x1x256x128xf32, #tpu.memory_space<vmem>>, vector<1x1x256x128xf32>
    %61 = vector.shape_cast %60 : vector<1x1x256x128xf32> to vector<256x128xf32>
    %62 = vector.extract_strided_slice %1 {offsets = [2, 0, 0], sizes = [16, 16, 4], strides = [1, 1, 1]} : vector<18x18x4xbf16> to vector<16x16x4xbf16>
    %63 = vector.shape_cast %62 : vector<16x16x4xbf16> to vector<256x4xbf16>
    %64 = vector.extract_strided_slice %2 {offsets = [24, 0], sizes = [4, 128], strides = [1, 1]} : vector<36x128xbf16> to vector<4x128xbf16>
    %cst_59 = arith.constant dense<0.000000e+00> : vector<256x128xf32>
    %65 = tpu.matmul %63, %64, %cst_59 {dimension_numbers = #tpu.dot_dimension_numbers<[1], [0], [0], [1], [0, 0, 1, 1], [], []>} : vector<256x4xbf16>, vector<4x128xbf16>, vector<256x128xf32> -> vector<256x128xf32>
    %66 = arith.addf %61, %65 : vector<256x128xf32>
    %c0_60 = arith.constant 0 : index
    %c0_61 = arith.constant 0 : index
    %c0_62 = arith.constant 0 : index
    %c0_63 = arith.constant 0 : index
    %67 = vector.load %arg4[%c0_60, %c0_61, %c0_62, %c0_63] : memref<1x1x256x128xf32, #tpu.memory_space<vmem>>, vector<1x1x256x128xf32>
    %68 = vector.shape_cast %67 : vector<1x1x256x128xf32> to vector<256x128xf32>
    %69 = vector.shape_cast %66 : vector<256x128xf32> to vector<1x1x256x128xf32>
    tpu.vector_store %arg4[%c0_60, %c0_61, %c0_62, %c0_63], %69 {strides = array<i32>} : memref<1x1x256x128xf32, #tpu.memory_space<vmem>>, vector<1x1x256x128xf32>,
    %c0_64 = arith.constant 0 : index
    %c0_65 = arith.constant 0 : index
    %c0_66 = arith.constant 0 : index
    %c0_67 = arith.constant 0 : index
    %70 = vector.load %arg4[%c0_64, %c0_65, %c0_66, %c0_67] : memref<1x1x256x128xf32, #tpu.memory_space<vmem>>, vector<1x1x256x128xf32>
    %71 = vector.shape_cast %70 : vector<1x1x256x128xf32> to vector<256x128xf32>
    %72 = vector.extract_strided_slice %1 {offsets = [2, 1, 0], sizes = [16, 16, 4], strides = [1, 1, 1]} : vector<18x18x4xbf16> to vector<16x16x4xbf16>
    %73 = vector.shape_cast %72 : vector<16x16x4xbf16> to vector<256x4xbf16>
    %74 = vector.extract_strided_slice %2 {offsets = [28, 0], sizes = [4, 128], strides = [1, 1]} : vector<36x128xbf16> to vector<4x128xbf16>
    %cst_68 = arith.constant dense<0.000000e+00> : vector<256x128xf32>
    %75 = tpu.matmul %73, %74, %cst_68 {dimension_numbers = #tpu.dot_dimension_numbers<[1], [0], [0], [1], [0, 0, 1, 1], [], []>} : vector<256x4xbf16>, vector<4x128xbf16>, vector<256x128xf32> -> vector<256x128xf32>
    %76 = arith.addf %71, %75 : vector<256x128xf32>
    %c0_69 = arith.constant 0 : index
    %c0_70 = arith.constant 0 : index
    %c0_71 = arith.constant 0 : index
    %c0_72 = arith.constant 0 : index
    %77 = vector.load %arg4[%c0_69, %c0_70, %c0_71, %c0_72] : memref<1x1x256x128xf32, #tpu.memory_space<vmem>>, vector<1x1x256x128xf32>
    %78 = vector.shape_cast %77 : vector<1x1x256x128xf32> to vector<256x128xf32>
    %79 = vector.shape_cast %76 : vector<256x128xf32> to vector<1x1x256x128xf32>
    tpu.vector_store %arg4[%c0_69, %c0_70, %c0_71, %c0_72], %79 {strides = array<i32>} : memref<1x1x256x128xf32, #tpu.memory_space<vmem>>, vector<1x1x256x128xf32>,
    %c0_73 = arith.constant 0 : index
    %c0_74 = arith.constant 0 : index
    %c0_75 = arith.constant 0 : index
    %c0_76 = arith.constant 0 : index
    %80 = vector.load %arg4[%c0_73, %c0_74, %c0_75, %c0_76] : memref<1x1x256x128xf32, #tpu.memory_space<vmem>>, vector<1x1x256x128xf32>
    %81 = vector.shape_cast %80 : vector<1x1x256x128xf32> to vector<256x128xf32>
    %82 = vector.extract_strided_slice %1 {offsets = [2, 2, 0], sizes = [16, 16, 4], strides = [1, 1, 1]} : vector<18x18x4xbf16> to vector<16x16x4xbf16>
    %83 = vector.shape_cast %82 : vector<16x16x4xbf16> to vector<256x4xbf16>
    %84 = vector.extract_strided_slice %2 {offsets = [32, 0], sizes = [4, 128], strides = [1, 1]} : vector<36x128xbf16> to vector<4x128xbf16>
    %cst_77 = arith.constant dense<0.000000e+00> : vector<256x128xf32>
    %85 = tpu.matmul %83, %84, %cst_77 {dimension_numbers = #tpu.dot_dimension_numbers<[1], [0], [0], [1], [0, 0, 1, 1], [], []>} : vector<256x4xbf16>, vector<4x128xbf16>, vector<256x128xf32> -> vector<256x128xf32>
    %86 = arith.addf %81, %85 : vector<256x128xf32>
    %c0_78 = arith.constant 0 : index
    %c0_79 = arith.constant 0 : index
    %c0_80 = arith.constant 0 : index
    %c0_81 = arith.constant 0 : index
    %87 = vector.load %arg4[%c0_78, %c0_79, %c0_80, %c0_81] : memref<1x1x256x128xf32, #tpu.memory_space<vmem>>, vector<1x1x256x128xf32>
    %88 = vector.shape_cast %87 : vector<1x1x256x128xf32> to vector<256x128xf32>
    %89 = vector.shape_cast %86 : vector<256x128xf32> to vector<1x1x256x128xf32>
    tpu.vector_store %arg4[%c0_78, %c0_79, %c0_80, %c0_81], %89 {strides = array<i32>} : memref<1x1x256x128xf32, #tpu.memory_space<vmem>>, vector<1x1x256x128xf32>,
    %c0_82 = arith.constant 0 : index
    %c0_83 = arith.constant 0 : index
    %c0_84 = arith.constant 0 : index
    %c0_85 = arith.constant 0 : index
    %90 = vector.load %arg4[%c0_82, %c0_83, %c0_84, %c0_85] : memref<1x1x256x128xf32, #tpu.memory_space<vmem>>, vector<1x1x256x128xf32>
    %91 = vector.shape_cast %90 : vector<1x1x256x128xf32> to vector<256x128xf32>
    %cst_86 = arith.constant dense<0.000000e+00> : vector<128xf32>
    %92 = vector.multi_reduction <add>, %91, %cst_86 [0] : vector<256x128xf32> to vector<128xf32>
    %93 = vector.shape_cast %92 : vector<128xf32> to vector<1x128xf32>
    %c0_87 = arith.constant 0 : index
    %c0_88 = arith.constant 0 : index
    %c0_89 = arith.constant 0 : index
    %c0_90 = arith.constant 0 : index
    %94 = vector.load %arg5[%c0_87, %c0_88, %c0_89, %c0_90] : memref<1x1x2x128xf32, #tpu.memory_space<vmem>>, vector<1x1x1x128xf32>
    %95 = vector.shape_cast %94 : vector<1x1x1x128xf32> to vector<1x128xf32>
    %96 = vector.shape_cast %93 : vector<1x128xf32> to vector<1x1x1x128xf32>
    tpu.vector_store %arg5[%c0_87, %c0_88, %c0_89, %c0_90], %96 {strides = array<i32>} : memref<1x1x2x128xf32, #tpu.memory_space<vmem>>, vector<1x1x1x128xf32>,
    %97 = arith.mulf %91, %91 : vector<256x128xf32>
    %cst_91 = arith.constant dense<0.000000e+00> : vector<128xf32>
    %98 = vector.multi_reduction <add>, %97, %cst_91 [0] : vector<256x128xf32> to vector<128xf32>
    %99 = vector.shape_cast %98 : vector<128xf32> to vector<1x128xf32>
    %c0_92 = arith.constant 0 : index
    %c0_93 = arith.constant 0 : index
    %c1 = arith.constant 1 : index
    %c0_94 = arith.constant 0 : index
    %100 = vector.load %arg5[%c0_92, %c0_93, %c1, %c0_94] : memref<1x1x2x128xf32, #tpu.memory_space<vmem>>, vector<1x1x1x128xf32>
    %101 = vector.shape_cast %100 : vector<1x1x1x128xf32> to vector<1x128xf32>
    %102 = vector.shape_cast %99 : vector<1x128xf32> to vector<1x1x1x128xf32>
    tpu.vector_store %arg5[%c0_92, %c0_93, %c1, %c0_94], %102 {strides = array<i32>} : memref<1x1x2x128xf32, #tpu.memory_space<vmem>>, vector<1x1x1x128xf32>,
    return
  }
  func.func @transform_0(%arg0: i32, %arg1: i32) -> (i32, i32, i32, i32, i32) {
    %c0_i32 = arith.constant 0 : i32
    %c0_i32_0 = arith.constant 0 : i32
    %c0_i32_1 = arith.constant 0 : i32
    %c0_i32_2 = arith.constant 0 : i32
    return %arg0, %arg1, %c0_i32, %c0_i32_0, %c0_i32_1 : i32, i32, i32, i32, i32
  }
  func.func @transform_1(%arg0: i32, %arg1: i32) -> (i32, i32) {
    %c0_i32 = arith.constant 0 : i32
    %c0_i32_0 = arith.constant 0 : i32
    %c0_i32_1 = arith.constant 0 : i32
    return %c0_i32, %c0_i32_0 : i32, i32
  }
  func.func @transform_2(%arg0: i32, %arg1: i32) -> (i32, i32, i32, i32) {
    %c0_i32 = arith.constant 0 : i32
    %c0_i32_0 = arith.constant 0 : i32
    %c0_i32_1 = arith.constant 0 : i32
    return %arg0, %arg1, %c0_i32, %c0_i32_0 : i32, i32, i32, i32
  }
  func.func @transform_3(%arg0: i32, %arg1: i32) -> (i32, i32, i32, i32) {
    %c0_i32 = arith.constant 0 : i32
    %c0_i32_0 = arith.constant 0 : i32
    %c0_i32_1 = arith.constant 0 : i32
    return %arg0, %arg1, %c0_i32, %c0_i32_0 : i32, i32, i32, i32
  }
}

module attributes {stable_mosaic.version = 11 : i64} {
  func.func @bn_relu_kernel(%arg0: i32, %arg1: i32, %arg2: memref<1x1x256x128xf32, #tpu.memory_space<vmem>>, %arg3: memref<1x128xf32, #tpu.memory_space<vmem>>, %arg4: memref<1x128xf32, #tpu.memory_space<vmem>>, %arg5: memref<1x1x256x128xf32, #tpu.memory_space<vmem>>) attributes {dimension_semantics = [#tpu.dimension_semantics<parallel>, #tpu.dimension_semantics<parallel>], iteration_bounds = array<i64: 2, 1>, scalar_prefetch = 0 : i64, scratch_operands = 0 : i64, tpu.core_type = #tpu.core_type<tc>, window_params = [{transform_indices = @transform_0, window_bounds = array<i64: 1, 1, 256, 128>}, {pipeline_mode = #tpu.pipeline_mode<synchronous>, transform_indices = @transform_1, window_bounds = array<i64: 1, 128>}, {pipeline_mode = #tpu.pipeline_mode<synchronous>, transform_indices = @transform_2, window_bounds = array<i64: 1, 128>}, {transform_indices = @transform_3, window_bounds = array<i64: 1, 1, 256, 128>}]} {
    %c0 = arith.constant 0 : index
    %c0_0 = arith.constant 0 : index
    %c0_1 = arith.constant 0 : index
    %c0_2 = arith.constant 0 : index
    %0 = vector.load %arg2[%c0, %c0_0, %c0_1, %c0_2] : memref<1x1x256x128xf32, #tpu.memory_space<vmem>>, vector<1x1x256x128xf32>
    %1 = vector.shape_cast %0 : vector<1x1x256x128xf32> to vector<256x128xf32>
    %c0_3 = arith.constant 0 : index
    %c0_4 = arith.constant 0 : index
    %2 = vector.load %arg3[%c0_3, %c0_4] : memref<1x128xf32, #tpu.memory_space<vmem>>, vector<1x128xf32>
    %3 = vector.broadcast %2 : vector<1x128xf32> to vector<256x128xf32>
    %4 = arith.mulf %1, %3 : vector<256x128xf32>
    %c0_5 = arith.constant 0 : index
    %c0_6 = arith.constant 0 : index
    %5 = vector.load %arg4[%c0_5, %c0_6] : memref<1x128xf32, #tpu.memory_space<vmem>>, vector<1x128xf32>
    %6 = vector.broadcast %5 : vector<1x128xf32> to vector<256x128xf32>
    %7 = arith.addf %4, %6 : vector<256x128xf32>
    %cst = arith.constant 0.000000e+00 : f32
    %8 = vector.broadcast %cst : f32 to vector<256x128xf32>
    %9 = arith.maximumf %7, %8 : vector<256x128xf32>
    %c0_7 = arith.constant 0 : index
    %c0_8 = arith.constant 0 : index
    %c0_9 = arith.constant 0 : index
    %c0_10 = arith.constant 0 : index
    %10 = vector.load %arg5[%c0_7, %c0_8, %c0_9, %c0_10] : memref<1x1x256x128xf32, #tpu.memory_space<vmem>>, vector<1x1x256x128xf32>
    %11 = vector.shape_cast %10 : vector<1x1x256x128xf32> to vector<256x128xf32>
    %12 = vector.shape_cast %9 : vector<256x128xf32> to vector<1x1x256x128xf32>
    tpu.vector_store %arg5[%c0_7, %c0_8, %c0_9, %c0_10], %12 {strides = array<i32>} : memref<1x1x256x128xf32, #tpu.memory_space<vmem>>, vector<1x1x256x128xf32>,
    return
  }
  func.func @transform_0(%arg0: i32, %arg1: i32) -> (i32, i32, i32, i32) {
    %c0_i32 = arith.constant 0 : i32
    %c0_i32_0 = arith.constant 0 : i32
    %c0_i32_1 = arith.constant 0 : i32
    return %arg0, %arg1, %c0_i32, %c0_i32_0 : i32, i32, i32, i32
  }
  func.func @transform_1(%arg0: i32, %arg1: i32) -> (i32, i32) {
    %c0_i32 = arith.constant 0 : i32
    %c0_i32_0 = arith.constant 0 : i32
    %c0_i32_1 = arith.constant 0 : i32
    return %c0_i32, %c0_i32_0 : i32, i32
  }
  func.func @transform_2(%arg0: i32, %arg1: i32) -> (i32, i32) {
    %c0_i32 = arith.constant 0 : i32
    %c0_i32_0 = arith.constant 0 : i32
    %c0_i32_1 = arith.constant 0 : i32
    return %c0_i32, %c0_i32_0 : i32, i32
  }
  func.func @transform_3(%arg0: i32, %arg1: i32) -> (i32, i32, i32, i32) {
    %c0_i32 = arith.constant 0 : i32
    %c0_i32_0 = arith.constant 0 : i32
    %c0_i32_1 = arith.constant 0 : i32
    return %arg0, %arg1, %c0_i32, %c0_i32_0 : i32, i32, i32, i32
  }
}

</mosaic_0001>

<llo_original>
// kernel: conv_block_forward.3
$region0: #{conv_block_forward.3}
  #allocation0 [shape = 'u32[]', space=smem, size = 0x4, offset = 0x4, fixed_abs, tag = 'smem constant byte address 0x4 - core index']
  #allocation1 [shape = 'u32[144,128]{1,0:T(1,128)}', space=vmem, size = 0x12000, scoped, tag = 'internal scratch']
  %s0 = inlined_call_operand.vmem [shape: f32[2,1,256,128], index: 0, kind: input, shape index: {}, may-alias: {0,3}]
  %s1 = inlined_call_operand.vmem [shape: f32[1,128], index: 1, kind: input, shape index: {}]
  %s2 = inlined_call_operand.vmem [shape: f32[1,128], index: 2, kind: input, shape index: {}]
  %s3 = inlined_call_operand.vmem [shape: f32[2,1,256,128], index: 3, kind: output, shape index: {}, may-alias: {0,3}]
  %s4 = sld [smem:[#allocation0]]
  $region45: #{conv_block_forward.3} parent=0
    _
  %s6 = ssub.s32 1, %s4
  %s7 = scalar_select 0, %s6, %s4
  loop: start=0, step=1, limit=4
  $region2: #{conv_block_forward.3} parent=0 // loop_pre_header
    _
  $region3: #{conv_block_forward.3} parent=0 // loop_header
    %s9 = sphi 0, %s13
    %p10 = scmp.ge.s32.totalorder %s9, 4
    %s16 = sphi 0, %s28
    %s17 = sphi 0, %s24
    %s18 = sphi 0, %s16
    %s19 = sphi 0, %s17
    %s20 = sphi 0, %s18
    %s21 = sphi 0, %s19
    %s33 = sphi 0, %s35
    %s36 = sphi 0, %s33
    %s37 = sphi 0, %s36
    %s53 = sphi 0, %s37
    %s57 = sphi 0, %s57
    %s59 = sphi 0, %s57
    %s60 = sphi 0, %s59
    %s74 = sphi 0, %s60
    %s78 = sphi 0, %s78
    %s80 = sphi 0, %s78
    %s81 = sphi 0, %s80
    %s95 = sphi 0, %s81
    %s103 = sphi 0, %s105
    %s106 = sphi 0, %s103
    %s107 = sphi 0, %s106
    %s123 = sphi 0, %s107
  $region4: #{conv_block_forward.3} parent=0 // loop_header_branch
    %12 = sbr.rel (%p10) target = $region8
  $region5: #{conv_block_forward.3} parent=0 // loop_body
    %s14 = ssub.s32 %s9, 1
    %s15 = ssub.s32 %s9, 2
    %s22 = sadd.s32 1, %s17
    %p23 = scmp.ge.s32.totalorder %s22, 1
    %s24 = scalar_select %p23, 0, %s22
    %s25 = sadd.s32 1, %s16
    %s26 = scalar_select %p23, %s25, %s16
    %p27 = scmp.ge.s32.totalorder %s26, 2
    %s28 = scalar_select %p27, 0, %s26
    %s29 = ssub.s32 %s16, %s28
    %s30 = ssub.s32 %s17, %s24
    %s31 = sor.u32 %s29, %s30
    %p32 = scmp.eq.s32.totalorder %s31, 0
    %s34 = sadd.s32 %s33, 1
    %s35 = scalar_select %p32, %s33, %s34
    %p38 = pneg %p32
    %p39 = scmp.eq.s32.totalorder %s9, 1
    %p40 = por %p38, %p39
    %p41 = scmp.ne.s32.totalorder %s33, %s36
    %p42 = scmp.eq.s32.totalorder %s9, 0
    %p43 = por %p41, %p42
    %p44 = scmp.ne.s32.totalorder %s33, %s36
    %p45 = scmp.eq.s32.totalorder %s14, 1
    %p46 = por %p44, %p45
    %p47 = scmp.ne.s32.totalorder %s36, %s37
    %p48 = scmp.eq.s32.totalorder %s14, 0
    %p49 = por %p47, %p48
    %p50 = scmp.ne.s32.totalorder %s36, %s37
    %p51 = scmp.eq.s32.totalorder %s15, 1
    %p52 = por %p50, %p51
    %p54 = scmp.ne.s32.totalorder %s37, %s53
    %p55 = scmp.eq.s32.totalorder %s15, 0
    %p56 = por %p54, %p55
    %s58 = sadd.s32 %s57, 1
    %p61 = scmp.eq.s32.totalorder %s9, 1
    %p62 = scmp.ne.s32.totalorder %s57, %s59
    %p63 = scmp.eq.s32.totalorder %s9, 0
    %p64 = por %p62, %p63
    %p65 = scmp.ne.s32.totalorder %s57, %s59
    %p66 = scmp.eq.s32.totalorder %s14, 1
    %p67 = por %p65, %p66
    %p68 = scmp.ne.s32.totalorder %s59, %s60
    %p69 = scmp.eq.s32.totalorder %s14, 0
    %p70 = por %p68, %p69
    %p71 = scmp.ne.s32.totalorder %s59, %s60
    %p72 = scmp.eq.s32.totalorder %s15, 1
    %p73 = por %p71, %p72
    %p75 = scmp.ne.s32.totalorder %s60, %s74
    %p76 = scmp.eq.s32.totalorder %s15, 0
    %p77 = por %p75, %p76
    %s79 = sadd.s32 %s78, 1
    %p82 = scmp.eq.s32.totalorder %s9, 1
    %p83 = scmp.ne.s32.totalorder %s78, %s80
    %p84 = scmp.eq.s32.totalorder %s9, 0
    %p85 = por %p83, %p84
    %p86 = scmp.ne.s32.totalorder %s78, %s80
    %p87 = scmp.eq.s32.totalorder %s14, 1
    %p88 = por %p86, %p87
    %p89 = scmp.ne.s32.totalorder %s80, %s81
    %p90 = scmp.eq.s32.totalorder %s14, 0
    %p91 = por %p89, %p90
    %p92 = scmp.ne.s32.totalorder %s80, %s81
    %p93 = scmp.eq.s32.totalorder %s15, 1
    %p94 = por %p92, %p93
    %p96 = scmp.ne.s32.totalorder %s81, %s95
    %p97 = scmp.eq.s32.totalorder %s15, 0
    %p98 = por %p96, %p97
    %s99 = ssub.s32 %s16, %s28
    %s100 = ssub.s32 %s17, %s24
    %s101 = sor.u32 %s99, %s100
    %p102 = scmp.eq.s32.totalorder %s101, 0
    %s104 = sadd.s32 %s103, 1
    %s105 = scalar_select %p102, %s103, %s104
    %p108 = pneg %p102
    %p109 = scmp.eq.s32.totalorder %s9, 1
    %p110 = por %p108, %p109
    %p111 = scmp.ne.s32.totalorder %s103, %s106
    %p112 = scmp.eq.s32.totalorder %s9, 0
    %p113 = por %p111, %p112
    %p114 = scmp.ne.s32.totalorder %s103, %s106
    %p115 = scmp.eq.s32.totalorder %s14, 1
    %p116 = por %p114, %p115
    %p117 = scmp.ne.s32.totalorder %s106, %s107
    %p118 = scmp.eq.s32.totalorder %s14, 0
    %p119 = por %p117, %p118
    %p120 = scmp.ne.s32.totalorder %s106, %s107
    %p121 = scmp.eq.s32.totalorder %s15, 1
    %p122 = por %p120, %p121
    %p124 = scmp.ne.s32.totalorder %s107, %s123
    %p125 = scmp.eq.s32.totalorder %s15, 0
    %p126 = por %p124, %p125
    %p127 = scmp.le.s32.totalorder 1, %s9
    %p128 = scmp.lt.s32.totalorder %s9, 3
    %p129 = pnand %p127, %p128
    %p130 = pneg %p129
    // Predicated region
    $region9: #{conv_block_forward.3} parent=5 // pred_check
      _
    $region10: #{conv_block_forward.3} parent=5 // pred_check_branch
      %132 = sbr.rel (%p129) target = $region12
    $region11: #{conv_block_forward.3} parent=5 // pred_region
      %s133 = ssub.s32 %s9, 1
      // Predicated region
      $region13: #{conv_block_forward.3} parent=11 // pred_check
        %p134 = pneg %p70
      $region14: #{conv_block_forward.3} parent=11 // pred_check_branch
        %136 = sbr.rel (%p134) target = $region16
      $region15: #{conv_block_forward.3} parent=11 // pred_region
        _
      $region16: #{conv_block_forward.3} parent=11 // pred_fallthru
        _
      // Predicated region
      $region17: #{conv_block_forward.3} parent=11 // pred_check
        %p137 = pneg %p91
      $region18: #{conv_block_forward.3} parent=11 // pred_check_branch
        %139 = sbr.rel (%p137) target = $region20
      $region19: #{conv_block_forward.3} parent=11 // pred_region
        _
      $region20: #{conv_block_forward.3} parent=11 // pred_fallthru
        _
    $region12: #{conv_block_forward.3} parent=5 // pred_fallthru
      _
    %p140 = scmp.lt.s32.totalorder %s9, 2
    // Predicated region
    $region21: #{conv_block_forward.3} parent=5 // pred_check
      %p141 = pneg %p140
    $region22: #{conv_block_forward.3} parent=5 // pred_check_branch
      %143 = sbr.rel (%p141) target = $region24
    $region23: #{conv_block_forward.3} parent=5 // pred_region
      // Predicated region
      $region25: #{conv_block_forward.3} parent=23 // pred_check
        %p144 = pneg %p43
      $region26: #{conv_block_forward.3} parent=23 // pred_check_branch
        %146 = sbr.rel (%p144) target = $region28
      $region27: #{conv_block_forward.3} parent=23 // pred_region
        %p147 = scmp.lt.s32.totalorder %s16, 1
        %s148 = scalar_select %p147, %s16, 1
        %p149 = scmp.lt.s32.totalorder %s17, 0
        %s150 = scalar_select %p149, %s17, 0
        %s151 = smul.addr %s150, 32
        %s152 = smul.addr %s148, 32
        %s153 = sadd.s32 %s151, %s152
        %s154 = smul.addr %s153, 8
        %s155 = scalar_lea.vmem %s0, %s154
      $region28: #{conv_block_forward.3} parent=23 // pred_fallthru
        _
    $region24: #{conv_block_forward.3} parent=5 // pred_fallthru
      _
    %p156 = scmp.le.s32.totalorder 1, %s9
    %p157 = scmp.lt.s32.totalorder %s9, 3
    %p158 = pnand %p156, %p157
    %p159 = pneg %p158
    // Predicated region
    $region29: #{conv_block_forward.3} parent=5 // pred_check
      _
    $region30: #{conv_block_forward.3} parent=5 // pred_check_branch
      %161 = sbr.rel (%p158) target = $region32
    $region31: #{conv_block_forward.3} parent=5 // pred_region
      %s162 = ssub.s32 %s9, 1
      %p163 = scmp.lt.s32.totalorder %s18, 1
      %s164 = scalar_select %p163, %s18, 1
      %p165 = scmp.lt.s32.totalorder %s19, 0
      %s166 = scalar_select %p165, %s19, 0
      %s167 = smul.addr %s166, 32
      %s168 = smul.addr %s164, 32
      %s169 = sadd.s32 %s167, %s168
      %s170 = smul.addr %s169, 8
      %s171 = scalar_lea.vmem %s0, %s170
      %p172 = pneg %p49
      %p173 = pneg %p46
      %p174 = pneg %p70
      %p175 = pneg %p67
      %p176 = pneg %p91
      %p177 = pneg %p88
      %p178 = pneg %p119
      %p179 = pneg %p116
      %p180 = scmp.lt.s32.totalorder %s18, 1
      %s181 = scalar_select %p180, %s18, 1
      %p182 = scmp.lt.s32.totalorder %s19, 0
      %s183 = scalar_select %p182, %s19, 0
      %s184 = smul.addr %s183, 32
      %s185 = smul.addr %s181, 32
      %s186 = sadd.s32 %s184, %s185
      %s187 = smul.addr %s186, 8
      %s188 = scalar_lea.vmem %s3, %s187
      %p189 = scmp.lt.s32.totalorder %s18, 1
      %s190 = scalar_select %p189, %s18, 1
      %p191 = scmp.lt.s32.totalorder %s19, 0
      %s192 = scalar_select %p191, %s19, 0
      %s193 = smul.addr %s192, 32
      %s194 = smul.addr %s190, 32
      %s195 = sadd.s32 %s193, %s194
      %s196 = smul.addr %s195, 8
      %s197 = scalar_lea.vmem %s0, %s196
      %p198 = scmp.lt.s32.totalorder %s18, 1
      %s199 = scalar_select %p198, %s18, 1
      %p200 = scmp.lt.s32.totalorder %s19, 0
      %s201 = scalar_select %p200, %s19, 0
      %s202 = smul.addr %s201, 32
      %s203 = smul.addr %s199, 32
      %s204 = sadd.s32 %s202, %s203
      %s205 = smul.addr %s204, 8
      %s206 = scalar_lea.vmem %s3, %s205
      %v207 = vld [vmem:[%s197] sm:$0xff]
      %v208 = vld [vmem:[%s197 + $0x8] sm:$0xff]
      %v209 = vld [vmem:[%s197 + $0x10] sm:$0xff]
      %v210 = vld [vmem:[%s197 + $0x18] sm:$0xff]
      %v211 = vld [vmem:[%s197 + $0x20] sm:$0xff]
      %v212 = vld [vmem:[%s197 + $0x28] sm:$0xff]
      %v213 = vld [vmem:[%s197 + $0x30] sm:$0xff]
      %v214 = vld [vmem:[%s197 + $0x38] sm:$0xff]
      %v215 = vld [vmem:[%s197 + $0x40] sm:$0xff]
      %v216 = vld [vmem:[%s197 + $0x48] sm:$0xff]
      %v217 = vld [vmem:[%s197 + $0x50] sm:$0xff]
      %v218 = vld [vmem:[%s197 + $0x58] sm:$0xff]
      %v219 = vld [vmem:[%s197 + $0x60] sm:$0xff]
      %v220 = vld [vmem:[%s197 + $0x68] sm:$0xff]
      %v221 = vld [vmem:[%s197 + $0x70] sm:$0xff]
      %v222 = vld [vmem:[%s197 + $0x78] sm:$0xff]
      %v223 = vld [vmem:[%s197 + $0x80] sm:$0xff]
      %v224 = vld [vmem:[%s197 + $0x88] sm:$0xff]
      %v225 = vld [vmem:[%s197 + $0x90] sm:$0xff]
      %v226 = vld [vmem:[%s197 + $0x98] sm:$0xff]
      %v227 = vld [vmem:[%s197 + $0xa0] sm:$0xff]
      %v228 = vld [vmem:[%s197 + $0xa8] sm:$0xff]
      %v229 = vld [vmem:[%s197 + $0xb0] sm:$0xff]
      %v230 = vld [vmem:[%s197 + $0xb8] sm:$0xff]
      %v231 = vld [vmem:[%s197 + $0xc0] sm:$0xff]
      %v232 = vld [vmem:[%s197 + $0xc8] sm:$0xff]
      %v233 = vld [vmem:[%s197 + $0xd0] sm:$0xff]
      %v234 = vld [vmem:[%s197 + $0xd8] sm:$0xff]
      %v235 = vld [vmem:[%s197 + $0xe0] sm:$0xff]
      %v236 = vld [vmem:[%s197 + $0xe8] sm:$0xff]
      %v237 = vld [vmem:[%s197 + $0xf0] sm:$0xff]
      %v238 = vld [vmem:[%s197 + $0xf8] sm:$0xff]
      %v239 = vld [vmem:[%s1] sm:$0x1]
      %v241 = vlaneseq
      %v242 = vshrl.u32 %v241, 7
      %v243 = vsub.s32 0, %v242
      %v244 = vrot.slane %v239, %v243
      %v246 = vmul.f32 %v207, %v244
      %v247 = vmul.f32 %v208, %v244
      %v248 = vmul.f32 %v209, %v244
      %v249 = vmul.f32 %v210, %v244
      %v250 = vmul.f32 %v211, %v244
      %v251 = vmul.f32 %v212, %v244
      %v252 = vmul.f32 %v213, %v244
      %v253 = vmul.f32 %v214, %v244
      %v254 = vmul.f32 %v215, %v244
      %v255 = vmul.f32 %v216, %v244
      %v256 = vmul.f32 %v217, %v244
      %v257 = vmul.f32 %v218, %v244
      %v258 = vmul.f32 %v219, %v244
      %v259 = vmul.f32 %v220, %v244
      %v260 = vmul.f32 %v221, %v244
      %v261 = vmul.f32 %v222, %v244
      %v262 = vmul.f32 %v223, %v244
      %v263 = vmul.f32 %v224, %v244
      %v264 = vmul.f32 %v225, %v244
      %v265 = vmul.f32 %v226, %v244
      %v266 = vmul.f32 %v227, %v244
      %v267 = vmul.f32 %v228, %v244
      %v268 = vmul.f32 %v229, %v244
      %v269 = vmul.f32 %v230, %v244
      %v270 = vmul.f32 %v231, %v244
      %v271 = vmul.f32 %v232, %v244
      %v272 = vmul.f32 %v233, %v244
      %v273 = vmul.f32 %v234, %v244
      %v274 = vmul.f32 %v235, %v244
      %v275 = vmul.f32 %v236, %v244
      %v276 = vmul.f32 %v237, %v244
      %v277 = vmul.f32 %v238, %v244
      %v278 = vld [vmem:[%s2] sm:$0x1]
      %v280 = vlaneseq
      %v281 = vshrl.u32 %v280, 7
      %v282 = vsub.s32 0, %v281
      %v283 = vrot.slane %v278, %v282
      %v285 = vadd.f32 %v246, %v283
      %v286 = vadd.f32 %v247, %v283
      %v287 = vadd.f32 %v248, %v283
      %v288 = vadd.f32 %v249, %v283
      %v289 = vadd.f32 %v250, %v283
      %v290 = vadd.f32 %v251, %v283
      %v291 = vadd.f32 %v252, %v283
      %v292 = vadd.f32 %v253, %v283
      %v293 = vadd.f32 %v254, %v283
      %v294 = vadd.f32 %v255, %v283
      %v295 = vadd.f32 %v256, %v283
      %v296 = vadd.f32 %v257, %v283
      %v297 = vadd.f32 %v258, %v283
      %v298 = vadd.f32 %v259, %v283
      %v299 = vadd.f32 %v260, %v283
      %v300 = vadd.f32 %v261, %v283
      %v301 = vadd.f32 %v262, %v283
      %v302 = vadd.f32 %v263, %v283
      %v303 = vadd.f32 %v264, %v283
      %v304 = vadd.f32 %v265, %v283
      %v305 = vadd.f32 %v266, %v283
      %v306 = vadd.f32 %v267, %v283
      %v307 = vadd.f32 %v268, %v283
      %v308 = vadd.f32 %v269, %v283
      %v309 = vadd.f32 %v270, %v283
      %v310 = vadd.f32 %v271, %v283
      %v311 = vadd.f32 %v272, %v283
      %v312 = vadd.f32 %v273, %v283
      %v313 = vadd.f32 %v274, %v283
      %v314 = vadd.f32 %v275, %v283
      %v315 = vadd.f32 %v276, %v283
      %v316 = vadd.f32 %v277, %v283
      %v317 = vmax.f32 %v285, 0.0
      %v318 = vmax.f32 %v286, 0.0
      %v319 = vmax.f32 %v287, 0.0
      %v320 = vmax.f32 %v288, 0.0
      %v321 = vmax.f32 %v289, 0.0
      %v322 = vmax.f32 %v290, 0.0
      %v323 = vmax.f32 %v291, 0.0
      %v324 = vmax.f32 %v292, 0.0
      %v325 = vmax.f32 %v293, 0.0
      %v326 = vmax.f32 %v294, 0.0
      %v327 = vmax.f32 %v295, 0.0
      %v328 = vmax.f32 %v296, 0.0
      %v329 = vmax.f32 %v297, 0.0
      %v330 = vmax.f32 %v298, 0.0
      %v331 = vmax.f32 %v299, 0.0
      %v332 = vmax.f32 %v300, 0.0
      %v333 = vmax.f32 %v301, 0.0
      %v334 = vmax.f32 %v302, 0.0
      %v335 = vmax.f32 %v303, 0.0
      %v336 = vmax.f32 %v304, 0.0
      %v337 = vmax.f32 %v305, 0.0
      %v338 = vmax.f32 %v306, 0.0
      %v339 = vmax.f32 %v307, 0.0
      %v340 = vmax.f32 %v308, 0.0
      %v341 = vmax.f32 %v309, 0.0
      %v342 = vmax.f32 %v310, 0.0
      %v343 = vmax.f32 %v311, 0.0
      %v344 = vmax.f32 %v312, 0.0
      %v345 = vmax.f32 %v313, 0.0
      %v346 = vmax.f32 %v314, 0.0
      %v347 = vmax.f32 %v315, 0.0
      %v348 = vmax.f32 %v316, 0.0
      %349 = vst [vmem:[%s206] sm:$0xff] %v317
      %350 = vst [vmem:[%s206 + $0x8] sm:$0xff] %v318
      %351 = vst [vmem:[%s206 + $0x10] sm:$0xff] %v319
      %352 = vst [vmem:[%s206 + $0x18] sm:$0xff] %v320
      %353 = vst [vmem:[%s206 + $0x20] sm:$0xff] %v321
      %354 = vst [vmem:[%s206 + $0x28] sm:$0xff] %v322
      %355 = vst [vmem:[%s206 + $0x30] sm:$0xff] %v323
      %356 = vst [vmem:[%s206 + $0x38] sm:$0xff] %v324
      %357 = vst [vmem:[%s206 + $0x40] sm:$0xff] %v325
      %358 = vst [vmem:[%s206 + $0x48] sm:$0xff] %v326
      %359 = vst [vmem:[%s206 + $0x50] sm:$0xff] %v327
      %360 = vst [vmem:[%s206 + $0x58] sm:$0xff] %v328
      %361 = vst [vmem:[%s206 + $0x60] sm:$0xff] %v329
      %362 = vst [vmem:[%s206 + $0x68] sm:$0xff] %v330
      %363 = vst [vmem:[%s206 + $0x70] sm:$0xff] %v331
      %364 = vst [vmem:[%s206 + $0x78] sm:$0xff] %v332
      %365 = vst [vmem:[%s206 + $0x80] sm:$0xff] %v333
      %366 = vst [vmem:[%s206 + $0x88] sm:$0xff] %v334
      %367 = vst [vmem:[%s206 + $0x90] sm:$0xff] %v335
      %368 = vst [vmem:[%s206 + $0x98] sm:$0xff] %v336
      %369 = vst [vmem:[%s206 + $0xa0] sm:$0xff] %v337
      %370 = vst [vmem:[%s206 + $0xa8] sm:$0xff] %v338
      %371 = vst [vmem:[%s206 + $0xb0] sm:$0xff] %v339
      %372 = vst [vmem:[%s206 + $0xb8] sm:$0xff] %v340
      %373 = vst [vmem:[%s206 + $0xc0] sm:$0xff] %v341
      %374 = vst [vmem:[%s206 + $0xc8] sm:$0xff] %v342
      %375 = vst [vmem:[%s206 + $0xd0] sm:$0xff] %v343
      %376 = vst [vmem:[%s206 + $0xd8] sm:$0xff] %v344
      %377 = vst [vmem:[%s206 + $0xe0] sm:$0xff] %v345
      %378 = vst [vmem:[%s206 + $0xe8] sm:$0xff] %v346
      %379 = vst [vmem:[%s206 + $0xf0] sm:$0xff] %v347
      %380 = vst [vmem:[%s206 + $0xf8] sm:$0xff] %v348
      %p381 = scmp.lt.s32.totalorder %s18, 1
      %s382 = scalar_select %p381, %s18, 1
      %p383 = scmp.lt.s32.totalorder %s19, 0
      %s384 = scalar_select %p383, %s19, 0
      %s385 = smul.addr %s384, 32
      %s386 = smul.addr %s382, 32
      %s387 = sadd.s32 %s385, %s386
      %s388 = smul.addr %s387, 8
      %s389 = scalar_lea.vmem %s3, %s388
      // Predicated region
      $region33: #{conv_block_forward.3} parent=31 // pred_check
        %p390 = pneg %p116
      $region34: #{conv_block_forward.3} parent=31 // pred_check_branch
        %392 = sbr.rel (%p390) target = $region36
      $region35: #{conv_block_forward.3} parent=31 // pred_region
        _
      $region36: #{conv_block_forward.3} parent=31 // pred_fallthru
        _
    $region32: #{conv_block_forward.3} parent=5 // pred_fallthru
      _
    %p393 = scmp.le.s32.totalorder 2, %s9
    // Predicated region
    $region37: #{conv_block_forward.3} parent=5 // pred_check
      %p394 = pneg %p393
    $region38: #{conv_block_forward.3} parent=5 // pred_check_branch
      %396 = sbr.rel (%p394) target = $region40
    $region39: #{conv_block_forward.3} parent=5 // pred_region
      %s397 = ssub.s32 %s9, 2
      // Predicated region
      $region41: #{conv_block_forward.3} parent=39 // pred_check
        %p398 = pneg %p122
      $region42: #{conv_block_forward.3} parent=39 // pred_check_branch
        %400 = sbr.rel (%p398) target = $region44
      $region43: #{conv_block_forward.3} parent=39 // pred_region
        %p401 = scmp.lt.s32.totalorder %s20, 1
        %s402 = scalar_select %p401, %s20, 1
        %p403 = scmp.lt.s32.totalorder %s21, 0
        %s404 = scalar_select %p403, %s21, 0
        %s405 = smul.addr %s404, 32
        %s406 = smul.addr %s402, 32
        %s407 = sadd.s32 %s405, %s406
        %s408 = smul.addr %s407, 8
        %s409 = scalar_lea.vmem %s3, %s408
      $region44: #{conv_block_forward.3} parent=39 // pred_fallthru
        _
    $region40: #{conv_block_forward.3} parent=5 // pred_fallthru
      _
  $region6: #{conv_block_forward.3} parent=0 // loop_footer
    %s13 = sadd.s32 1, %s9
  $region7: #{conv_block_forward.3} parent=0 // loop_footer_branch
    %8 = sbr.rel target = $region3
  $region8: #{conv_block_forward.3} parent=0 // loop_exit
    _

// kernel: conv_block_forward.2
$region0: #{conv_block_forward.2}
  #allocation0 [shape = 'u32[]', space=smem, size = 0x4, offset = 0x4, fixed_abs, tag = 'smem constant byte address 0x4 - core index']
  #allocation1 [shape = 'u32[144,128]{1,0:T(1,128)}', space=vmem, size = 0x12000, scoped, tag = 'internal scratch']
  %s0 = inlined_call_operand.vmem [shape: bf16[2,1,18,18,4], index: 0, kind: input, shape index: {}]
  %s1 = inlined_call_operand.vmem [shape: bf16[36,128], index: 1, kind: input, shape index: {}]
  %s2 = inlined_call_operand.vmem [shape: f32[2,1,256,128], index: 2, kind: output, shape index: {0}]
  %s3 = inlined_call_operand.vmem [shape: f32[2,1,2,128], index: 3, kind: output, shape index: {1}]
  %4 = xla_tuple %s2, %s3
  %s5 = sld [smem:[#allocation0]]
  $region49: #{conv_block_forward.2} parent=0
    _
  %s7 = ssub.s32 1, %s5
  %s8 = scalar_select 0, %s7, %s5
  loop: start=0, step=1, limit=4
  $region2: #{conv_block_forward.2} parent=0 // loop_pre_header
    _
  $region3: #{conv_block_forward.2} parent=0 // loop_header
    %s10 = sphi 0, %s14
    %p11 = scmp.ge.s32.totalorder %s10, 4
    %s17 = sphi 0, %s29
    %s18 = sphi 0, %s25
    %s19 = sphi 0, %s17
    %s20 = sphi 0, %s18
    %s21 = sphi 0, %s19
    %s22 = sphi 0, %s20
    %s34 = sphi 0, %s36
    %s37 = sphi 0, %s34
    %s38 = sphi 0, %s37
    %s54 = sphi 0, %s38
    %s58 = sphi 0, %s58
    %s60 = sphi 0, %s58
    %s61 = sphi 0, %s60
    %s75 = sphi 0, %s61
    %s83 = sphi 0, %s85
    %s86 = sphi 0, %s83
    %s87 = sphi 0, %s86
    %s103 = sphi 0, %s87
    %s111 = sphi 0, %s113
    %s114 = sphi 0, %s111
    %s115 = sphi 0, %s114
    %s131 = sphi 0, %s115
  $region4: #{conv_block_forward.2} parent=0 // loop_header_branch
    %13 = sbr.rel (%p11) target = $region8
  $region5: #{conv_block_forward.2} parent=0 // loop_body
    %s15 = ssub.s32 %s10, 1
    %s16 = ssub.s32 %s10, 2
    %s23 = sadd.s32 1, %s18
    %p24 = scmp.ge.s32.totalorder %s23, 1
    %s25 = scalar_select %p24, 0, %s23
    %s26 = sadd.s32 1, %s17
    %s27 = scalar_select %p24, %s26, %s17
    %p28 = scmp.ge.s32.totalorder %s27, 2
    %s29 = scalar_select %p28, 0, %s27
    %s30 = ssub.s32 %s17, %s29
    %s31 = ssub.s32 %s18, %s25
    %s32 = sor.u32 %s30, %s31
    %p33 = scmp.eq.s32.totalorder %s32, 0
    %s35 = sadd.s32 %s34, 1
    %s36 = scalar_select %p33, %s34, %s35
    %p39 = pneg %p33
    %p40 = scmp.eq.s32.totalorder %s10, 1
    %p41 = por %p39, %p40
    %p42 = scmp.ne.s32.totalorder %s34, %s37
    %p43 = scmp.eq.s32.totalorder %s10, 0
    %p44 = por %p42, %p43
    %p45 = scmp.ne.s32.totalorder %s34, %s37
    %p46 = scmp.eq.s32.totalorder %s15, 1
    %p47 = por %p45, %p46
    %p48 = scmp.ne.s32.totalorder %s37, %s38
    %p49 = scmp.eq.s32.totalorder %s15, 0
    %p50 = por %p48, %p49
    %p51 = scmp.ne.s32.totalorder %s37, %s38
    %p52 = scmp.eq.s32.totalorder %s16, 1
    %p53 = por %p51, %p52
    %p55 = scmp.ne.s32.totalorder %s38, %s54
    %p56 = scmp.eq.s32.totalorder %s16, 0
    %p57 = por %p55, %p56
    %s59 = sadd.s32 %s58, 1
    %p62 = scmp.eq.s32.totalorder %s10, 1
    %p63 = scmp.ne.s32.totalorder %s58, %s60
    %p64 = scmp.eq.s32.totalorder %s10, 0
    %p65 = por %p63, %p64
    %p66 = scmp.ne.s32.totalorder %s58, %s60
    %p67 = scmp.eq.s32.totalorder %s15, 1
    %p68 = por %p66, %p67
    %p69 = scmp.ne.s32.totalorder %s60, %s61
    %p70 = scmp.eq.s32.totalorder %s15, 0
    %p71 = por %p69, %p70
    %p72 = scmp.ne.s32.totalorder %s60, %s61
    %p73 = scmp.eq.s32.totalorder %s16, 1
    %p74 = por %p72, %p73
    %p76 = scmp.ne.s32.totalorder %s61, %s75
    %p77 = scmp.eq.s32.totalorder %s16, 0
    %p78 = por %p76, %p77
    %s79 = ssub.s32 %s17, %s29
    %s80 = ssub.s32 %s18, %s25
    %s81 = sor.u32 %s79, %s80
    %p82 = scmp.eq.s32.totalorder %s81, 0
    %s84 = sadd.s32 %s83, 1
    %s85 = scalar_select %p82, %s83, %s84
    %p88 = pneg %p82
    %p89 = scmp.eq.s32.totalorder %s10, 1
    %p90 = por %p88, %p89
    %p91 = scmp.ne.s32.totalorder %s83, %s86
    %p92 = scmp.eq.s32.totalorder %s10, 0
    %p93 = por %p91, %p92
    %p94 = scmp.ne.s32.totalorder %s83, %s86
    %p95 = scmp.eq.s32.totalorder %s15, 1
    %p96 = por %p94, %p95
    %p97 = scmp.ne.s32.totalorder %s86, %s87
    %p98 = scmp.eq.s32.totalorder %s15, 0
    %p99 = por %p97, %p98
    %p100 = scmp.ne.s32.totalorder %s86, %s87
    %p101 = scmp.eq.s32.totalorder %s16, 1
    %p102 = por %p100, %p101
    %p104 = scmp.ne.s32.totalorder %s87, %s103
    %p105 = scmp.eq.s32.totalorder %s16, 0
    %p106 = por %p104, %p105
    %s107 = ssub.s32 %s17, %s29
    %s108 = ssub.s32 %s18, %s25
    %s109 = sor.u32 %s107, %s108
    %p110 = scmp.eq.s32.totalorder %s109, 0
    %s112 = sadd.s32 %s111, 1
    %s113 = scalar_select %p110, %s111, %s112
    %p116 = pneg %p110
    %p117 = scmp.eq.s32.totalorder %s10, 1
    %p118 = por %p116, %p117
    %p119 = scmp.ne.s32.totalorder %s111, %s114
    %p120 = scmp.eq.s32.totalorder %s10, 0
    %p121 = por %p119, %p120
    %p122 = scmp.ne.s32.totalorder %s111, %s114
    %p123 = scmp.eq.s32.totalorder %s15, 1
    %p124 = por %p122, %p123
    %p125 = scmp.ne.s32.totalorder %s114, %s115
    %p126 = scmp.eq.s32.totalorder %s15, 0
    %p127 = por %p125, %p126
    %p128 = scmp.ne.s32.totalorder %s114, %s115
    %p129 = scmp.eq.s32.totalorder %s16, 1
    %p130 = por %p128, %p129
    %p132 = scmp.ne.s32.totalorder %s115, %s131
    %p133 = scmp.eq.s32.totalorder %s16, 0
    %p134 = por %p132, %p133
    %p135 = scmp.le.s32.totalorder 1, %s10
    %p136 = scmp.lt.s32.totalorder %s10, 3
    %p137 = pnand %p135, %p136
    %p138 = pneg %p137
    // Predicated region
    $region9: #{conv_block_forward.2} parent=5 // pred_check
      _
    $region10: #{conv_block_forward.2} parent=5 // pred_check_branch
      %140 = sbr.rel (%p137) target = $region12
    $region11: #{conv_block_forward.2} parent=5 // pred_region
      %s141 = ssub.s32 %s10, 1
      // Predicated region
      $region13: #{conv_block_forward.2} parent=11 // pred_check
        %p142 = pneg %p71
      $region14: #{conv_block_forward.2} parent=11 // pred_check_branch
        %144 = sbr.rel (%p142) target = $region16
      $region15: #{conv_block_forward.2} parent=11 // pred_region
        _
      $region16: #{conv_block_forward.2} parent=11 // pred_fallthru
        _
    $region12: #{conv_block_forward.2} parent=5 // pred_fallthru
      _
    %p145 = scmp.lt.s32.totalorder %s10, 2
    // Predicated region
    $region17: #{conv_block_forward.2} parent=5 // pred_check
      %p146 = pneg %p145
    $region18: #{conv_block_forward.2} parent=5 // pred_check_branch
      %148 = sbr.rel (%p146) target = $region20
    $region19: #{conv_block_forward.2} parent=5 // pred_region
      // Predicated region
      $region21: #{conv_block_forward.2} parent=19 // pred_check
        %p149 = pneg %p44
      $region22: #{conv_block_forward.2} parent=19 // pred_check_branch
        %151 = sbr.rel (%p149) target = $region24
      $region23: #{conv_block_forward.2} parent=19 // pred_region
        %p152 = scmp.lt.s32.totalorder %s17, 1
        %s153 = scalar_select %p152, %s17, 1
        %p154 = scmp.lt.s32.totalorder %s18, 0
        %s155 = scalar_select %p154, %s18, 0
        %s156 = smul.addr %s155, 54
        %s157 = smul.addr %s153, 54
        %s158 = sadd.s32 %s156, %s157
        %s159 = smul.addr %s158, 4
        %s160 = scalar_lea.vmem %s0, %s159
      $region24: #{conv_block_forward.2} parent=19 // pred_fallthru
        _
    $region20: #{conv_block_forward.2} parent=5 // pred_fallthru
      _
    %p161 = scmp.le.s32.totalorder 1, %s10
    %p162 = scmp.lt.s32.totalorder %s10, 3
    %p163 = pnand %p161, %p162
    %p164 = pneg %p163
    // Predicated region
    $region25: #{conv_block_forward.2} parent=5 // pred_check
      _
    $region26: #{conv_block_forward.2} parent=5 // pred_check_branch
      %166 = sbr.rel (%p163) target = $region28
    $region27: #{conv_block_forward.2} parent=5 // pred_region
      %s167 = ssub.s32 %s10, 1
      %p168 = scmp.lt.s32.totalorder %s19, 1
      %s169 = scalar_select %p168, %s19, 1
      %p170 = scmp.lt.s32.totalorder %s20, 0
      %s171 = scalar_select %p170, %s20, 0
      %s172 = smul.addr %s171, 54
      %s173 = smul.addr %s169, 54
      %s174 = sadd.s32 %s172, %s173
      %s175 = smul.addr %s174, 4
      %s176 = scalar_lea.vmem %s0, %s175
      %p177 = pneg %p50
      %p178 = pneg %p47
      %p179 = pneg %p71
      %p180 = pneg %p68
      %p181 = pneg %p99
      %p182 = pneg %p96
      %p183 = scmp.lt.s32.totalorder %s19, 1
      %s184 = scalar_select %p183, %s19, 1
      %p185 = scmp.lt.s32.totalorder %s20, 0
      %s186 = scalar_select %p185, %s20, 0
      %s187 = smul.addr %s186, 32
      %s188 = smul.addr %s184, 32
      %s189 = sadd.s32 %s187, %s188
      %s190 = smul.addr %s189, 8
      %s191 = scalar_lea.vmem %s2, %s190
      %p192 = pneg %p127
      %p193 = pneg %p124
      %p194 = scmp.lt.s32.totalorder %s19, 1
      %s195 = scalar_select %p194, %s19, 1
      %p196 = scmp.lt.s32.totalorder %s20, 0
      %s197 = scalar_select %p196, %s20, 0
      %s198 = sadd.s32 %s197, %s195
      %s199 = smul.addr %s198, 2
      %s200 = scalar_lea.vmem %s3, %s199
      %p201 = scmp.lt.s32.totalorder %s19, 1
      %s202 = scalar_select %p201, %s19, 1
      %p203 = scmp.lt.s32.totalorder %s20, 0
      %s204 = scalar_select %p203, %s20, 0
      %s205 = smul.addr %s204, 54
      %s206 = smul.addr %s202, 54
      %s207 = sadd.s32 %s205, %s206
      %s208 = smul.addr %s207, 4
      %s209 = scalar_lea.vmem %s0, %s208
      %p210 = scmp.lt.s32.totalorder %s19, 1
      %s211 = scalar_select %p210, %s19, 1
      %p212 = scmp.lt.s32.totalorder %s20, 0
      %s213 = scalar_select %p212, %s20, 0
      %s214 = smul.addr %s213, 32
      %s215 = smul.addr %s211, 32
      %s216 = sadd.s32 %s214, %s215
      %s217 = smul.addr %s216, 8
      %s218 = scalar_lea.vmem %s2, %s217
      %p219 = scmp.lt.s32.totalorder %s19, 1
      %s220 = scalar_select %p219, %s19, 1
      %p221 = scmp.lt.s32.totalorder %s20, 0
      %s222 = scalar_select %p221, %s20, 0
      %s223 = sadd.s32 %s222, %s220
      %s224 = smul.addr %s223, 2
      %s225 = scalar_lea.vmem %s3, %s224
      %v227 = vld [vmem:[%s209] sm:$0xf]
      %v228 = vld [vmem:[%s209 + $0x4] sm:$0xf]
      %v229 = vld [vmem:[%s209 + $0x8] sm:$0x1]
      %v230 = vld [vmem:[%s209 + $0xc] sm:$0xf]
      %v231 = vld [vmem:[%s209 + $0x10] sm:$0xf]
      %v232 = vld [vmem:[%s209 + $0x14] sm:$0x1]
      %v233 = vld [vmem:[%s209 + $0x18] sm:$0xf]
      %v234 = vld [vmem:[%s209 + $0x1c] sm:$0xf]
      %v235 = vld [vmem:[%s209 + $0x20] sm:$0x1]
      %v236 = vld [vmem:[%s209 + $0x24] sm:$0xf]
      %v237 = vld [vmem:[%s209 + $0x28] sm:$0xf]
      %v238 = vld [vmem:[%s209 + $0x2c] sm:$0x1]
      %v239 = vld [vmem:[%s209 + $0x30] sm:$0xf]
      %v240 = vld [vmem:[%s209 + $0x34] sm:$0xf]
      %v241 = vld [vmem:[%s209 + $0x38] sm:$0x1]
      %v242 = vld [vmem:[%s209 + $0x3c] sm:$0xf]
      %v243 = vld [vmem:[%s209 + $0x40] sm:$0xf]
      %v244 = vld [vmem:[%s209 + $0x44] sm:$0x1]
      %v245 = vld [vmem:[%s209 + $0x48] sm:$0xf]
      %v246 = vld [vmem:[%s209 + $0x4c] sm:$0xf]
      %v247 = vld [vmem:[%s209 + $0x50] sm:$0x1]
      %v248 = vld [vmem:[%s209 + $0x54] sm:$0xf]
      %v249 = vld [vmem:[%s209 + $0x58] sm:$0xf]
      %v250 = vld [vmem:[%s209 + $0x5c] sm:$0x1]
      %v251 = vld [vmem:[%s209 + $0x60] sm:$0xf]
      %v252 = vld [vmem:[%s209 + $0x64] sm:$0xf]
      %v253 = vld [vmem:[%s209 + $0x68] sm:$0x1]
      %v254 = vld [vmem:[%s209 + $0x6c] sm:$0xf]
      %v255 = vld [vmem:[%s209 + $0x70] sm:$0xf]
      %v256 = vld [vmem:[%s209 + $0x74] sm:$0x1]
      %v257 = vld [vmem:[%s209 + $0x78] sm:$0xf]
      %v258 = vld [vmem:[%s209 + $0x7c] sm:$0xf]
      %v259 = vld [vmem:[%s209 + $0x80] sm:$0x1]
      %v260 = vld [vmem:[%s209 + $0x84] sm:$0xf]
      %v261 = vld [vmem:[%s209 + $0x88] sm:$0xf]
      %v262 = vld [vmem:[%s209 + $0x8c] sm:$0x1]
      %v263 = vld [vmem:[%s209 + $0x90] sm:$0xf]
      %v264 = vld [vmem:[%s209 + $0x94] sm:$0xf]
      %v265 = vld [vmem:[%s209 + $0x98] sm:$0x1]
      %v266 = vld [vmem:[%s209 + $0x9c] sm:$0xf]
      %v267 = vld [vmem:[%s209 + $0xa0] sm:$0xf]
      %v268 = vld [vmem:[%s209 + $0xa4] sm:$0x1]
      %v269 = vld [vmem:[%s209 + $0xa8] sm:$0xf]
      %v270 = vld [vmem:[%s209 + $0xac] sm:$0xf]
      %v271 = vld [vmem:[%s209 + $0xb0] sm:$0x1]
      %v272 = vld [vmem:[%s209 + $0xb4] sm:$0xf]
      %v273 = vld [vmem:[%s209 + $0xb8] sm:$0xf]
      %v274 = vld [vmem:[%s209 + $0xbc] sm:$0x1]
      %v275 = vld [vmem:[%s209 + $0xc0] sm:$0xf]
      %v276 = vld [vmem:[%s209 + $0xc4] sm:$0xf]
      %v277 = vld [vmem:[%s209 + $0xc8] sm:$0x1]
      %v278 = vld [vmem:[%s209 + $0xcc] sm:$0xf]
      %v279 = vld [vmem:[%s209 + $0xd0] sm:$0xf]
      %v280 = vld [vmem:[%s209 + $0xd4] sm:$0x1]
      %v281 = vld [vmem:[%s1] sm:$0xf]
      %v282 = vld [vmem:[%s1 + $0x4] sm:$0xf]
      %v283 = vld [vmem:[%s1 + $0x8] sm:$0xf]
      %v284 = vld [vmem:[%s1 + $0xc] sm:$0xf]
      %v285 = vld [vmem:[%s1 + $0x10] sm:$0x3]
      %v318 = vunpack.c.l.b16 %v227
      %v319 = vunpack.c.l.b16 %v228
      %v320 = vunpack.c.l.b16 %v230
      %v321 = vunpack.c.l.b16 %v231
      %v322 = vunpack.c.l.b16 %v233
      %v323 = vunpack.c.l.b16 %v234
      %v324 = vunpack.c.l.b16 %v236
      %v325 = vunpack.c.l.b16 %v237
      %v326 = vunpack.c.l.b16 %v239
      %v327 = vunpack.c.l.b16 %v240
      %v328 = vunpack.c.l.b16 %v242
      %v329 = vunpack.c.l.b16 %v243
      %v330 = vunpack.c.l.b16 %v245
      %v331 = vunpack.c.l.b16 %v246
      %v332 = vunpack.c.l.b16 %v248
      %v333 = vunpack.c.l.b16 %v249
      %v334 = vunpack.c.l.b16 %v251
      %v335 = vunpack.c.l.b16 %v252
      %v336 = vunpack.c.l.b16 %v254
      %v337 = vunpack.c.l.b16 %v255
      %v338 = vunpack.c.l.b16 %v257
      %v339 = vunpack.c.l.b16 %v258
      %v340 = vunpack.c.l.b16 %v260
      %v341 = vunpack.c.l.b16 %v261
      %v342 = vunpack.c.l.b16 %v263
      %v343 = vunpack.c.l.b16 %v264
      %v344 = vunpack.c.l.b16 %v266
      %v345 = vunpack.c.l.b16 %v267
      %v346 = vunpack.c.l.b16 %v269
      %v347 = vunpack.c.l.b16 %v270
      %v348 = vunpack.c.l.b16 %v272
      %v349 = vunpack.c.l.b16 %v273
      %v350 = vpack.c.b16 %v319, %v318
      %v351 = vpack.c.b16 %v321, %v320
      %v352 = vpack.c.b16 %v323, %v322
      %v353 = vpack.c.b16 %v325, %v324
      %v354 = vpack.c.b16 %v327, %v326
      %v355 = vpack.c.b16 %v329, %v328
      %v356 = vpack.c.b16 %v331, %v330
      %v357 = vpack.c.b16 %v333, %v332
      %v358 = vpack.c.b16 %v335, %v334
      %v359 = vpack.c.b16 %v337, %v336
      %v360 = vpack.c.b16 %v339, %v338
      %v361 = vpack.c.b16 %v341, %v340
      %v362 = vpack.c.b16 %v343, %v342
      %v363 = vpack.c.b16 %v345, %v344
      %v364 = vpack.c.b16 %v347, %v346
      %v365 = vpack.c.b16 %v349, %v348
      %vm366 = vcmask 31744
      %v368 = vsel %vm366, %v350, 0
      %v371 = vsel %vm366, %v351, 0
      %v374 = vsel %vm366, %v352, 0
      %v377 = vsel %vm366, %v353, 0
      %v380 = vsel %vm366, %v354, 0
      %v383 = vsel %vm366, %v355, 0
      %v386 = vsel %vm366, %v356, 0
      %v389 = vsel %vm366, %v357, 0
      %v392 = vsel %vm366, %v358, 0
      %v395 = vsel %vm366, %v359, 0
      %v398 = vsel %vm366, %v360, 0
      %v401 = vsel %vm366, %v361, 0
      %v404 = vsel %vm366, %v362, 0
      %v407 = vsel %vm366, %v363, 0
      %v410 = vsel %vm366, %v364, 0
      %v413 = vsel %vm366, %v365, 0
      %vm415 = vcmask 1041408
      %v417 = vsel %vm415, %v281, 0
      %419 = vmatprep.subr.bf16.mxu0 0
      %420 = vmatpush1.bf16.msra.mxu0 %v417
      %421 = vmatprep.subr.bf16.mxu0 0
      %422 = vmatpush1.bf16.msra.mxu0 0
      %423 = vmatprep.subr.bf16.mxu0 0
      %424 = vmatpush1.bf16.msra.mxu0 0
      %425 = vmatprep.subr.bf16.mxu0 0
      %426 = vmatpush1.bf16.msra.mxu0 0
      %427 = vmatprep.subr.bf16.mxu0 0
      %428 = vmatpush1.bf16.msra.mxu0 0
      %429 = vmatprep.subr.bf16.mxu0 0
      %430 = vmatpush1.bf16.msra.mxu0 0
      %431 = vmatprep.subr.bf16.mxu0 0
      %432 = vmatpush1.bf16.msra.mxu0 0
      %433 = vmatprep.subr.bf16.mxu0 0
      %434 = vmatpush1.bf16.msra.mxu0 0
      %435 = vmatprep.subr.bf16.mxu0 0
      %436 = vmatpush1.bf16.msra.mxu0 0
      %437 = vmatprep.subr.bf16.mxu0 0
      %438 = vmatpush1.bf16.msra.mxu0 0
      %439 = vmatprep.subr.bf16.mxu0 0
      %440 = vmatpush1.bf16.msra.mxu0 0
      %441 = vmatprep.subr.bf16.mxu0 0
      %442 = vmatpush1.bf16.msra.mxu0 0
      %443 = vmatprep.subr.bf16.mxu0 0
      %444 = vmatpush1.bf16.msra.mxu0 0
      %445 = vmatprep.subr.bf16.mxu0 0
      %446 = vmatpush1.bf16.msra.mxu0 0
      %447 = vmatprep.subr.bf16.mxu0 0
      %448 = vmatpush1.bf16.msra.mxu0 0
      %449 = vmatprep.subr.bf16.mxu0 0
      %450 = vmatpush1.bf16.msra.mxu0 0
      %451 = vmatprep.mubr.bf16.mxu0 0
      %452 = vmatmul.mubr.bf16.gmra.mrb[0].mxu0 %v368
      %v453 = vpop.f32.mrb[0].mxu0
      %v454 = vadd.f32 0.0, %v453
      %v455 = vpop.f32.mrb[0].mxu0
      %v456 = vpop.f32.mrb[0].mxu0
      %v457 = vadd.f32 0.0, %v456
      %v458 = vpop.f32.mrb[0].mxu0
      %459 = vmatprep.mubr.bf16.mxu0 0
      %460 = vmatmul.mubr.bf16.gmra.mrb[0].mxu0 %v371
      %v461 = vpop.f32.mrb[0].mxu0
      %v462 = vadd.f32 0.0, %v461
      %v463 = vpop.f32.mrb[0].mxu0
      %v464 = vpop.f32.mrb[0].mxu0
      %v465 = vadd.f32 0.0, %v464
      %v466 = vpop.f32.mrb[0].mxu0
      %467 = vmatprep.mubr.bf16.mxu0 0
      %468 = vmatmul.mubr.bf16.gmra.mrb[0].mxu0 %v374
      %v469 = vpop.f32.mrb[0].mxu0
      %v470 = vadd.f32 0.0, %v469
      %v471 = vpop.f32.mrb[0].mxu0
      %v472 = vpop.f32.mrb[0].mxu0
      %v473 = vadd.f32 0.0, %v472
      %v474 = vpop.f32.mrb[0].mxu0
      %475 = vmatprep.mubr.bf16.mxu0 0
      %476 = vmatmul.mubr.bf16.gmra.mrb[0].mxu0 %v377
      %v477 = vpop.f32.mrb[0].mxu0
      %v478 = vadd.f32 0.0, %v477
      %v479 = vpop.f32.mrb[0].mxu0
      %v480 = vpop.f32.mrb[0].mxu0
      %v481 = vadd.f32 0.0, %v480
      %v482 = vpop.f32.mrb[0].mxu0
      %483 = vmatprep.mubr.bf16.mxu0 0
      %484 = vmatmul.mubr.bf16.gmra.mrb[0].mxu0 %v380
      %v485 = vpop.f32.mrb[0].mxu0
      %v486 = vadd.f32 0.0, %v485
      %v487 = vpop.f32.mrb[0].mxu0
      %v488 = vpop.f32.mrb[0].mxu0
      %v489 = vadd.f32 0.0, %v488
      %v490 = vpop.f32.mrb[0].mxu0
      %491 = vmatprep.mubr.bf16.mxu0 0
      %492 = vmatmul.mubr.bf16.gmra.mrb[0].mxu0 %v383
      %v493 = vpop.f32.mrb[0].mxu0
      %v494 = vadd.f32 0.0, %v493
      %v495 = vpop.f32.mrb[0].mxu0
      %v496 = vpop.f32.mrb[0].mxu0
      %v497 = vadd.f32 0.0, %v496
      %v498 = vpop.f32.mrb[0].mxu0
      %499 = vmatprep.mubr.bf16.mxu0 0
      %500 = vmatmul.mubr.bf16.gmra.mrb[0].mxu0 %v386
      %v501 = vpop.f32.mrb[0].mxu0
      %v502 = vadd.f32 0.0, %v501
      %v503 = vpop.f32.mrb[0].mxu0
      %v504 = vpop.f32.mrb[0].mxu0
      %v505 = vadd.f32 0.0, %v504
      %v506 = vpop.f32.mrb[0].mxu0
      %507 = vmatprep.mubr.bf16.mxu0 0
      %508 = vmatmul.mubr.bf16.gmra.mrb[0].mxu0 %v389
      %v509 = vpop.f32.mrb[0].mxu0
      %v510 = vadd.f32 0.0, %v509
      %v511 = vpop.f32.mrb[0].mxu0
      %v512 = vpop.f32.mrb[0].mxu0
      %v513 = vadd.f32 0.0, %v512
      %v514 = vpop.f32.mrb[0].mxu0
      %515 = vmatprep.mubr.bf16.mxu0 0
      %516 = vmatmul.mubr.bf16.gmra.mrb[0].mxu0 %v392
      %v517 = vpop.f32.mrb[0].mxu0
      %v518 = vadd.f32 0.0, %v517
      %v519 = vpop.f32.mrb[0].mxu0
      %v520 = vpop.f32.mrb[0].mxu0
      %v521 = vadd.f32 0.0, %v520
      %v522 = vpop.f32.mrb[0].mxu0
      %523 = vmatprep.mubr.bf16.mxu0 0
      %524 = vmatmul.mubr.bf16.gmra.mrb[0].mxu0 %v395
      %v525 = vpop.f32.mrb[0].mxu0
      %v526 = vadd.f32 0.0, %v525
      %v527 = vpop.f32.mrb[0].mxu0
      %v528 = vpop.f32.mrb[0].mxu0
      %v529 = vadd.f32 0.0, %v528
      %v530 = vpop.f32.mrb[0].mxu0
      %531 = vmatprep.mubr.bf16.mxu0 0
      %532 = vmatmul.mubr.bf16.gmra.mrb[0].mxu0 %v398
      %v533 = vpop.f32.mrb[0].mxu0
      %v534 = vadd.f32 0.0, %v533
      %v535 = vpop.f32.mrb[0].mxu0
      %v536 = vpop.f32.mrb[0].mxu0
      %v537 = vadd.f32 0.0, %v536
      %v538 = vpop.f32.mrb[0].mxu0
      %539 = vmatprep.mubr.bf16.mxu0 0
      %540 = vmatmul.mubr.bf16.gmra.mrb[0].mxu0 %v401
      %v541 = vpop.f32.mrb[0].mxu0
      %v542 = vadd.f32 0.0, %v541
      %v543 = vpop.f32.mrb[0].mxu0
      %v544 = vpop.f32.mrb[0].mxu0
      %v545 = vadd.f32 0.0, %v544
      %v546 = vpop.f32.mrb[0].mxu0
      %547 = vmatprep.mubr.bf16.mxu0 0
      %548 = vmatmul.mubr.bf16.gmra.mrb[0].mxu0 %v404
      %v549 = vpop.f32.mrb[0].mxu0
      %v550 = vadd.f32 0.0, %v549
      %v551 = vpop.f32.mrb[0].mxu0
      %v552 = vpop.f32.mrb[0].mxu0
      %v553 = vadd.f32 0.0, %v552
      %v554 = vpop.f32.mrb[0].mxu0
      %555 = vmatprep.mubr.bf16.mxu0 0
      %556 = vmatmul.mubr.bf16.gmra.mrb[0].mxu0 %v407
      %v557 = vpop.f32.mrb[0].mxu0
      %v558 = vadd.f32 0.0, %v557
      %v559 = vpop.f32.mrb[0].mxu0
      %v560 = vpop.f32.mrb[0].mxu0
      %v561 = vadd.f32 0.0, %v560
      %v562 = vpop.f32.mrb[0].mxu0
      %563 = vmatprep.mubr.bf16.mxu0 0
      %564 = vmatmul.mubr.bf16.gmra.mrb[0].mxu0 %v410
      %v565 = vpop.f32.mrb[0].mxu0
      %v566 = vadd.f32 0.0, %v565
      %v567 = vpop.f32.mrb[0].mxu0
      %v568 = vpop.f32.mrb[0].mxu0
      %v569 = vadd.f32 0.0, %v568
      %v570 = vpop.f32.mrb[0].mxu0
      %571 = vmatprep.mubr.bf16.mxu0 0
      %572 = vmatmul.mubr.bf16.gmra.mrb[0].mxu0 %v413
      %v573 = vpop.f32.mrb[0].mxu0
      %v574 = vadd.f32 0.0, %v573
      %v575 = vpop.f32.mrb[0].mxu0
      %v576 = vpop.f32.mrb[0].mxu0
      %v577 = vadd.f32 0.0, %v576
      %v578 = vpop.f32.mrb[0].mxu0
      %579 = vdwg.mxu0
      %580 = vst [vmem:[%s218] sm:$0xff] %v454
      %581 = vst [vmem:[%s218 + $0x8] sm:$0xff] %v457
      %582 = vst [vmem:[%s218 + $0x10] sm:$0xff] %v462
      %583 = vst [vmem:[%s218 + $0x18] sm:$0xff] %v465
      %584 = vst [vmem:[%s218 + $0x20] sm:$0xff] %v470
      %585 = vst [vmem:[%s218 + $0x28] sm:$0xff] %v473
      %586 = vst [vmem:[%s218 + $0x30] sm:$0xff] %v478
      %587 = vst [vmem:[%s218 + $0x38] sm:$0xff] %v481
      %588 = vst [vmem:[%s218 + $0x40] sm:$0xff] %v486
      %589 = vst [vmem:[%s218 + $0x48] sm:$0xff] %v489
      %590 = vst [vmem:[%s218 + $0x50] sm:$0xff] %v494
      %591 = vst [vmem:[%s218 + $0x58] sm:$0xff] %v497
      %592 = vst [vmem:[%s218 + $0x60] sm:$0xff] %v502
      %593 = vst [vmem:[%s218 + $0x68] sm:$0xff] %v505
      %594 = vst [vmem:[%s218 + $0x70] sm:$0xff] %v510
      %595 = vst [vmem:[%s218 + $0x78] sm:$0xff] %v513
      %596 = vst [vmem:[%s218 + $0x80] sm:$0xff] %v518
      %597 = vst [vmem:[%s218 + $0x88] sm:$0xff] %v521
      %598 = vst [vmem:[%s218 + $0x90] sm:$0xff] %v526
      %599 = vst [vmem:[%s218 + $0x98] sm:$0xff] %v529
      %600 = vst [vmem:[%s218 + $0xa0] sm:$0xff] %v534
      %601 = vst [vmem:[%s218 + $0xa8] sm:$0xff] %v537
      %602 = vst [vmem:[%s218 + $0xb0] sm:$0xff] %v542
      %603 = vst [vmem:[%s218 + $0xb8] sm:$0xff] %v545
      %604 = vst [vmem:[%s218 + $0xc0] sm:$0xff] %v550
      %605 = vst [vmem:[%s218 + $0xc8] sm:$0xff] %v553
      %606 = vst [vmem:[%s218 + $0xd0] sm:$0xff] %v558
      %607 = vst [vmem:[%s218 + $0xd8] sm:$0xff] %v561
      %608 = vst [vmem:[%s218 + $0xe0] sm:$0xff] %v566
      %609 = vst [vmem:[%s218 + $0xe8] sm:$0xff] %v569
      %610 = vst [vmem:[%s218 + $0xf0] sm:$0xff] %v574
      %611 = vst [vmem:[%s218 + $0xf8] sm:$0xff] %v577
      %v612 = vld [vmem:[%s218] sm:$0xff]
      %v613 = vld [vmem:[%s218 + $0x8] sm:$0xff]
      %v614 = vld [vmem:[%s218 + $0x10] sm:$0xff]
      %v615 = vld [vmem:[%s218 + $0x18] sm:$0xff]
      %v616 = vld [vmem:[%s218 + $0x20] sm:$0xff]
      %v617 = vld [vmem:[%s218 + $0x28] sm:$0xff]
      %v618 = vld [vmem:[%s218 + $0x30] sm:$0xff]
      %v619 = vld [vmem:[%s218 + $0x38] sm:$0xff]
      %v620 = vld [vmem:[%s218 + $0x40] sm:$0xff]
      %v621 = vld [vmem:[%s218 + $0x48] sm:$0xff]
      %v622 = vld [vmem:[%s218 + $0x50] sm:$0xff]
      %v623 = vld [vmem:[%s218 + $0x58] sm:$0xff]
      %v624 = vld [vmem:[%s218 + $0x60] sm:$0xff]
      %v625 = vld [vmem:[%s218 + $0x68] sm:$0xff]
      %v626 = vld [vmem:[%s218 + $0x70] sm:$0xff]
      %v627 = vld [vmem:[%s218 + $0x78] sm:$0xff]
      %v628 = vld [vmem:[%s218 + $0x80] sm:$0xff]
      %v629 = vld [vmem:[%s218 + $0x88] sm:$0xff]
      %v630 = vld [vmem:[%s218 + $0x90] sm:$0xff]
      %v631 = vld [vmem:[%s218 + $0x98] sm:$0xff]
      %v632 = vld [vmem:[%s218 + $0xa0] sm:$0xff]
      %v633 = vld [vmem:[%s218 + $0xa8] sm:$0xff]
      %v634 = vld [vmem:[%s218 + $0xb0] sm:$0xff]
      %v635 = vld [vmem:[%s218 + $0xb8] sm:$0xff]
      %v636 = vld [vmem:[%s218 + $0xc0] sm:$0xff]
      %v637 = vld [vmem:[%s218 + $0xc8] sm:$0xff]
      %v638 = vld [vmem:[%s218 + $0xd0] sm:$0xff]
      %v639 = vld [vmem:[%s218 + $0xd8] sm:$0xff]
      %v640 = vld [vmem:[%s218 + $0xe0] sm:$0xff]
      %v641 = vld [vmem:[%s218 + $0xe8] sm:$0xff]
      %v642 = vld [vmem:[%s218 + $0xf0] sm:$0xff]
      %v643 = vld [vmem:[%s218 + $0xf8] sm:$0xff]
      %vm644 = vsmask.f32 3328
      %vm645 = vsmask.f32 7440
      %vm646 = vmor %vm644, %vm645
      %v648 = vshrl.u32 %v227, 16
      %v650 = vrot.slane %v648, 4
      %v651 = vshll.u32 %v227, 16
      %v653 = vrot.slane %v651, 5
      %v654 = vor.u32 %v650, %v653
      %v655 = vrot.slane %v654, 4
      %v657 = vshll.u32 %v228, 16
      %v659 = vrot.slane %v657, 5
      %v660 = vsel %vm646, %v655, %v659
      %v661 = vshrl.u32 %v228, 16
      %v663 = vrot.slane %v661, 4
      %v664 = vor.u32 %v663, %v659
      %v665 = vrot.slane %v664, 4
      %v667 = vshll.u32 %v229, 16
      %v669 = vrot.slane %v667, 5
      %v670 = vsel %vm646, %v665, %v669
      %v672 = vshrl.u32 %v230, 16
      %v674 = vrot.slane %v672, 4
      %v675 = vshll.u32 %v230, 16
      %v677 = vrot.slane %v675, 5
      %v678 = vor.u32 %v674, %v677
      %v679 = vrot.slane %v678, 4
      %v681 = vshll.u32 %v231, 16
      %v683 = vrot.slane %v681, 5
      %v684 = vsel %vm646, %v679, %v683
      %v685 = vshrl.u32 %v231, 16
      %v687 = vrot.slane %v685, 4
      %v688 = vor.u32 %v687, %v683
      %v689 = vrot.slane %v688, 4
      %v691 = vshll.u32 %v232, 16
      %v693 = vrot.slane %v691, 5
      %v694 = vsel %vm646, %v689, %v693
      %v696 = vshrl.u32 %v233, 16
      %v698 = vrot.slane %v696, 4
      %v699 = vshll.u32 %v233, 16
      %v701 = vrot.slane %v699, 5
      %v702 = vor.u32 %v698, %v701
      %v703 = vrot.slane %v702, 4
      %v705 = vshll.u32 %v234, 16
      %v707 = vrot.slane %v705, 5
      %v708 = vsel %vm646, %v703, %v707
      %v709 = vshrl.u32 %v234, 16
      %v711 = vrot.slane %v709, 4
      %v712 = vor.u32 %v711, %v707
      %v713 = vrot.slane %v712, 4
      %v715 = vshll.u32 %v235, 16
      %v717 = vrot.slane %v715, 5
      %v718 = vsel %vm646, %v713, %v717
      %v720 = vshrl.u32 %v236, 16
      %v722 = vrot.slane %v720, 4
      %v723 = vshll.u32 %v236, 16
      %v725 = vrot.slane %v723, 5
      %v726 = vor.u32 %v722, %v725
      %v727 = vrot.slane %v726, 4
      %v729 = vshll.u32 %v237, 16
      %v731 = vrot.slane %v729, 5
      %v732 = vsel %vm646, %v727, %v731
      %v733 = vshrl.u32 %v237, 16
      %v735 = vrot.slane %v733, 4
      %v736 = vor.u32 %v735, %v731
      %v737 = vrot.slane %v736, 4
      %v739 = vshll.u32 %v238, 16
      %v741 = vrot.slane %v739, 5
      %v742 = vsel %vm646, %v737, %v741
      %v744 = vshrl.u32 %v239, 16
      %v746 = vrot.slane %v744, 4
      %v747 = vshll.u32 %v239, 16
      %v749 = vrot.slane %v747, 5
      %v750 = vor.u32 %v746, %v749
      %v751 = vrot.slane %v750, 4
      %v753 = vshll.u32 %v240, 16
      %v755 = vrot.slane %v753, 5
      %v756 = vsel %vm646, %v751, %v755
      %v757 = vshrl.u32 %v240, 16
      %v759 = vrot.slane %v757, 4
      %v760 = vor.u32 %v759, %v755
      %v761 = vrot.slane %v760, 4
      %v763 = vshll.u32 %v241, 16
      %v765 = vrot.slane %v763, 5
      %v766 = vsel %vm646, %v761, %v765
      %v768 = vshrl.u32 %v242, 16
      %v770 = vrot.slane %v768, 4
      %v771 = vshll.u32 %v242, 16
      %v773 = vrot.slane %v771, 5
      %v774 = vor.u32 %v770, %v773
      %v775 = vrot.slane %v774, 4
      %v777 = vshll.u32 %v243, 16
      %v779 = vrot.slane %v777, 5
      %v780 = vsel %vm646, %v775, %v779
      %v781 = vshrl.u32 %v243, 16
      %v783 = vrot.slane %v781, 4
      %v784 = vor.u32 %v783, %v779
      %v785 = vrot.slane %v784, 4
      %v787 = vshll.u32 %v244, 16
      %v789 = vrot.slane %v787, 5
      %v790 = vsel %vm646, %v785, %v789
      %v792 = vshrl.u32 %v245, 16
      %v794 = vrot.slane %v792, 4
      %v795 = vshll.u32 %v245, 16
      %v797 = vrot.slane %v795, 5
      %v798 = vor.u32 %v794, %v797
      %v799 = vrot.slane %v798, 4
      %v801 = vshll.u32 %v246, 16
      %v803 = vrot.slane %v801, 5
      %v804 = vsel %vm646, %v799, %v803
      %v805 = vshrl.u32 %v246, 16
      %v807 = vrot.slane %v805, 4
      %v808 = vor.u32 %v807, %v803
      %v809 = vrot.slane %v808, 4
      %v811 = vshll.u32 %v247, 16
      %v813 = vrot.slane %v811, 5
      %v814 = vsel %vm646, %v809, %v813
      %v816 = vshrl.u32 %v248, 16
      %v818 = vrot.slane %v816, 4
      %v819 = vshll.u32 %v248, 16
      %v821 = vrot.slane %v819, 5
      %v822 = vor.u32 %v818, %v821
      %v823 = vrot.slane %v822, 4
      %v825 = vshll.u32 %v249, 16
      %v827 = vrot.slane %v825, 5
      %v828 = vsel %vm646, %v823, %v827
      %v829 = vshrl.u32 %v249, 16
      %v831 = vrot.slane %v829, 4
      %v832 = vor.u32 %v831, %v827
      %v833 = vrot.slane %v832, 4
      %v835 = vshll.u32 %v250, 16
      %v837 = vrot.slane %v835, 5
      %v838 = vsel %vm646, %v833, %v837
      %v840 = vshrl.u32 %v251, 16
      %v842 = vrot.slane %v840, 4
      %v843 = vshll.u32 %v251, 16
      %v845 = vrot.slane %v843, 5
      %v846 = vor.u32 %v842, %v845
      %v847 = vrot.slane %v846, 4
      %v849 = vshll.u32 %v252, 16
      %v851 = vrot.slane %v849, 5
      %v852 = vsel %vm646, %v847, %v851
      %v853 = vshrl.u32 %v252, 16
      %v855 = vrot.slane %v853, 4
      %v856 = vor.u32 %v855, %v851
      %v857 = vrot.slane %v856, 4
      %v859 = vshll.u32 %v253, 16
      %v861 = vrot.slane %v859, 5
      %v862 = vsel %vm646, %v857, %v861
      %v864 = vshrl.u32 %v254, 16
      %v866 = vrot.slane %v864, 4
      %v867 = vshll.u32 %v254, 16
      %v869 = vrot.slane %v867, 5
      %v870 = vor.u32 %v866, %v869
      %v871 = vrot.slane %v870, 4
      %v873 = vshll.u32 %v255, 16
      %v875 = vrot.slane %v873, 5
      %v876 = vsel %vm646, %v871, %v875
      %v877 = vshrl.u32 %v255, 16
      %v879 = vrot.slane %v877, 4
      %v880 = vor.u32 %v879, %v875
      %v881 = vrot.slane %v880, 4
      %v883 = vshll.u32 %v256, 16
      %v885 = vrot.slane %v883, 5
      %v886 = vsel %vm646, %v881, %v885
      %v888 = vshrl.u32 %v257, 16
      %v890 = vrot.slane %v888, 4
      %v891 = vshll.u32 %v257, 16
      %v893 = vrot.slane %v891, 5
      %v894 = vor.u32 %v890, %v893
      %v895 = vrot.slane %v894, 4
      %v897 = vshll.u32 %v258, 16
      %v899 = vrot.slane %v897, 5
      %v900 = vsel %vm646, %v895, %v899
      %v901 = vshrl.u32 %v258, 16
      %v903 = vrot.slane %v901, 4
      %v904 = vor.u32 %v903, %v899
      %v905 = vrot.slane %v904, 4
      %v907 = vshll.u32 %v259, 16
      %v909 = vrot.slane %v907, 5
      %v910 = vsel %vm646, %v905, %v909
      %v912 = vshrl.u32 %v260, 16
      %v914 = vrot.slane %v912, 4
      %v915 = vshll.u32 %v260, 16
      %v917 = vrot.slane %v915, 5
      %v918 = vor.u32 %v914, %v917
      %v919 = vrot.slane %v918, 4
      %v921 = vshll.u32 %v261, 16
      %v923 = vrot.slane %v921, 5
      %v924 = vsel %vm646, %v919, %v923
      %v925 = vshrl.u32 %v261, 16
      %v927 = vrot.slane %v925, 4
      %v928 = vor.u32 %v927, %v923
      %v929 = vrot.slane %v928, 4
      %v931 = vshll.u32 %v262, 16
      %v933 = vrot.slane %v931, 5
      %v934 = vsel %vm646, %v929, %v933
      %v936 = vshrl.u32 %v263, 16
      %v938 = vrot.slane %v936, 4
      %v939 = vshll.u32 %v263, 16
      %v941 = vrot.slane %v939, 5
      %v942 = vor.u32 %v938, %v941
      %v943 = vrot.slane %v942, 4
      %v945 = vshll.u32 %v264, 16
      %v947 = vrot.slane %v945, 5
      %v948 = vsel %vm646, %v943, %v947
      %v949 = vshrl.u32 %v264, 16
      %v951 = vrot.slane %v949, 4
      %v952 = vor.u32 %v951, %v947
      %v953 = vrot.slane %v952, 4
      %v955 = vshll.u32 %v265, 16
      %v957 = vrot.slane %v955, 5
      %v958 = vsel %vm646, %v953, %v957
      %v960 = vshrl.u32 %v266, 16
      %v962 = vrot.slane %v960, 4
      %v963 = vshll.u32 %v266, 16
      %v965 = vrot.slane %v963, 5
      %v966 = vor.u32 %v962, %v965
      %v967 = vrot.slane %v966, 4
      %v969 = vshll.u32 %v267, 16
      %v971 = vrot.slane %v969, 5
      %v972 = vsel %vm646, %v967, %v971
      %v973 = vshrl.u32 %v267, 16
      %v975 = vrot.slane %v973, 4
      %v976 = vor.u32 %v975, %v971
      %v977 = vrot.slane %v976, 4
      %v979 = vshll.u32 %v268, 16
      %v981 = vrot.slane %v979, 5
      %v982 = vsel %vm646, %v977, %v981
      %v984 = vshrl.u32 %v269, 16
      %v986 = vrot.slane %v984, 4
      %v987 = vshll.u32 %v269, 16
      %v989 = vrot.slane %v987, 5
      %v990 = vor.u32 %v986, %v989
      %v991 = vrot.slane %v990, 4
      %v993 = vshll.u32 %v270, 16
      %v995 = vrot.slane %v993, 5
      %v996 = vsel %vm646, %v991, %v995
      %v997 = vshrl.u32 %v270, 16
      %v999 = vrot.slane %v997, 4
      %v1000 = vor.u32 %v999, %v995
      %v1001 = vrot.slane %v1000, 4
      %v1003 = vshll.u32 %v271, 16
      %v1005 = vrot.slane %v1003, 5
      %v1006 = vsel %vm646, %v1001, %v1005
      %v1008 = vshrl.u32 %v272, 16
      %v1010 = vrot.slane %v1008, 4
      %v1011 = vshll.u32 %v272, 16
      %v1013 = vrot.slane %v1011, 5
      %v1014 = vor.u32 %v1010, %v1013
      %v1015 = vrot.slane %v1014, 4
      %v1017 = vshll.u32 %v273, 16
      %v1019 = vrot.slane %v1017, 5
      %v1020 = vsel %vm646, %v1015, %v1019
      %v1021 = vshrl.u32 %v273, 16
      %v1023 = vrot.slane %v1021, 4
      %v1024 = vor.u32 %v1023, %v1019
      %v1025 = vrot.slane %v1024, 4
      %v1027 = vshll.u32 %v274, 16
      %v1029 = vrot.slane %v1027, 5
      %v1030 = vsel %vm646, %v1025, %v1029
      %v1031 = vunpack.c.l.b16 %v660
      %v1032 = vunpack.c.l.b16 %v670
      %v1033 = vunpack.c.l.b16 %v684
      %v1034 = vunpack.c.l.b16 %v694
      %v1035 = vunpack.c.l.b16 %v708
      %v1036 = vunpack.c.l.b16 %v718
      %v1037 = vunpack.c.l.b16 %v732
      %v1038 = vunpack.c.l.b16 %v742
      %v1039 = vunpack.c.l.b16 %v756
      %v1040 = vunpack.c.l.b16 %v766
      %v1041 = vunpack.c.l.b16 %v780
      %v1042 = vunpack.c.l.b16 %v790
      %v1043 = vunpack.c.l.b16 %v804
      %v1044 = vunpack.c.l.b16 %v814
      %v1045 = vunpack.c.l.b16 %v828
      %v1046 = vunpack.c.l.b16 %v838
      %v1047 = vunpack.c.l.b16 %v852
      %v1048 = vunpack.c.l.b16 %v862
      %v1049 = vunpack.c.l.b16 %v876
      %v1050 = vunpack.c.l.b16 %v886
      %v1051 = vunpack.c.l.b16 %v900
      %v1052 = vunpack.c.l.b16 %v910
      %v1053 = vunpack.c.l.b16 %v924
      %v1054 = vunpack.c.l.b16 %v934
      %v1055 = vunpack.c.l.b16 %v948
      %v1056 = vunpack.c.l.b16 %v958
      %v1057 = vunpack.c.l.b16 %v972
      %v1058 = vunpack.c.l.b16 %v982
      %v1059 = vunpack.c.l.b16 %v996
      %v1060 = vunpack.c.l.b16 %v1006
      %v1061 = vunpack.c.l.b16 %v1020
      %v1062 = vunpack.c.l.b16 %v1030
      %v1063 = vpack.c.b16 %v1032, %v1031
      %v1064 = vpack.c.b16 %v1034, %v1033
      %v1065 = vpack.c.b16 %v1036, %v1035
      %v1066 = vpack.c.b16 %v1038, %v1037
      %v1067 = vpack.c.b16 %v1040, %v1039
      %v1068 = vpack.c.b16 %v1042, %v1041
      %v1069 = vpack.c.b16 %v1044, %v1043
      %v1070 = vpack.c.b16 %v1046, %v1045
      %v1071 = vpack.c.b16 %v1048, %v1047
      %v1072 = vpack.c.b16 %v1050, %v1049
      %v1073 = vpack.c.b16 %v1052, %v1051
      %v1074 = vpack.c.b16 %v1054, %v1053
      %v1075 = vpack.c.b16 %v1056, %v1055
      %v1076 = vpack.c.b16 %v1058, %v1057
      %v1077 = vpack.c.b16 %v1060, %v1059
      %v1078 = vpack.c.b16 %v1062, %v1061
      %v1080 = vunpack.c.l.b16 %v281
      %v1081 = vpack.c.b16 %v1080, %v1080
      %v1082 = vrot.slane %v1081, 2
      %v1084 = vsel %vm366, %v1063, 0
      %v1087 = vsel %vm366, %v1064, 0
      %v1090 = vsel %vm366, %v1065, 0
      %v1093 = vsel %vm366, %v1066, 0
      %v1096 = vsel %vm366, %v1067, 0
      %v1099 = vsel %vm366, %v1068, 0
      %v1102 = vsel %vm366, %v1069, 0
      %v1105 = vsel %vm366, %v1070, 0
      %v1108 = vsel %vm366, %v1071, 0
      %v1111 = vsel %vm366, %v1072, 0
      %v1114 = vsel %vm366, %v1073, 0
      %v1117 = vsel %vm366, %v1074, 0
      %v1120 = vsel %vm366, %v1075, 0
      %v1123 = vsel %vm366, %v1076, 0
      %v1126 = vsel %vm366, %v1077, 0
      %v1129 = vsel %vm366, %v1078, 0
      %v1132 = vsel %vm415, %v1082, 0
      %1134 = vmatprep.subr.bf16.mxu0 0
      %1135 = vmatpush1.bf16.msra.mxu0 %v1132
      %1136 = vmatprep.subr.bf16.mxu0 0
      %1137 = vmatpush1.bf16.msra.mxu0 0
      %1138 = vmatprep.subr.bf16.mxu0 0
      %1139 = vmatpush1.bf16.msra.mxu0 0
      %1140 = vmatprep.subr.bf16.mxu0 0
      %1141 = vmatpush1.bf16.msra.mxu0 0
      %1142 = vmatprep.subr.bf16.mxu0 0
      %1143 = vmatpush1.bf16.msra.mxu0 0
      %1144 = vmatprep.subr.bf16.mxu0 0
      %1145 = vmatpush1.bf16.msra.mxu0 0
      %1146 = vmatprep.subr.bf16.mxu0 0
      %1147 = vmatpush1.bf16.msra.mxu0 0
      %1148 = vmatprep.subr.bf16.mxu0 0
      %1149 = vmatpush1.bf16.msra.mxu0 0
      %1150 = vmatprep.subr.bf16.mxu0 0
      %1151 = vmatpush1.bf16.msra.mxu0 0
      %1152 = vmatprep.subr.bf16.mxu0 0
      %1153 = vmatpush1.bf16.msra.mxu0 0
      %1154 = vmatprep.subr.bf16.mxu0 0
      %1155 = vmatpush1.bf16.msra.mxu0 0
      %1156 = vmatprep.subr.bf16.mxu0 0
      %1157 = vmatpush1.bf16.msra.mxu0 0
      %1158 = vmatprep.subr.bf16.mxu0 0
      %1159 = vmatpush1.bf16.msra.mxu0 0
      %1160 = vmatprep.subr.bf16.mxu0 0
      %1161 = vmatpush1.bf16.msra.mxu0 0
      %1162 = vmatprep.subr.bf16.mxu0 0
      %1163 = vmatpush1.bf16.msra.mxu0 0
      %1164 = vmatprep.subr.bf16.mxu0 0
      %1165 = vmatpush1.bf16.msra.mxu0 0
      %1166 = vmatprep.mubr.bf16.mxu0 0
      %1167 = vmatmul.mubr.bf16.gmra.mrb[0].mxu0 %v1084
      %v1168 = vpop.f32.mrb[0].mxu0
      %v1169 = vadd.f32 0.0, %v1168
      %v1170 = vpop.f32.mrb[0].mxu0
      %v1171 = vpop.f32.mrb[0].mxu0
      %v1172 = vadd.f32 0.0, %v1171
      %v1173 = vpop.f32.mrb[0].mxu0
      %1174 = vmatprep.mubr.bf16.mxu0 0
      %1175 = vmatmul.mubr.bf16.gmra.mrb[0].mxu0 %v1087
      %v1176 = vpop.f32.mrb[0].mxu0
      %v1177 = vadd.f32 0.0, %v1176
      %v1178 = vpop.f32.mrb[0].mxu0
      %v1179 = vpop.f32.mrb[0].mxu0
      %v1180 = vadd.f32 0.0, %v1179
      %v1181 = vpop.f32.mrb[0].mxu0
      %1182 = vmatprep.mubr.bf16.mxu0 0
      %1183 = vmatmul.mubr.bf16.gmra.mrb[0].mxu0 %v1090
      %v1184 = vpop.f32.mrb[0].mxu0
      %v1185 = vadd.f32 0.0, %v1184
      %v1186 = vpop.f32.mrb[0].mxu0
      %v1187 = vpop.f32.mrb[0].mxu0
      %v1188 = vadd.f32 0.0, %v1187
      %v1189 = vpop.f32.mrb[0].mxu0
      %1190 = vmatprep.mubr.bf16.mxu0 0
      %1191 = vmatmul.mubr.bf16.gmra.mrb[0].mxu0 %v1093
      %v1192 = vpop.f32.mrb[0].mxu0
      %v1193 = vadd.f32 0.0, %v1192
      %v1194 = vpop.f32.mrb[0].mxu0
      %v1195 = vpop.f32.mrb[0].mxu0
      %v1196 = vadd.f32 0.0, %v1195
      %v1197 = vpop.f32.mrb[0].mxu0
      %1198 = vmatprep.mubr.bf16.mxu0 0
      %1199 = vmatmul.mubr.bf16.gmra.mrb[0].mxu0 %v1096
      %v1200 = vpop.f32.mrb[0].mxu0
      %v1201 = vadd.f32 0.0, %v1200
      %v1202 = vpop.f32.mrb[0].mxu0
      %v1203 = vpop.f32.mrb[0].mxu0
      %v1204 = vadd.f32 0.0, %v1203
      %v1205 = vpop.f32.mrb[0].mxu0
      %1206 = vmatprep.mubr.bf16.mxu0 0
      %1207 = vmatmul.mubr.bf16.gmra.mrb[0].mxu0 %v1099
      %v1208 = vpop.f32.mrb[0].mxu0
      %v1209 = vadd.f32 0.0, %v1208
      %v1210 = vpop.f32.mrb[0].mxu0
      %v1211 = vpop.f32.mrb[0].mxu0
      %v1212 = vadd.f32 0.0, %v1211
      %v1213 = vpop.f32.mrb[0].mxu0
      %1214 = vmatprep.mubr.bf16.mxu0 0
      %1215 = vmatmul.mubr.bf16.gmra.mrb[0].mxu0 %v1102
      %v1216 = vpop.f32.mrb[0].mxu0
      %v1217 = vadd.f32 0.0, %v1216
      %v1218 = vpop.f32.mrb[0].mxu0
      %v1219 = vpop.f32.mrb[0].mxu0
      %v1220 = vadd.f32 0.0, %v1219
      %v1221 = vpop.f32.mrb[0].mxu0
      %1222 = vmatprep.mubr.bf16.mxu0 0
      %1223 = vmatmul.mubr.bf16.gmra.mrb[0].mxu0 %v1105
      %v1224 = vpop.f32.mrb[0].mxu0
      %v1225 = vadd.f32 0.0, %v1224
      %v1226 = vpop.f32.mrb[0].mxu0
      %v1227 = vpop.f32.mrb[0].mxu0
      %v1228 = vadd.f32 0.0, %v1227
      %v1229 = vpop.f32.mrb[0].mxu0
      %1230 = vmatprep.mubr.bf16.mxu0 0
      %1231 = vmatmul.mubr.bf16.gmra.mrb[0].mxu0 %v1108
      %v1232 = vpop.f32.mrb[0].mxu0
      %v1233 = vadd.f32 0.0, %v1232
      %v1234 = vpop.f32.mrb[0].mxu0
      %v1235 = vpop.f32.mrb[0].mxu0
      %v1236 = vadd.f32 0.0, %v1235
      %v1237 = vpop.f32.mrb[0].mxu0
      %1238 = vmatprep.mubr.bf16.mxu0 0
      %1239 = vmatmul.mubr.bf16.gmra.mrb[0].mxu0 %v1111
      %v1240 = vpop.f32.mrb[0].mxu0
      %v1241 = vadd.f32 0.0, %v1240
      %v1242 = vpop.f32.mrb[0].mxu0
      %v1243 = vpop.f32.mrb[0].mxu0
      %v1244 = vadd.f32 0.0, %v1243
      %v1245 = vpop.f32.mrb[0].mxu0
      %1246 = vmatprep.mubr.bf16.mxu0 0
      %1247 = vmatmul.mubr.bf16.gmra.mrb[0].mxu0 %v1114
      %v1248 = vpop.f32.mrb[0].mxu0
      %v1249 = vadd.f32 0.0, %v1248
      %v1250 = vpop.f32.mrb[0].mxu0
      %v1251 = vpop.f32.mrb[0].mxu0
      %v1252 = vadd.f32 0.0, %v1251
      %v1253 = vpop.f32.mrb[0].mxu0
      %1254 = vmatprep.mubr.bf16.mxu0 0
      %1255 = vmatmul.mubr.bf16.gmra.mrb[0].mxu0 %v1117
      %v1256 = vpop.f32.mrb[0].mxu0
      %v1257 = vadd.f32 0.0, %v1256
      %v1258 = vpop.f32.mrb[0].mxu0
      %v1259 = vpop.f32.mrb[0].mxu0
      %v1260 = vadd.f32 0.0, %v1259
      %v1261 = vpop.f32.mrb[0].mxu0
      %1262 = vmatprep.mubr.bf16.mxu0 0
      %1263 = vmatmul.mubr.bf16.gmra.mrb[0].mxu0 %v1120
      %v1264 = vpop.f32.mrb[0].mxu0
      %v1265 = vadd.f32 0.0, %v1264
      %v1266 = vpop.f32.mrb[0].mxu0
      %v1267 = vpop.f32.mrb[0].mxu0
      %v1268 = vadd.f32 0.0, %v1267
      %v1269 = vpop.f32.mrb[0].mxu0
      %1270 = vmatprep.mubr.bf16.mxu0 0
      %1271 = vmatmul.mubr.bf16.gmra.mrb[0].mxu0 %v1123
      %v1272 = vpop.f32.mrb[0].mxu0
      %v1273 = vadd.f32 0.0, %v1272
      %v1274 = vpop.f32.mrb[0].mxu0
      %v1275 = vpop.f32.mrb[0].mxu0
      %v1276 = vadd.f32 0.0, %v1275
      %v1277 = vpop.f32.mrb[0].mxu0
      %1278 = vmatprep.mubr.bf16.mxu0 0
      %1279 = vmatmul.mubr.bf16.gmra.mrb[0].mxu0 %v1126
      %v1280 = vpop.f32.mrb[0].mxu0
      %v1281 = vadd.f32 0.0, %v1280
      %v1282 = vpop.f32.mrb[0].mxu0
      %v1283 = vpop.f32.mrb[0].mxu0
      %v1284 = vadd.f32 0.0, %v1283
      %v1285 = vpop.f32.mrb[0].mxu0
      %1286 = vmatprep.mubr.bf16.mxu0 0
      %1287 = vmatmul.mubr.bf16.gmra.mrb[0].mxu0 %v1129
      %v1288 = vpop.f32.mrb[0].mxu0
      %v1289 = vadd.f32 0.0, %v1288
      %v1290 = vpop.f32.mrb[0].mxu0
      %v1291 = vpop.f32.mrb[0].mxu0
      %v1292 = vadd.f32 0.0, %v1291
      %v1293 = vpop.f32.mrb[0].mxu0
      %1294 = vdwg.mxu0
      %v1295 = vadd.f32 %v612, %v1169
      %v1296 = vadd.f32 %v613, %v1172
      %v1297 = vadd.f32 %v614, %v1177
      %v1298 = vadd.f32 %v615, %v1180
      %v1299 = vadd.f32 %v616, %v1185
      %v1300 = vadd.f32 %v617, %v1188
      %v1301 = vadd.f32 %v618, %v1193
      %v1302 = vadd.f32 %v619, %v1196
      %v1303 = vadd.f32 %v620, %v1201
      %v1304 = vadd.f32 %v621, %v1204
      %v1305 = vadd.f32 %v622, %v1209
      %v1306 = vadd.f32 %v623, %v1212
      %v1307 = vadd.f32 %v624, %v1217
      %v1308 = vadd.f32 %v625, %v1220
      %v1309 = vadd.f32 %v626, %v1225
      %v1310 = vadd.f32 %v627, %v1228
      %v1311 = vadd.f32 %v628, %v1233
      %v1312 = vadd.f32 %v629, %v1236
      %v1313 = vadd.f32 %v630, %v1241
      %v1314 = vadd.f32 %v631, %v1244
      %v1315 = vadd.f32 %v632, %v1249
      %v1316 = vadd.f32 %v633, %v1252
      %v1317 = vadd.f32 %v634, %v1257
      %v1318 = vadd.f32 %v635, %v1260
      %v1319 = vadd.f32 %v636, %v1265
      %v1320 = vadd.f32 %v637, %v1268
      %v1321 = vadd.f32 %v638, %v1273
      %v1322 = vadd.f32 %v639, %v1276
      %v1323 = vadd.f32 %v640, %v1281
      %v1324 = vadd.f32 %v641, %v1284
      %v1325 = vadd.f32 %v642, %v1289
      %v1326 = vadd.f32 %v643, %v1292
      %1327 = vst [vmem:[%s218] sm:$0xff] %v1295
      %1328 = vst [vmem:[%s218 + $0x8] sm:$0xff] %v1296
      %1329 = vst [vmem:[%s218 + $0x10] sm:$0xff] %v1297
      %1330 = vst [vmem:[%s218 + $0x18] sm:$0xff] %v1298
      %1331 = vst [vmem:[%s218 + $0x20] sm:$0xff] %v1299
      %1332 = vst [vmem:[%s218 + $0x28] sm:$0xff] %v1300
      %1333 = vst [vmem:[%s218 + $0x30] sm:$0xff] %v1301
      %1334 = vst [vmem:[%s218 + $0x38] sm:$0xff] %v1302
      %1335 = vst [vmem:[%s218 + $0x40] sm:$0xff] %v1303
      %1336 = vst [vmem:[%s218 + $0x48] sm:$0xff] %v1304
      %1337 = vst [vmem:[%s218 + $0x50] sm:$0xff] %v1305
      %1338 = vst [vmem:[%s218 + $0x58] sm:$0xff] %v1306
      %1339 = vst [vmem:[%s218 + $0x60] sm:$0xff] %v1307
      %1340 = vst [vmem:[%s218 + $0x68] sm:$0xff] %v1308
      %1341 = vst [vmem:[%s218 + $0x70] sm:$0xff] %v1309
      %1342 = vst [vmem:[%s218 + $0x78] sm:$0xff] %v1310
      %1343 = vst [vmem:[%s218 + $0x80] sm:$0xff] %v1311
      %1344 = vst [vmem:[%s218 + $0x88] sm:$0xff] %v1312
      %1345 = vst [vmem:[%s218 + $0x90] sm:$0xff] %v1313
      %1346 = vst [vmem:[%s218 + $0x98] sm:$0xff] %v1314
      %1347 = vst [vmem:[%s218 + $0xa0] sm:$0xff] %v1315
      %1348 = vst [vmem:[%s218 + $0xa8] sm:$0xff] %v1316
      %1349 = vst [vmem:[%s218 + $0xb0] sm:$0xff] %v1317
      %1350 = vst [vmem:[%s218 + $0xb8] sm:$0xff] %v1318
      %1351 = vst [vmem:[%s218 + $0xc0] sm:$0xff] %v1319
      %1352 = vst [vmem:[%s218 + $0xc8] sm:$0xff] %v1320
      %1353 = vst [vmem:[%s218 + $0xd0] sm:$0xff] %v1321
      %1354 = vst [vmem:[%s218 + $0xd8] sm:$0xff] %v1322
      %1355 = vst [vmem:[%s218 + $0xe0] sm:$0xff] %v1323
      %1356 = vst [vmem:[%s218 + $0xe8] sm:$0xff] %v1324
      %1357 = vst [vmem:[%s218 + $0xf0] sm:$0xff] %v1325
      %1358 = vst [vmem:[%s218 + $0xf8] sm:$0xff] %v1326
      %v1359 = vld [vmem:[%s218] sm:$0xff]
      %v1360 = vld [vmem:[%s218 + $0x8] sm:$0xff]
      %v1361 = vld [vmem:[%s218 + $0x10] sm:$0xff]
      %v1362 = vld [vmem:[%s218 + $0x18] sm:$0xff]
      %v1363 = vld [vmem:[%s218 + $0x20] sm:$0xff]
      %v1364 = vld [vmem:[%s218 + $0x28] sm:$0xff]
      %v1365 = vld [vmem:[%s218 + $0x30] sm:$0xff]
      %v1366 = vld [vmem:[%s218 + $0x38] sm:$0xff]
      %v1367 = vld [vmem:[%s218 + $0x40] sm:$0xff]
      %v1368 = vld [vmem:[%s218 + $0x48] sm:$0xff]
      %v1369 = vld [vmem:[%s218 + $0x50] sm:$0xff]
      %v1370 = vld [vmem:[%s218 + $0x58] sm:$0xff]
      %v1371 = vld [vmem:[%s218 + $0x60] sm:$0xff]
      %v1372 = vld [vmem:[%s218 + $0x68] sm:$0xff]
      %v1373 = vld [vmem:[%s218 + $0x70] sm:$0xff]
      %v1374 = vld [vmem:[%s218 + $0x78] sm:$0xff]
      %v1375 = vld [vmem:[%s218 + $0x80] sm:$0xff]
      %v1376 = vld [vmem:[%s218 + $0x88] sm:$0xff]
      %v1377 = vld [vmem:[%s218 + $0x90] sm:$0xff]
      %v1378 = vld [vmem:[%s218 + $0x98] sm:$0xff]
      %v1379 = vld [vmem:[%s218 + $0xa0] sm:$0xff]
      %v1380 = vld [vmem:[%s218 + $0xa8] sm:$0xff]
      %v1381 = vld [vmem:[%s218 + $0xb0] sm:$0xff]
      %v1382 = vld [vmem:[%s218 + $0xb8] sm:$0xff]
      %v1383 = vld [vmem:[%s218 + $0xc0] sm:$0xff]
      %v1384 = vld [vmem:[%s218 + $0xc8] sm:$0xff]
      %v1385 = vld [vmem:[%s218 + $0xd0] sm:$0xff]
      %v1386 = vld [vmem:[%s218 + $0xd8] sm:$0xff]
      %v1387 = vld [vmem:[%s218 + $0xe0] sm:$0xff]
      %v1388 = vld [vmem:[%s218 + $0xe8] sm:$0xff]
      %v1389 = vld [vmem:[%s218 + $0xf0] sm:$0xff]
      %v1390 = vld [vmem:[%s218 + $0xf8] sm:$0xff]
      %vm1407 = vcmask 1042432
      %vm1408 = vcmask 1046532
      %vm1409 = vmor %vm1407, %vm1408
      %v1410 = vrot.slane %v227, 5
      %v1411 = vrot.slane %v1410, 4
      %v1412 = vrot.slane %v228, 5
      %v1413 = vsel %vm1409, %v1411, %v1412
      %v1414 = vrot.slane %v1412, 4
      %v1415 = vrot.slane %v229, 5
      %v1416 = vsel %vm1409, %v1414, %v1415
      %v1417 = vrot.slane %v230, 5
      %v1418 = vrot.slane %v1417, 4
      %v1419 = vrot.slane %v231, 5
      %v1420 = vsel %vm1409, %v1418, %v1419
      %v1421 = vrot.slane %v1419, 4
      %v1422 = vrot.slane %v232, 5
      %v1423 = vsel %vm1409, %v1421, %v1422
      %v1424 = vrot.slane %v233, 5
      %v1425 = vrot.slane %v1424, 4
      %v1426 = vrot.slane %v234, 5
      %v1427 = vsel %vm1409, %v1425, %v1426
      %v1428 = vrot.slane %v1426, 4
      %v1429 = vrot.slane %v235, 5
      %v1430 = vsel %vm1409, %v1428, %v1429
      %v1431 = vrot.slane %v236, 5
      %v1432 = vrot.slane %v1431, 4
      %v1433 = vrot.slane %v237, 5
      %v1434 = vsel %vm1409, %v1432, %v1433
      %v1435 = vrot.slane %v1433, 4
      %v1436 = vrot.slane %v238, 5
      %v1437 = vsel %vm1409, %v1435, %v1436
      %v1438 = vrot.slane %v239, 5
      %v1439 = vrot.slane %v1438, 4
      %v1440 = vrot.slane %v240, 5
      %v1441 = vsel %vm1409, %v1439, %v1440
      %v1442 = vrot.slane %v1440, 4
      %v1443 = vrot.slane %v241, 5
      %v1444 = vsel %vm1409, %v1442, %v1443
      %v1445 = vrot.slane %v242, 5
      %v1446 = vrot.slane %v1445, 4
      %v1447 = vrot.slane %v243, 5
      %v1448 = vsel %vm1409, %v1446, %v1447
      %v1449 = vrot.slane %v1447, 4
      %v1450 = vrot.slane %v244, 5
      %v1451 = vsel %vm1409, %v1449, %v1450
      %v1452 = vrot.slane %v245, 5
      %v1453 = vrot.slane %v1452, 4
      %v1454 = vrot.slane %v246, 5
      %v1455 = vsel %vm1409, %v1453, %v1454
      %v1456 = vrot.slane %v1454, 4
      %v1457 = vrot.slane %v247, 5
      %v1458 = vsel %vm1409, %v1456, %v1457
      %v1459 = vrot.slane %v248, 5
      %v1460 = vrot.slane %v1459, 4
      %v1461 = vrot.slane %v249, 5
      %v1462 = vsel %vm1409, %v1460, %v1461
      %v1463 = vrot.slane %v1461, 4
      %v1464 = vrot.slane %v250, 5
      %v1465 = vsel %vm1409, %v1463, %v1464
      %v1466 = vrot.slane %v251, 5
      %v1467 = vrot.slane %v1466, 4
      %v1468 = vrot.slane %v252, 5
      %v1469 = vsel %vm1409, %v1467, %v1468
      %v1470 = vrot.slane %v1468, 4
      %v1471 = vrot.slane %v253, 5
      %v1472 = vsel %vm1409, %v1470, %v1471
      %v1473 = vrot.slane %v254, 5
      %v1474 = vrot.slane %v1473, 4
      %v1475 = vrot.slane %v255, 5
      %v1476 = vsel %vm1409, %v1474, %v1475
      %v1477 = vrot.slane %v1475, 4
      %v1478 = vrot.slane %v256, 5
      %v1479 = vsel %vm1409, %v1477, %v1478
      %v1480 = vrot.slane %v257, 5
      %v1481 = vrot.slane %v1480, 4
      %v1482 = vrot.slane %v258, 5
      %v1483 = vsel %vm1409, %v1481, %v1482
      %v1484 = vrot.slane %v1482, 4
      %v1485 = vrot.slane %v259, 5
      %v1486 = vsel %vm1409, %v1484, %v1485
      %v1487 = vrot.slane %v260, 5
      %v1488 = vrot.slane %v1487, 4
      %v1489 = vrot.slane %v261, 5
      %v1490 = vsel %vm1409, %v1488, %v1489
      %v1491 = vrot.slane %v1489, 4
      %v1492 = vrot.slane %v262, 5
      %v1493 = vsel %vm1409, %v1491, %v1492
      %v1494 = vrot.slane %v263, 5
      %v1495 = vrot.slane %v1494, 4
      %v1496 = vrot.slane %v264, 5
      %v1497 = vsel %vm1409, %v1495, %v1496
      %v1498 = vrot.slane %v1496, 4
      %v1499 = vrot.slane %v265, 5
      %v1500 = vsel %vm1409, %v1498, %v1499
      %v1501 = vrot.slane %v266, 5
      %v1502 = vrot.slane %v1501, 4
      %v1503 = vrot.slane %v267, 5
      %v1504 = vsel %vm1409, %v1502, %v1503
      %v1505 = vrot.slane %v1503, 4
      %v1506 = vrot.slane %v268, 5
      %v1507 = vsel %vm1409, %v1505, %v1506
      %v1508 = vrot.slane %v269, 5
      %v1509 = vrot.slane %v1508, 4
      %v1510 = vrot.slane %v270, 5
      %v1511 = vsel %vm1409, %v1509, %v1510
      %v1512 = vrot.slane %v1510, 4
      %v1513 = vrot.slane %v271, 5
      %v1514 = vsel %vm1409, %v1512, %v1513
      %v1515 = vrot.slane %v272, 5
      %v1516 = vrot.slane %v1515, 4
      %v1517 = vrot.slane %v273, 5
      %v1518 = vsel %vm1409, %v1516, %v1517
      %v1519 = vrot.slane %v1517, 4
      %v1520 = vrot.slane %v274, 5
      %v1521 = vsel %vm1409, %v1519, %v1520
      %v1522 = vunpack.c.l.b16 %v1413
      %v1523 = vunpack.c.l.b16 %v1416
      %v1524 = vunpack.c.l.b16 %v1420
      %v1525 = vunpack.c.l.b16 %v1423
      %v1526 = vunpack.c.l.b16 %v1427
      %v1527 = vunpack.c.l.b16 %v1430
      %v1528 = vunpack.c.l.b16 %v1434
      %v1529 = vunpack.c.l.b16 %v1437
      %v1530 = vunpack.c.l.b16 %v1441
      %v1531 = vunpack.c.l.b16 %v1444
      %v1532 = vunpack.c.l.b16 %v1448
      %v1533 = vunpack.c.l.b16 %v1451
      %v1534 = vunpack.c.l.b16 %v1455
      %v1535 = vunpack.c.l.b16 %v1458
      %v1536 = vunpack.c.l.b16 %v1462
      %v1537 = vunpack.c.l.b16 %v1465
      %v1538 = vunpack.c.l.b16 %v1469
      %v1539 = vunpack.c.l.b16 %v1472
      %v1540 = vunpack.c.l.b16 %v1476
      %v1541 = vunpack.c.l.b16 %v1479
      %v1542 = vunpack.c.l.b16 %v1483
      %v1543 = vunpack.c.l.b16 %v1486
      %v1544 = vunpack.c.l.b16 %v1490
      %v1545 = vunpack.c.l.b16 %v1493
      %v1546 = vunpack.c.l.b16 %v1497
      %v1547 = vunpack.c.l.b16 %v1500
      %v1548 = vunpack.c.l.b16 %v1504
      %v1549 = vunpack.c.l.b16 %v1507
      %v1550 = vunpack.c.l.b16 %v1511
      %v1551 = vunpack.c.l.b16 %v1514
      %v1552 = vunpack.c.l.b16 %v1518
      %v1553 = vunpack.c.l.b16 %v1521
      %v1554 = vpack.c.b16 %v1523, %v1522
      %v1555 = vpack.c.b16 %v1525, %v1524
      %v1556 = vpack.c.b16 %v1527, %v1526
      %v1557 = vpack.c.b16 %v1529, %v1528
      %v1558 = vpack.c.b16 %v1531, %v1530
      %v1559 = vpack.c.b16 %v1533, %v1532
      %v1560 = vpack.c.b16 %v1535, %v1534
      %v1561 = vpack.c.b16 %v1537, %v1536
      %v1562 = vpack.c.b16 %v1539, %v1538
      %v1563 = vpack.c.b16 %v1541, %v1540
      %v1564 = vpack.c.b16 %v1543, %v1542
      %v1565 = vpack.c.b16 %v1545, %v1544
      %v1566 = vpack.c.b16 %v1547, %v1546
      %v1567 = vpack.c.b16 %v1549, %v1548
      %v1568 = vpack.c.b16 %v1551, %v1550
      %v1569 = vpack.c.b16 %v1553, %v1552
      %v1571 = vsel %vm366, %v1554, 0
      %v1574 = vsel %vm366, %v1555, 0
      %v1577 = vsel %vm366, %v1556, 0
      %v1580 = vsel %vm366, %v1557, 0
      %v1583 = vsel %vm366, %v1558, 0
      %v1586 = vsel %vm366, %v1559, 0
      %v1589 = vsel %vm366, %v1560, 0
      %v1592 = vsel %vm366, %v1561, 0
      %v1595 = vsel %vm366, %v1562, 0
      %v1598 = vsel %vm366, %v1563, 0
      %v1601 = vsel %vm366, %v1564, 0
      %v1604 = vsel %vm366, %v1565, 0
      %v1607 = vsel %vm366, %v1566, 0
      %v1610 = vsel %vm366, %v1567, 0
      %v1613 = vsel %vm366, %v1568, 0
      %v1616 = vsel %vm366, %v1569, 0
      %v1619 = vsel %vm415, %v282, 0
      %1621 = vmatprep.subr.bf16.mxu0 0
      %1622 = vmatpush1.bf16.msra.mxu0 %v1619
      %1623 = vmatprep.subr.bf16.mxu0 0
      %1624 = vmatpush1.bf16.msra.mxu0 0
      %1625 = vmatprep.subr.bf16.mxu0 0
      %1626 = vmatpush1.bf16.msra.mxu0 0
      %1627 = vmatprep.subr.bf16.mxu0 0
      %1628 = vmatpush1.bf16.msra.mxu0 0
      %1629 = vmatprep.subr.bf16.mxu0 0
      %1630 = vmatpush1.bf16.msra.mxu0 0
      %1631 = vmatprep.subr.bf16.mxu0 0
      %1632 = vmatpush1.bf16.msra.mxu0 0
      %1633 = vmatprep.subr.bf16.mxu0 0
      %1634 = vmatpush1.bf16.msra.mxu0 0
      %1635 = vmatprep.subr.bf16.mxu0 0
      %1636 = vmatpush1.bf16.msra.mxu0 0
      %1637 = vmatprep.subr.bf16.mxu0 0
      %1638 = vmatpush1.bf16.msra.mxu0 0
      %1639 = vmatprep.subr.bf16.mxu0 0
      %1640 = vmatpush1.bf16.msra.mxu0 0
      %1641 = vmatprep.subr.bf16.mxu0 0
      %1642 = vmatpush1.bf16.msra.mxu0 0
      %1643 = vmatprep.subr.bf16.mxu0 0
      %1644 = vmatpush1.bf16.msra.mxu0 0
      %1645 = vmatprep.subr.bf16.mxu0 0
      %1646 = vmatpush1.bf16.msra.mxu0 0
      %1647 = vmatprep.subr.bf16.mxu0 0
      %1648 = vmatpush1.bf16.msra.mxu0 0
      %1649 = vmatprep.subr.bf16.mxu0 0
      %1650 = vmatpush1.bf16.msra.mxu0 0
      %1651 = vmatprep.subr.bf16.mxu0 0
      %1652 = vmatpush1.bf16.msra.mxu0 0
      %1653 = vmatprep.mubr.bf16.mxu0 0
      %1654 = vmatmul.mubr.bf16.gmra.mrb[0].mxu0 %v1571
      %v1655 = vpop.f32.mrb[0].mxu0
      %v1656 = vadd.f32 0.0, %v1655
      %v1657 = vpop.f32.mrb[0].mxu0
      %v1658 = vpop.f32.mrb[0].mxu0
      %v1659 = vadd.f32 0.0, %v1658
      %v1660 = vpop.f32.mrb[0].mxu0
      %1661 = vmatprep.mubr.bf16.mxu0 0
      %1662 = vmatmul.mubr.bf16.gmra.mrb[0].mxu0 %v1574
      %v1663 = vpop.f32.mrb[0].mxu0
      %v1664 = vadd.f32 0.0, %v1663
      %v1665 = vpop.f32.mrb[0].mxu0
      %v1666 = vpop.f32.mrb[0].mxu0
      %v1667 = vadd.f32 0.0, %v1666
      %v1668 = vpop.f32.mrb[0].mxu0
      %1669 = vmatprep.mubr.bf16.mxu0 0
      %1670 = vmatmul.mubr.bf16.gmra.mrb[0].mxu0 %v1577
      %v1671 = vpop.f32.mrb[0].mxu0
      %v1672 = vadd.f32 0.0, %v1671
      %v1673 = vpop.f32.mrb[0].mxu0
      %v1674 = vpop.f32.mrb[0].mxu0
      %v1675 = vadd.f32 0.0, %v1674
      %v1676 = vpop.f32.mrb[0].mxu0
      %1677 = vmatprep.mubr.bf16.mxu0 0
      %1678 = vmatmul.mubr.bf16.gmra.mrb[0].mxu0 %v1580
      %v1679 = vpop.f32.mrb[0].mxu0
      %v1680 = vadd.f32 0.0, %v1679
      %v1681 = vpop.f32.mrb[0].mxu0
      %v1682 = vpop.f32.mrb[0].mxu0
      %v1683 = vadd.f32 0.0, %v1682
      %v1684 = vpop.f32.mrb[0].mxu0
      %1685 = vmatprep.mubr.bf16.mxu0 0
      %1686 = vmatmul.mubr.bf16.gmra.mrb[0].mxu0 %v1583
      %v1687 = vpop.f32.mrb[0].mxu0
      %v1688 = vadd.f32 0.0, %v1687
      %v1689 = vpop.f32.mrb[0].mxu0
      %v1690 = vpop.f32.mrb[0].mxu0
      %v1691 = vadd.f32 0.0, %v1690
      %v1692 = vpop.f32.mrb[0].mxu0
      %1693 = vmatprep.mubr.bf16.mxu0 0
      %1694 = vmatmul.mubr.bf16.gmra.mrb[0].mxu0 %v1586
      %v1695 = vpop.f32.mrb[0].mxu0
      %v1696 = vadd.f32 0.0, %v1695
      %v1697 = vpop.f32.mrb[0].mxu0
      %v1698 = vpop.f32.mrb[0].mxu0
      %v1699 = vadd.f32 0.0, %v1698
      %v1700 = vpop.f32.mrb[0].mxu0
      %1701 = vmatprep.mubr.bf16.mxu0 0
      %1702 = vmatmul.mubr.bf16.gmra.mrb[0].mxu0 %v1589
      %v1703 = vpop.f32.mrb[0].mxu0
      %v1704 = vadd.f32 0.0, %v1703
      %v1705 = vpop.f32.mrb[0].mxu0
      %v1706 = vpop.f32.mrb[0].mxu0
      %v1707 = vadd.f32 0.0, %v1706
      %v1708 = vpop.f32.mrb[0].mxu0
      %1709 = vmatprep.mubr.bf16.mxu0 0
      %1710 = vmatmul.mubr.bf16.gmra.mrb[0].mxu0 %v1592
      %v1711 = vpop.f32.mrb[0].mxu0
      %v1712 = vadd.f32 0.0, %v1711
      %v1713 = vpop.f32.mrb[0].mxu0
      %v1714 = vpop.f32.mrb[0].mxu0
      %v1715 = vadd.f32 0.0, %v1714
      %v1716 = vpop.f32.mrb[0].mxu0
      %1717 = vmatprep.mubr.bf16.mxu0 0
      %1718 = vmatmul.mubr.bf16.gmra.mrb[0].mxu0 %v1595
      %v1719 = vpop.f32.mrb[0].mxu0
      %v1720 = vadd.f32 0.0, %v1719
      %v1721 = vpop.f32.mrb[0].mxu0
      %v1722 = vpop.f32.mrb[0].mxu0
      %v1723 = vadd.f32 0.0, %v1722
      %v1724 = vpop.f32.mrb[0].mxu0
      %1725 = vmatprep.mubr.bf16.mxu0 0
      %1726 = vmatmul.mubr.bf16.gmra.mrb[0].mxu0 %v1598
      %v1727 = vpop.f32.mrb[0].mxu0
      %v1728 = vadd.f32 0.0, %v1727
      %v1729 = vpop.f32.mrb[0].mxu0
      %v1730 = vpop.f32.mrb[0].mxu0
      %v1731 = vadd.f32 0.0, %v1730
      %v1732 = vpop.f32.mrb[0].mxu0
      %1733 = vmatprep.mubr.bf16.mxu0 0
      %1734 = vmatmul.mubr.bf16.gmra.mrb[0].mxu0 %v1601
      %v1735 = vpop.f32.mrb[0].mxu0
      %v1736 = vadd.f32 0.0, %v1735
      %v1737 = vpop.f32.mrb[0].mxu0
      %v1738 = vpop.f32.mrb[0].mxu0
      %v1739 = vadd.f32 0.0, %v1738
      %v1740 = vpop.f32.mrb[0].mxu0
      %1741 = vmatprep.mubr.bf16.mxu0 0
      %1742 = vmatmul.mubr.bf16.gmra.mrb[0].mxu0 %v1604
      %v1743 = vpop.f32.mrb[0].mxu0
      %v1744 = vadd.f32 0.0, %v1743
      %v1745 = vpop.f32.mrb[0].mxu0
      %v1746 = vpop.f32.mrb[0].mxu0
      %v1747 = vadd.f32 0.0, %v1746
      %v1748 = vpop.f32.mrb[0].mxu0
      %1749 = vmatprep.mubr.bf16.mxu0 0
      %1750 = vmatmul.mubr.bf16.gmra.mrb[0].mxu0 %v1607
      %v1751 = vpop.f32.mrb[0].mxu0
      %v1752 = vadd.f32 0.0, %v1751
      %v1753 = vpop.f32.mrb[0].mxu0
      %v1754 = vpop.f32.mrb[0].mxu0
      %v1755 = vadd.f32 0.0, %v1754
      %v1756 = vpop.f32.mrb[0].mxu0
      %1757 = vmatprep.mubr.bf16.mxu0 0
      %1758 = vmatmul.mubr.bf16.gmra.mrb[0].mxu0 %v1610
      %v1759 = vpop.f32.mrb[0].mxu0
      %v1760 = vadd.f32 0.0, %v1759
      %v1761 = vpop.f32.mrb[0].mxu0
      %v1762 = vpop.f32.mrb[0].mxu0
      %v1763 = vadd.f32 0.0, %v1762
      %v1764 = vpop.f32.mrb[0].mxu0
      %1765 = vmatprep.mubr.bf16.mxu0 0
      %1766 = vmatmul.mubr.bf16.gmra.mrb[0].mxu0 %v1613
      %v1767 = vpop.f32.mrb[0].mxu0
      %v1768 = vadd.f32 0.0, %v1767
      %v1769 = vpop.f32.mrb[0].mxu0
      %v1770 = vpop.f32.mrb[0].mxu0
      %v1771 = vadd.f32 0.0, %v1770
      %v1772 = vpop.f32.mrb[0].mxu0
      %1773 = vmatprep.mubr.bf16.mxu0 0
      %1774 = vmatmul.mubr.bf16.gmra.mrb[0].mxu0 %v1616
      %v1775 = vpop.f32.mrb[0].mxu0
      %v1776 = vadd.f32 0.0, %v1775
      %v1777 = vpop.f32.mrb[0].mxu0
      %v1778 = vpop.f32.mrb[0].mxu0
      %v1779 = vadd.f32 0.0, %v1778
      %v1780 = vpop.f32.mrb[0].mxu0
      %1781 = vdwg.mxu0
      %v1782 = vadd.f32 %v1359, %v1656
      %v1783 = vadd.f32 %v1360, %v1659
      %v1784 = vadd.f32 %v1361, %v1664
      %v1785 = vadd.f32 %v1362, %v1667
      %v1786 = vadd.f32 %v1363, %v1672
      %v1787 = vadd.f32 %v1364, %v1675
      %v1788 = vadd.f32 %v1365, %v1680
      %v1789 = vadd.f32 %v1366, %v1683
      %v1790 = vadd.f32 %v1367, %v1688
      %v1791 = vadd.f32 %v1368, %v1691
      %v1792 = vadd.f32 %v1369, %v1696
      %v1793 = vadd.f32 %v1370, %v1699
      %v1794 = vadd.f32 %v1371, %v1704
      %v1795 = vadd.f32 %v1372, %v1707
      %v1796 = vadd.f32 %v1373, %v1712
      %v1797 = vadd.f32 %v1374, %v1715
      %v1798 = vadd.f32 %v1375, %v1720
      %v1799 = vadd.f32 %v1376, %v1723
      %v1800 = vadd.f32 %v1377, %v1728
      %v1801 = vadd.f32 %v1378, %v1731
      %v1802 = vadd.f32 %v1379, %v1736
      %v1803 = vadd.f32 %v1380, %v1739
      %v1804 = vadd.f32 %v1381, %v1744
      %v1805 = vadd.f32 %v1382, %v1747
      %v1806 = vadd.f32 %v1383, %v1752
      %v1807 = vadd.f32 %v1384, %v1755
      %v1808 = vadd.f32 %v1385, %v1760
      %v1809 = vadd.f32 %v1386, %v1763
      %v1810 = vadd.f32 %v1387, %v1768
      %v1811 = vadd.f32 %v1388, %v1771
      %v1812 = vadd.f32 %v1389, %v1776
      %v1813 = vadd.f32 %v1390, %v1779
      %1814 = vst [vmem:[%s218] sm:$0xff] %v1782
      %1815 = vst [vmem:[%s218 + $0x8] sm:$0xff] %v1783
      %1816 = vst [vmem:[%s218 + $0x10] sm:$0xff] %v1784
      %1817 = vst [vmem:[%s218 + $0x18] sm:$0xff] %v1785
      %1818 = vst [vmem:[%s218 + $0x20] sm:$0xff] %v1786
      %1819 = vst [vmem:[%s218 + $0x28] sm:$0xff] %v1787
      %1820 = vst [vmem:[%s218 + $0x30] sm:$0xff] %v1788
      %1821 = vst [vmem:[%s218 + $0x38] sm:$0xff] %v1789
      %1822 = vst [vmem:[%s218 + $0x40] sm:$0xff] %v1790
      %1823 = vst [vmem:[%s218 + $0x48] sm:$0xff] %v1791
      %1824 = vst [vmem:[%s218 + $0x50] sm:$0xff] %v1792
      %1825 = vst [vmem:[%s218 + $0x58] sm:$0xff] %v1793
      %1826 = vst [vmem:[%s218 + $0x60] sm:$0xff] %v1794
      %1827 = vst [vmem:[%s218 + $0x68] sm:$0xff] %v1795
      %1828 = vst [vmem:[%s218 + $0x70] sm:$0xff] %v1796
      %1829 = vst [vmem:[%s218 + $0x78] sm:$0xff] %v1797
      %1830 = vst [vmem:[%s218 + $0x80] sm:$0xff] %v1798
      %1831 = vst [vmem:[%s218 + $0x88] sm:$0xff] %v1799
      %1832 = vst [vmem:[%s218 + $0x90] sm:$0xff] %v1800
      %1833 = vst [vmem:[%s218 + $0x98] sm:$0xff] %v1801
      %1834 = vst [vmem:[%s218 + $0xa0] sm:$0xff] %v1802
      %1835 = vst [vmem:[%s218 + $0xa8] sm:$0xff] %v1803
      %1836 = vst [vmem:[%s218 + $0xb0] sm:$0xff] %v1804
      %1837 = vst [vmem:[%s218 + $0xb8] sm:$0xff] %v1805
      %1838 = vst [vmem:[%s218 + $0xc0] sm:$0xff] %v1806
      %1839 = vst [vmem:[%s218 + $0xc8] sm:$0xff] %v1807
      %1840 = vst [vmem:[%s218 + $0xd0] sm:$0xff] %v1808
      %1841 = vst [vmem:[%s218 + $0xd8] sm:$0xff] %v1809
      %1842 = vst [vmem:[%s218 + $0xe0] sm:$0xff] %v1810
      %1843 = vst [vmem:[%s218 + $0xe8] sm:$0xff] %v1811
      %1844 = vst [vmem:[%s218 + $0xf0] sm:$0xff] %v1812
      %1845 = vst [vmem:[%s218 + $0xf8] sm:$0xff] %v1813
      %v1846 = vld [vmem:[%s218] sm:$0xff]
      %v1847 = vld [vmem:[%s218 + $0x8] sm:$0xff]
      %v1848 = vld [vmem:[%s218 + $0x10] sm:$0xff]
      %v1849 = vld [vmem:[%s218 + $0x18] sm:$0xff]
      %v1850 = vld [vmem:[%s218 + $0x20] sm:$0xff]
      %v1851 = vld [vmem:[%s218 + $0x28] sm:$0xff]
      %v1852 = vld [vmem:[%s218 + $0x30] sm:$0xff]
      %v1853 = vld [vmem:[%s218 + $0x38] sm:$0xff]
      %v1854 = vld [vmem:[%s218 + $0x40] sm:$0xff]
      %v1855 = vld [vmem:[%s218 + $0x48] sm:$0xff]
      %v1856 = vld [vmem:[%s218 + $0x50] sm:$0xff]
      %v1857 = vld [vmem:[%s218 + $0x58] sm:$0xff]
      %v1858 = vld [vmem:[%s218 + $0x60] sm:$0xff]
      %v1859 = vld [vmem:[%s218 + $0x68] sm:$0xff]
      %v1860 = vld [vmem:[%s218 + $0x70] sm:$0xff]
      %v1861 = vld [vmem:[%s218 + $0x78] sm:$0xff]
      %v1862 = vld [vmem:[%s218 + $0x80] sm:$0xff]
      %v1863 = vld [vmem:[%s218 + $0x88] sm:$0xff]
      %v1864 = vld [vmem:[%s218 + $0x90] sm:$0xff]
      %v1865 = vld [vmem:[%s218 + $0x98] sm:$0xff]
      %v1866 = vld [vmem:[%s218 + $0xa0] sm:$0xff]
      %v1867 = vld [vmem:[%s218 + $0xa8] sm:$0xff]
      %v1868 = vld [vmem:[%s218 + $0xb0] sm:$0xff]
      %v1869 = vld [vmem:[%s218 + $0xb8] sm:$0xff]
      %v1870 = vld [vmem:[%s218 + $0xc0] sm:$0xff]
      %v1871 = vld [vmem:[%s218 + $0xc8] sm:$0xff]
      %v1872 = vld [vmem:[%s218 + $0xd0] sm:$0xff]
      %v1873 = vld [vmem:[%s218 + $0xd8] sm:$0xff]
      %v1874 = vld [vmem:[%s218 + $0xe0] sm:$0xff]
      %v1875 = vld [vmem:[%s218 + $0xe8] sm:$0xff]
      %v1876 = vld [vmem:[%s218 + $0xf0] sm:$0xff]
      %v1877 = vld [vmem:[%s218 + $0xf8] sm:$0xff]
      %v1880 = vunpack.c.l.b16 %v275
      %v1881 = vunpack.c.l.b16 %v276
      %v1882 = vpack.c.b16 %v1881, %v1880
      %v1884 = vunpack.c.l.b16 %v282
      %v1885 = vpack.c.b16 %v1884, %v1884
      %v1886 = vrot.slane %v1885, 2
      %v1888 = vsel %vm366, %v1882, 0
      %v1891 = vsel %vm415, %v1886, 0
      %1893 = vmatprep.subr.bf16.mxu0 0
      %1894 = vmatpush1.bf16.msra.mxu0 %v1891
      %1895 = vmatprep.subr.bf16.mxu0 0
      %1896 = vmatpush1.bf16.msra.mxu0 0
      %1897 = vmatprep.subr.bf16.mxu0 0
      %1898 = vmatpush1.bf16.msra.mxu0 0
      %1899 = vmatprep.subr.bf16.mxu0 0
      %1900 = vmatpush1.bf16.msra.mxu0 0
      %1901 = vmatprep.subr.bf16.mxu0 0
      %1902 = vmatpush1.bf16.msra.mxu0 0
      %1903 = vmatprep.subr.bf16.mxu0 0
      %1904 = vmatpush1.bf16.msra.mxu0 0
      %1905 = vmatprep.subr.bf16.mxu0 0
      %1906 = vmatpush1.bf16.msra.mxu0 0
      %1907 = vmatprep.subr.bf16.mxu0 0
      %1908 = vmatpush1.bf16.msra.mxu0 0
      %1909 = vmatprep.subr.bf16.mxu0 0
      %1910 = vmatpush1.bf16.msra.mxu0 0
      %1911 = vmatprep.subr.bf16.mxu0 0
      %1912 = vmatpush1.bf16.msra.mxu0 0
      %1913 = vmatprep.subr.bf16.mxu0 0
      %1914 = vmatpush1.bf16.msra.mxu0 0
      %1915 = vmatprep.subr.bf16.mxu0 0
      %1916 = vmatpush1.bf16.msra.mxu0 0
      %1917 = vmatprep.subr.bf16.mxu0 0
      %1918 = vmatpush1.bf16.msra.mxu0 0
      %1919 = vmatprep.subr.bf16.mxu0 0
      %1920 = vmatpush1.bf16.msra.mxu0 0
      %1921 = vmatprep.subr.bf16.mxu0 0
      %1922 = vmatpush1.bf16.msra.mxu0 0
      %1923 = vmatprep.subr.bf16.mxu0 0
      %1924 = vmatpush1.bf16.msra.mxu0 0
      %1925 = vmatprep.mubr.bf16.mxu0 0
      %1926 = vmatmul.mubr.bf16.gmra.mrb[0].mxu0 %v371
      %v1927 = vpop.f32.mrb[0].mxu0
      %v1928 = vadd.f32 0.0, %v1927
      %v1929 = vpop.f32.mrb[0].mxu0
      %v1930 = vpop.f32.mrb[0].mxu0
      %v1931 = vadd.f32 0.0, %v1930
      %v1932 = vpop.f32.mrb[0].mxu0
      %1933 = vmatprep.mubr.bf16.mxu0 0
      %1934 = vmatmul.mubr.bf16.gmra.mrb[0].mxu0 %v374
      %v1935 = vpop.f32.mrb[0].mxu0
      %v1936 = vadd.f32 0.0, %v1935
      %v1937 = vpop.f32.mrb[0].mxu0
      %v1938 = vpop.f32.mrb[0].mxu0
      %v1939 = vadd.f32 0.0, %v1938
      %v1940 = vpop.f32.mrb[0].mxu0
      %1941 = vmatprep.mubr.bf16.mxu0 0
      %1942 = vmatmul.mubr.bf16.gmra.mrb[0].mxu0 %v377
      %v1943 = vpop.f32.mrb[0].mxu0
      %v1944 = vadd.f32 0.0, %v1943
      %v1945 = vpop.f32.mrb[0].mxu0
      %v1946 = vpop.f32.mrb[0].mxu0
      %v1947 = vadd.f32 0.0, %v1946
      %v1948 = vpop.f32.mrb[0].mxu0
      %1949 = vmatprep.mubr.bf16.mxu0 0
      %1950 = vmatmul.mubr.bf16.gmra.mrb[0].mxu0 %v380
      %v1951 = vpop.f32.mrb[0].mxu0
      %v1952 = vadd.f32 0.0, %v1951
      %v1953 = vpop.f32.mrb[0].mxu0
      %v1954 = vpop.f32.mrb[0].mxu0
      %v1955 = vadd.f32 0.0, %v1954
      %v1956 = vpop.f32.mrb[0].mxu0
      %1957 = vmatprep.mubr.bf16.mxu0 0
      %1958 = vmatmul.mubr.bf16.gmra.mrb[0].mxu0 %v383
      %v1959 = vpop.f32.mrb[0].mxu0
      %v1960 = vadd.f32 0.0, %v1959
      %v1961 = vpop.f32.mrb[0].mxu0
      %v1962 = vpop.f32.mrb[0].mxu0
      %v1963 = vadd.f32 0.0, %v1962
      %v1964 = vpop.f32.mrb[0].mxu0
      %1965 = vmatprep.mubr.bf16.mxu0 0
      %1966 = vmatmul.mubr.bf16.gmra.mrb[0].mxu0 %v386
      %v1967 = vpop.f32.mrb[0].mxu0
      %v1968 = vadd.f32 0.0, %v1967
      %v1969 = vpop.f32.mrb[0].mxu0
      %v1970 = vpop.f32.mrb[0].mxu0
      %v1971 = vadd.f32 0.0, %v1970
      %v1972 = vpop.f32.mrb[0].mxu0
      %1973 = vmatprep.mubr.bf16.mxu0 0
      %1974 = vmatmul.mubr.bf16.gmra.mrb[0].mxu0 %v389
      %v1975 = vpop.f32.mrb[0].mxu0
      %v1976 = vadd.f32 0.0, %v1975
      %v1977 = vpop.f32.mrb[0].mxu0
      %v1978 = vpop.f32.mrb[0].mxu0
      %v1979 = vadd.f32 0.0, %v1978
      %v1980 = vpop.f32.mrb[0].mxu0
      %1981 = vmatprep.mubr.bf16.mxu0 0
      %1982 = vmatmul.mubr.bf16.gmra.mrb[0].mxu0 %v392
      %v1983 = vpop.f32.mrb[0].mxu0
      %v1984 = vadd.f32 0.0, %v1983
      %v1985 = vpop.f32.mrb[0].mxu0
      %v1986 = vpop.f32.mrb[0].mxu0
      %v1987 = vadd.f32 0.0, %v1986
      %v1988 = vpop.f32.mrb[0].mxu0
      %1989 = vmatprep.mubr.bf16.mxu0 0
      %1990 = vmatmul.mubr.bf16.gmra.mrb[0].mxu0 %v395
      %v1991 = vpop.f32.mrb[0].mxu0
      %v1992 = vadd.f32 0.0, %v1991
      %v1993 = vpop.f32.mrb[0].mxu0
      %v1994 = vpop.f32.mrb[0].mxu0
      %v1995 = vadd.f32 0.0, %v1994
      %v1996 = vpop.f32.mrb[0].mxu0
      %1997 = vmatprep.mubr.bf16.mxu0 0
      %1998 = vmatmul.mubr.bf16.gmra.mrb[0].mxu0 %v398
      %v1999 = vpop.f32.mrb[0].mxu0
      %v2000 = vadd.f32 0.0, %v1999
      %v2001 = vpop.f32.mrb[0].mxu0
      %v2002 = vpop.f32.mrb[0].mxu0
      %v2003 = vadd.f32 0.0, %v2002
      %v2004 = vpop.f32.mrb[0].mxu0
      %2005 = vmatprep.mubr.bf16.mxu0 0
      %2006 = vmatmul.mubr.bf16.gmra.mrb[0].mxu0 %v401
      %v2007 = vpop.f32.mrb[0].mxu0
      %v2008 = vadd.f32 0.0, %v2007
      %v2009 = vpop.f32.mrb[0].mxu0
      %v2010 = vpop.f32.mrb[0].mxu0
      %v2011 = vadd.f32 0.0, %v2010
      %v2012 = vpop.f32.mrb[0].mxu0
      %2013 = vmatprep.mubr.bf16.mxu0 0
      %2014 = vmatmul.mubr.bf16.gmra.mrb[0].mxu0 %v404
      %v2015 = vpop.f32.mrb[0].mxu0
      %v2016 = vadd.f32 0.0, %v2015
      %v2017 = vpop.f32.mrb[0].mxu0
      %v2018 = vpop.f32.mrb[0].mxu0
      %v2019 = vadd.f32 0.0, %v2018
      %v2020 = vpop.f32.mrb[0].mxu0
      %2021 = vmatprep.mubr.bf16.mxu0 0
      %2022 = vmatmul.mubr.bf16.gmra.mrb[0].mxu0 %v407
      %v2023 = vpop.f32.mrb[0].mxu0
      %v2024 = vadd.f32 0.0, %v2023
      %v2025 = vpop.f32.mrb[0].mxu0
      %v2026 = vpop.f32.mrb[0].mxu0
      %v2027 = vadd.f32 0.0, %v2026
      %v2028 = vpop.f32.mrb[0].mxu0
      %2029 = vmatprep.mubr.bf16.mxu0 0
      %2030 = vmatmul.mubr.bf16.gmra.mrb[0].mxu0 %v410
      %v2031 = vpop.f32.mrb[0].mxu0
      %v2032 = vadd.f32 0.0, %v2031
      %v2033 = vpop.f32.mrb[0].mxu0
      %v2034 = vpop.f32.mrb[0].mxu0
      %v2035 = vadd.f32 0.0, %v2034
      %v2036 = vpop.f32.mrb[0].mxu0
      %2037 = vmatprep.mubr.bf16.mxu0 0
      %2038 = vmatmul.mubr.bf16.gmra.mrb[0].mxu0 %v413
      %v2039 = vpop.f32.mrb[0].mxu0
      %v2040 = vadd.f32 0.0, %v2039
      %v2041 = vpop.f32.mrb[0].mxu0
      %v2042 = vpop.f32.mrb[0].mxu0
      %v2043 = vadd.f32 0.0, %v2042
      %v2044 = vpop.f32.mrb[0].mxu0
      %2045 = vmatprep.mubr.bf16.mxu0 0
      %2046 = vmatmul.mubr.bf16.gmra.mrb[0].mxu0 %v1888
      %v2047 = vpop.f32.mrb[0].mxu0
      %v2048 = vadd.f32 0.0, %v2047
      %v2049 = vpop.f32.mrb[0].mxu0
      %v2050 = vpop.f32.mrb[0].mxu0
      %v2051 = vadd.f32 0.0, %v2050
      %v2052 = vpop.f32.mrb[0].mxu0
      %2053 = vdwg.mxu0
      %v2054 = vadd.f32 %v1846, %v1928
      %v2055 = vadd.f32 %v1847, %v1931
      %v2056 = vadd.f32 %v1848, %v1936
      %v2057 = vadd.f32 %v1849, %v1939
      %v2058 = vadd.f32 %v1850, %v1944
      %v2059 = vadd.f32 %v1851, %v1947
      %v2060 = vadd.f32 %v1852, %v1952
      %v2061 = vadd.f32 %v1853, %v1955
      %v2062 = vadd.f32 %v1854, %v1960
      %v2063 = vadd.f32 %v1855, %v1963
      %v2064 = vadd.f32 %v1856, %v1968
      %v2065 = vadd.f32 %v1857, %v1971
      %v2066 = vadd.f32 %v1858, %v1976
      %v2067 = vadd.f32 %v1859, %v1979
      %v2068 = vadd.f32 %v1860, %v1984
      %v2069 = vadd.f32 %v1861, %v1987
      %v2070 = vadd.f32 %v1862, %v1992
      %v2071 = vadd.f32 %v1863, %v1995
      %v2072 = vadd.f32 %v1864, %v2000
      %v2073 = vadd.f32 %v1865, %v2003
      %v2074 = vadd.f32 %v1866, %v2008
      %v2075 = vadd.f32 %v1867, %v2011
      %v2076 = vadd.f32 %v1868, %v2016
      %v2077 = vadd.f32 %v1869, %v2019
      %v2078 = vadd.f32 %v1870, %v2024
      %v2079 = vadd.f32 %v1871, %v2027
      %v2080 = vadd.f32 %v1872, %v2032
      %v2081 = vadd.f32 %v1873, %v2035
      %v2082 = vadd.f32 %v1874, %v2040
      %v2083 = vadd.f32 %v1875, %v2043
      %v2084 = vadd.f32 %v1876, %v2048
      %v2085 = vadd.f32 %v1877, %v2051
      %2086 = vst [vmem:[%s218] sm:$0xff] %v2054
      %2087 = vst [vmem:[%s218 + $0x8] sm:$0xff] %v2055
      %2088 = vst [vmem:[%s218 + $0x10] sm:$0xff] %v2056
      %2089 = vst [vmem:[%s218 + $0x18] sm:$0xff] %v2057
      %2090 = vst [vmem:[%s218 + $0x20] sm:$0xff] %v2058
      %2091 = vst [vmem:[%s218 + $0x28] sm:$0xff] %v2059
      %2092 = vst [vmem:[%s218 + $0x30] sm:$0xff] %v2060
      %2093 = vst [vmem:[%s218 + $0x38] sm:$0xff] %v2061
      %2094 = vst [vmem:[%s218 + $0x40] sm:$0xff] %v2062
      %2095 = vst [vmem:[%s218 + $0x48] sm:$0xff] %v2063
      %2096 = vst [vmem:[%s218 + $0x50] sm:$0xff] %v2064
      %2097 = vst [vmem:[%s218 + $0x58] sm:$0xff] %v2065
      %2098 = vst [vmem:[%s218 + $0x60] sm:$0xff] %v2066
      %2099 = vst [vmem:[%s218 + $0x68] sm:$0xff] %v2067
      %2100 = vst [vmem:[%s218 + $0x70] sm:$0xff] %v2068
      %2101 = vst [vmem:[%s218 + $0x78] sm:$0xff] %v2069
      %2102 = vst [vmem:[%s218 + $0x80] sm:$0xff] %v2070
      %2103 = vst [vmem:[%s218 + $0x88] sm:$0xff] %v2071
      %2104 = vst [vmem:[%s218 + $0x90] sm:$0xff] %v2072
      %2105 = vst [vmem:[%s218 + $0x98] sm:$0xff] %v2073
      %2106 = vst [vmem:[%s218 + $0xa0] sm:$0xff] %v2074
      %2107 = vst [vmem:[%s218 + $0xa8] sm:$0xff] %v2075
      %2108 = vst [vmem:[%s218 + $0xb0] sm:$0xff] %v2076
      %2109 = vst [vmem:[%s218 + $0xb8] sm:$0xff] %v2077
      %2110 = vst [vmem:[%s218 + $0xc0] sm:$0xff] %v2078
      %2111 = vst [vmem:[%s218 + $0xc8] sm:$0xff] %v2079
      %2112 = vst [vmem:[%s218 + $0xd0] sm:$0xff] %v2080
      %2113 = vst [vmem:[%s218 + $0xd8] sm:$0xff] %v2081
      %2114 = vst [vmem:[%s218 + $0xe0] sm:$0xff] %v2082
      %2115 = vst [vmem:[%s218 + $0xe8] sm:$0xff] %v2083
      %2116 = vst [vmem:[%s218 + $0xf0] sm:$0xff] %v2084
      %2117 = vst [vmem:[%s218 + $0xf8] sm:$0xff] %v2085
      %v2118 = vld [vmem:[%s218] sm:$0xff]
      %v2119 = vld [vmem:[%s218 + $0x8] sm:$0xff]
      %v2120 = vld [vmem:[%s218 + $0x10] sm:$0xff]
      %v2121 = vld [vmem:[%s218 + $0x18] sm:$0xff]
      %v2122 = vld [vmem:[%s218 + $0x20] sm:$0xff]
      %v2123 = vld [vmem:[%s218 + $0x28] sm:$0xff]
      %v2124 = vld [vmem:[%s218 + $0x30] sm:$0xff]
      %v2125 = vld [vmem:[%s218 + $0x38] sm:$0xff]
      %v2126 = vld [vmem:[%s218 + $0x40] sm:$0xff]
      %v2127 = vld [vmem:[%s218 + $0x48] sm:$0xff]
      %v2128 = vld [vmem:[%s218 + $0x50] sm:$0xff]
      %v2129 = vld [vmem:[%s218 + $0x58] sm:$0xff]
      %v2130 = vld [vmem:[%s218 + $0x60] sm:$0xff]
      %v2131 = vld [vmem:[%s218 + $0x68] sm:$0xff]
      %v2132 = vld [vmem:[%s218 + $0x70] sm:$0xff]
      %v2133 = vld [vmem:[%s218 + $0x78] sm:$0xff]
      %v2134 = vld [vmem:[%s218 + $0x80] sm:$0xff]
      %v2135 = vld [vmem:[%s218 + $0x88] sm:$0xff]
      %v2136 = vld [vmem:[%s218 + $0x90] sm:$0xff]
      %v2137 = vld [vmem:[%s218 + $0x98] sm:$0xff]
      %v2138 = vld [vmem:[%s218 + $0xa0] sm:$0xff]
      %v2139 = vld [vmem:[%s218 + $0xa8] sm:$0xff]
      %v2140 = vld [vmem:[%s218 + $0xb0] sm:$0xff]
      %v2141 = vld [vmem:[%s218 + $0xb8] sm:$0xff]
      %v2142 = vld [vmem:[%s218 + $0xc0] sm:$0xff]
      %v2143 = vld [vmem:[%s218 + $0xc8] sm:$0xff]
      %v2144 = vld [vmem:[%s218 + $0xd0] sm:$0xff]
      %v2145 = vld [vmem:[%s218 + $0xd8] sm:$0xff]
      %v2146 = vld [vmem:[%s218 + $0xe0] sm:$0xff]
      %v2147 = vld [vmem:[%s218 + $0xe8] sm:$0xff]
      %v2148 = vld [vmem:[%s218 + $0xf0] sm:$0xff]
      %v2149 = vld [vmem:[%s218 + $0xf8] sm:$0xff]
      %v2151 = vshrl.u32 %v275, 16
      %v2153 = vrot.slane %v2151, 4
      %v2154 = vshll.u32 %v275, 16
      %v2156 = vrot.slane %v2154, 5
      %v2157 = vor.u32 %v2153, %v2156
      %v2158 = vrot.slane %v2157, 4
      %v2160 = vshll.u32 %v276, 16
      %v2162 = vrot.slane %v2160, 5
      %v2163 = vsel %vm646, %v2158, %v2162
      %v2164 = vshrl.u32 %v276, 16
      %v2166 = vrot.slane %v2164, 4
      %v2167 = vor.u32 %v2166, %v2162
      %v2168 = vrot.slane %v2167, 4
      %v2170 = vshll.u32 %v277, 16
      %v2172 = vrot.slane %v2170, 5
      %v2173 = vsel %vm646, %v2168, %v2172
      %v2174 = vunpack.c.l.b16 %v2163
      %v2175 = vunpack.c.l.b16 %v2173
      %v2176 = vpack.c.b16 %v2175, %v2174
      %v2178 = vsel %vm366, %v2176, 0
      %v2181 = vsel %vm415, %v283, 0
      %2183 = vmatprep.subr.bf16.mxu0 0
      %2184 = vmatpush1.bf16.msra.mxu0 %v2181
      %2185 = vmatprep.subr.bf16.mxu0 0
      %2186 = vmatpush1.bf16.msra.mxu0 0
      %2187 = vmatprep.subr.bf16.mxu0 0
      %2188 = vmatpush1.bf16.msra.mxu0 0
      %2189 = vmatprep.subr.bf16.mxu0 0
      %2190 = vmatpush1.bf16.msra.mxu0 0
      %2191 = vmatprep.subr.bf16.mxu0 0
      %2192 = vmatpush1.bf16.msra.mxu0 0
      %2193 = vmatprep.subr.bf16.mxu0 0
      %2194 = vmatpush1.bf16.msra.mxu0 0
      %2195 = vmatprep.subr.bf16.mxu0 0
      %2196 = vmatpush1.bf16.msra.mxu0 0
      %2197 = vmatprep.subr.bf16.mxu0 0
      %2198 = vmatpush1.bf16.msra.mxu0 0
      %2199 = vmatprep.subr.bf16.mxu0 0
      %2200 = vmatpush1.bf16.msra.mxu0 0
      %2201 = vmatprep.subr.bf16.mxu0 0
      %2202 = vmatpush1.bf16.msra.mxu0 0
      %2203 = vmatprep.subr.bf16.mxu0 0
      %2204 = vmatpush1.bf16.msra.mxu0 0
      %2205 = vmatprep.subr.bf16.mxu0 0
      %2206 = vmatpush1.bf16.msra.mxu0 0
      %2207 = vmatprep.subr.bf16.mxu0 0
      %2208 = vmatpush1.bf16.msra.mxu0 0
      %2209 = vmatprep.subr.bf16.mxu0 0
      %2210 = vmatpush1.bf16.msra.mxu0 0
      %2211 = vmatprep.subr.bf16.mxu0 0
      %2212 = vmatpush1.bf16.msra.mxu0 0
      %2213 = vmatprep.subr.bf16.mxu0 0
      %2214 = vmatpush1.bf16.msra.mxu0 0
      %2215 = vmatprep.mubr.bf16.mxu0 0
      %2216 = vmatmul.mubr.bf16.gmra.mrb[0].mxu0 %v1087
      %v2217 = vpop.f32.mrb[0].mxu0
      %v2218 = vadd.f32 0.0, %v2217
      %v2219 = vpop.f32.mrb[0].mxu0
      %v2220 = vpop.f32.mrb[0].mxu0
      %v2221 = vadd.f32 0.0, %v2220
      %v2222 = vpop.f32.mrb[0].mxu0
      %2223 = vmatprep.mubr.bf16.mxu0 0
      %2224 = vmatmul.mubr.bf16.gmra.mrb[0].mxu0 %v1090
      %v2225 = vpop.f32.mrb[0].mxu0
      %v2226 = vadd.f32 0.0, %v2225
      %v2227 = vpop.f32.mrb[0].mxu0
      %v2228 = vpop.f32.mrb[0].mxu0
      %v2229 = vadd.f32 0.0, %v2228
      %v2230 = vpop.f32.mrb[0].mxu0
      %2231 = vmatprep.mubr.bf16.mxu0 0
      %2232 = vmatmul.mubr.bf16.gmra.mrb[0].mxu0 %v1093
      %v2233 = vpop.f32.mrb[0].mxu0
      %v2234 = vadd.f32 0.0, %v2233
      %v2235 = vpop.f32.mrb[0].mxu0
      %v2236 = vpop.f32.mrb[0].mxu0
      %v2237 = vadd.f32 0.0, %v2236
      %v2238 = vpop.f32.mrb[0].mxu0
      %2239 = vmatprep.mubr.bf16.mxu0 0
      %2240 = vmatmul.mubr.bf16.gmra.mrb[0].mxu0 %v1096
      %v2241 = vpop.f32.mrb[0].mxu0
      %v2242 = vadd.f32 0.0, %v2241
      %v2243 = vpop.f32.mrb[0].mxu0
      %v2244 = vpop.f32.mrb[0].mxu0
      %v2245 = vadd.f32 0.0, %v2244
      %v2246 = vpop.f32.mrb[0].mxu0
      %2247 = vmatprep.mubr.bf16.mxu0 0
      %2248 = vmatmul.mubr.bf16.gmra.mrb[0].mxu0 %v1099
      %v2249 = vpop.f32.mrb[0].mxu0
      %v2250 = vadd.f32 0.0, %v2249
      %v2251 = vpop.f32.mrb[0].mxu0
      %v2252 = vpop.f32.mrb[0].mxu0
      %v2253 = vadd.f32 0.0, %v2252
      %v2254 = vpop.f32.mrb[0].mxu0
      %2255 = vmatprep.mubr.bf16.mxu0 0
      %2256 = vmatmul.mubr.bf16.gmra.mrb[0].mxu0 %v1102
      %v2257 = vpop.f32.mrb[0].mxu0
      %v2258 = vadd.f32 0.0, %v2257
      %v2259 = vpop.f32.mrb[0].mxu0
      %v2260 = vpop.f32.mrb[0].mxu0
      %v2261 = vadd.f32 0.0, %v2260
      %v2262 = vpop.f32.mrb[0].mxu0
      %2263 = vmatprep.mubr.bf16.mxu0 0
      %2264 = vmatmul.mubr.bf16.gmra.mrb[0].mxu0 %v1105
      %v2265 = vpop.f32.mrb[0].mxu0
      %v2266 = vadd.f32 0.0, %v2265
      %v2267 = vpop.f32.mrb[0].mxu0
      %v2268 = vpop.f32.mrb[0].mxu0
      %v2269 = vadd.f32 0.0, %v2268
      %v2270 = vpop.f32.mrb[0].mxu0
      %2271 = vmatprep.mubr.bf16.mxu0 0
      %2272 = vmatmul.mubr.bf16.gmra.mrb[0].mxu0 %v1108
      %v2273 = vpop.f32.mrb[0].mxu0
      %v2274 = vadd.f32 0.0, %v2273
      %v2275 = vpop.f32.mrb[0].mxu0
      %v2276 = vpop.f32.mrb[0].mxu0
      %v2277 = vadd.f32 0.0, %v2276
      %v2278 = vpop.f32.mrb[0].mxu0
      %2279 = vmatprep.mubr.bf16.mxu0 0
      %2280 = vmatmul.mubr.bf16.gmra.mrb[0].mxu0 %v1111
      %v2281 = vpop.f32.mrb[0].mxu0
      %v2282 = vadd.f32 0.0, %v2281
      %v2283 = vpop.f32.mrb[0].mxu0
      %v2284 = vpop.f32.mrb[0].mxu0
      %v2285 = vadd.f32 0.0, %v2284
      %v2286 = vpop.f32.mrb[0].mxu0
      %2287 = vmatprep.mubr.bf16.mxu0 0
      %2288 = vmatmul.mubr.bf16.gmra.mrb[0].mxu0 %v1114
      %v2289 = vpop.f32.mrb[0].mxu0
      %v2290 = vadd.f32 0.0, %v2289
      %v2291 = vpop.f32.mrb[0].mxu0
      %v2292 = vpop.f32.mrb[0].mxu0
      %v2293 = vadd.f32 0.0, %v2292
      %v2294 = vpop.f32.mrb[0].mxu0
      %2295 = vmatprep.mubr.bf16.mxu0 0
      %2296 = vmatmul.mubr.bf16.gmra.mrb[0].mxu0 %v1117
      %v2297 = vpop.f32.mrb[0].mxu0
      %v2298 = vadd.f32 0.0, %v2297
      %v2299 = vpop.f32.mrb[0].mxu0
      %v2300 = vpop.f32.mrb[0].mxu0
      %v2301 = vadd.f32 0.0, %v2300
      %v2302 = vpop.f32.mrb[0].mxu0
      %2303 = vmatprep.mubr.bf16.mxu0 0
      %2304 = vmatmul.mubr.bf16.gmra.mrb[0].mxu0 %v1120
      %v2305 = vpop.f32.mrb[0].mxu0
      %v2306 = vadd.f32 0.0, %v2305
      %v2307 = vpop.f32.mrb[0].mxu0
      %v2308 = vpop.f32.mrb[0].mxu0
      %v2309 = vadd.f32 0.0, %v2308
      %v2310 = vpop.f32.mrb[0].mxu0
      %2311 = vmatprep.mubr.bf16.mxu0 0
      %2312 = vmatmul.mubr.bf16.gmra.mrb[0].mxu0 %v1123
      %v2313 = vpop.f32.mrb[0].mxu0
      %v2314 = vadd.f32 0.0, %v2313
      %v2315 = vpop.f32.mrb[0].mxu0
      %v2316 = vpop.f32.mrb[0].mxu0
      %v2317 = vadd.f32 0.0, %v2316
      %v2318 = vpop.f32.mrb[0].mxu0
      %2319 = vmatprep.mubr.bf16.mxu0 0
      %2320 = vmatmul.mubr.bf16.gmra.mrb[0].mxu0 %v1126
      %v2321 = vpop.f32.mrb[0].mxu0
      %v2322 = vadd.f32 0.0, %v2321
      %v2323 = vpop.f32.mrb[0].mxu0
      %v2324 = vpop.f32.mrb[0].mxu0
      %v2325 = vadd.f32 0.0, %v2324
      %v2326 = vpop.f32.mrb[0].mxu0
      %2327 = vmatprep.mubr.bf16.mxu0 0
      %2328 = vmatmul.mubr.bf16.gmra.mrb[0].mxu0 %v1129
      %v2329 = vpop.f32.mrb[0].mxu0
      %v2330 = vadd.f32 0.0, %v2329
      %v2331 = vpop.f32.mrb[0].mxu0
      %v2332 = vpop.f32.mrb[0].mxu0
      %v2333 = vadd.f32 0.0, %v2332
      %v2334 = vpop.f32.mrb[0].mxu0
      %2335 = vmatprep.mubr.bf16.mxu0 0
      %2336 = vmatmul.mubr.bf16.gmra.mrb[0].mxu0 %v2178
      %v2337 = vpop.f32.mrb[0].mxu0
      %v2338 = vadd.f32 0.0, %v2337
      %v2339 = vpop.f32.mrb[0].mxu0
      %v2340 = vpop.f32.mrb[0].mxu0
      %v2341 = vadd.f32 0.0, %v2340
      %v2342 = vpop.f32.mrb[0].mxu0
      %2343 = vdwg.mxu0
      %v2344 = vadd.f32 %v2118, %v2218
      %v2345 = vadd.f32 %v2119, %v2221
      %v2346 = vadd.f32 %v2120, %v2226
      %v2347 = vadd.f32 %v2121, %v2229
      %v2348 = vadd.f32 %v2122, %v2234
      %v2349 = vadd.f32 %v2123, %v2237
      %v2350 = vadd.f32 %v2124, %v2242
      %v2351 = vadd.f32 %v2125, %v2245
      %v2352 = vadd.f32 %v2126, %v2250
      %v2353 = vadd.f32 %v2127, %v2253
      %v2354 = vadd.f32 %v2128, %v2258
      %v2355 = vadd.f32 %v2129, %v2261
      %v2356 = vadd.f32 %v2130, %v2266
      %v2357 = vadd.f32 %v2131, %v2269
      %v2358 = vadd.f32 %v2132, %v2274
      %v2359 = vadd.f32 %v2133, %v2277
      %v2360 = vadd.f32 %v2134, %v2282
      %v2361 = vadd.f32 %v2135, %v2285
      %v2362 = vadd.f32 %v2136, %v2290
      %v2363 = vadd.f32 %v2137, %v2293
      %v2364 = vadd.f32 %v2138, %v2298
      %v2365 = vadd.f32 %v2139, %v2301
      %v2366 = vadd.f32 %v2140, %v2306
      %v2367 = vadd.f32 %v2141, %v2309
      %v2368 = vadd.f32 %v2142, %v2314
      %v2369 = vadd.f32 %v2143, %v2317
      %v2370 = vadd.f32 %v2144, %v2322
      %v2371 = vadd.f32 %v2145, %v2325
      %v2372 = vadd.f32 %v2146, %v2330
      %v2373 = vadd.f32 %v2147, %v2333
      %v2374 = vadd.f32 %v2148, %v2338
      %v2375 = vadd.f32 %v2149, %v2341
      %2376 = vst [vmem:[%s218] sm:$0xff] %v2344
      %2377 = vst [vmem:[%s218 + $0x8] sm:$0xff] %v2345
      %2378 = vst [vmem:[%s218 + $0x10] sm:$0xff] %v2346
      %2379 = vst [vmem:[%s218 + $0x18] sm:$0xff] %v2347
      %2380 = vst [vmem:[%s218 + $0x20] sm:$0xff] %v2348
      %2381 = vst [vmem:[%s218 + $0x28] sm:$0xff] %v2349
      %2382 = vst [vmem:[%s218 + $0x30] sm:$0xff] %v2350
      %2383 = vst [vmem:[%s218 + $0x38] sm:$0xff] %v2351
      %2384 = vst [vmem:[%s218 + $0x40] sm:$0xff] %v2352
      %2385 = vst [vmem:[%s218 + $0x48] sm:$0xff] %v2353
      %2386 = vst [vmem:[%s218 + $0x50] sm:$0xff] %v2354
      %2387 = vst [vmem:[%s218 + $0x58] sm:$0xff] %v2355
      %2388 = vst [vmem:[%s218 + $0x60] sm:$0xff] %v2356
      %2389 = vst [vmem:[%s218 + $0x68] sm:$0xff] %v2357
      %2390 = vst [vmem:[%s218 + $0x70] sm:$0xff] %v2358
      %2391 = vst [vmem:[%s218 + $0x78] sm:$0xff] %v2359
      %2392 = vst [vmem:[%s218 + $0x80] sm:$0xff] %v2360
      %2393 = vst [vmem:[%s218 + $0x88] sm:$0xff] %v2361
      %2394 = vst [vmem:[%s218 + $0x90] sm:$0xff] %v2362
      %2395 = vst [vmem:[%s218 + $0x98] sm:$0xff] %v2363
      %2396 = vst [vmem:[%s218 + $0xa0] sm:$0xff] %v2364
      %2397 = vst [vmem:[%s218 + $0xa8] sm:$0xff] %v2365
      %2398 = vst [vmem:[%s218 + $0xb0] sm:$0xff] %v2366
      %2399 = vst [vmem:[%s218 + $0xb8] sm:$0xff] %v2367
      %2400 = vst [vmem:[%s218 + $0xc0] sm:$0xff] %v2368
      %2401 = vst [vmem:[%s218 + $0xc8] sm:$0xff] %v2369
      %2402 = vst [vmem:[%s218 + $0xd0] sm:$0xff] %v2370
      %2403 = vst [vmem:[%s218 + $0xd8] sm:$0xff] %v2371
      %2404 = vst [vmem:[%s218 + $0xe0] sm:$0xff] %v2372
      %2405 = vst [vmem:[%s218 + $0xe8] sm:$0xff] %v2373
      %2406 = vst [vmem:[%s218 + $0xf0] sm:$0xff] %v2374
      %2407 = vst [vmem:[%s218 + $0xf8] sm:$0xff] %v2375
      %v2408 = vld [vmem:[%s218] sm:$0xff]
      %v2409 = vld [vmem:[%s218 + $0x8] sm:$0xff]
      %v2410 = vld [vmem:[%s218 + $0x10] sm:$0xff]
      %v2411 = vld [vmem:[%s218 + $0x18] sm:$0xff]
      %v2412 = vld [vmem:[%s218 + $0x20] sm:$0xff]
      %v2413 = vld [vmem:[%s218 + $0x28] sm:$0xff]
      %v2414 = vld [vmem:[%s218 + $0x30] sm:$0xff]
      %v2415 = vld [vmem:[%s218 + $0x38] sm:$0xff]
      %v2416 = vld [vmem:[%s218 + $0x40] sm:$0xff]
      %v2417 = vld [vmem:[%s218 + $0x48] sm:$0xff]
      %v2418 = vld [vmem:[%s218 + $0x50] sm:$0xff]
      %v2419 = vld [vmem:[%s218 + $0x58] sm:$0xff]
      %v2420 = vld [vmem:[%s218 + $0x60] sm:$0xff]
      %v2421 = vld [vmem:[%s218 + $0x68] sm:$0xff]
      %v2422 = vld [vmem:[%s218 + $0x70] sm:$0xff]
      %v2423 = vld [vmem:[%s218 + $0x78] sm:$0xff]
      %v2424 = vld [vmem:[%s218 + $0x80] sm:$0xff]
      %v2425 = vld [vmem:[%s218 + $0x88] sm:$0xff]
      %v2426 = vld [vmem:[%s218 + $0x90] sm:$0xff]
      %v2427 = vld [vmem:[%s218 + $0x98] sm:$0xff]
      %v2428 = vld [vmem:[%s218 + $0xa0] sm:$0xff]
      %v2429 = vld [vmem:[%s218 + $0xa8] sm:$0xff]
      %v2430 = vld [vmem:[%s218 + $0xb0] sm:$0xff]
      %v2431 = vld [vmem:[%s218 + $0xb8] sm:$0xff]
      %v2432 = vld [vmem:[%s218 + $0xc0] sm:$0xff]
      %v2433 = vld [vmem:[%s218 + $0xc8] sm:$0xff]
      %v2434 = vld [vmem:[%s218 + $0xd0] sm:$0xff]
      %v2435 = vld [vmem:[%s218 + $0xd8] sm:$0xff]
      %v2436 = vld [vmem:[%s218 + $0xe0] sm:$0xff]
      %v2437 = vld [vmem:[%s218 + $0xe8] sm:$0xff]
      %v2438 = vld [vmem:[%s218 + $0xf0] sm:$0xff]
      %v2439 = vld [vmem:[%s218 + $0xf8] sm:$0xff]
      %v2441 = vrot.slane %v275, 5
      %v2442 = vrot.slane %v2441, 4
      %v2443 = vrot.slane %v276, 5
      %v2444 = vsel %vm1409, %v2442, %v2443
      %v2445 = vrot.slane %v2443, 4
      %v2446 = vrot.slane %v277, 5
      %v2447 = vsel %vm1409, %v2445, %v2446
      %v2448 = vunpack.c.l.b16 %v2444
      %v2449 = vunpack.c.l.b16 %v2447
      %v2450 = vpack.c.b16 %v2449, %v2448
      %v2452 = vunpack.c.l.b16 %v283
      %v2453 = vpack.c.b16 %v2452, %v2452
      %v2454 = vrot.slane %v2453, 2
      %v2456 = vsel %vm366, %v2450, 0
      %v2459 = vsel %vm415, %v2454, 0
      %2461 = vmatprep.subr.bf16.mxu0 0
      %2462 = vmatpush1.bf16.msra.mxu0 %v2459
      %2463 = vmatprep.subr.bf16.mxu0 0
      %2464 = vmatpush1.bf16.msra.mxu0 0
      %2465 = vmatprep.subr.bf16.mxu0 0
      %2466 = vmatpush1.bf16.msra.mxu0 0
      %2467 = vmatprep.subr.bf16.mxu0 0
      %2468 = vmatpush1.bf16.msra.mxu0 0
      %2469 = vmatprep.subr.bf16.mxu0 0
      %2470 = vmatpush1.bf16.msra.mxu0 0
      %2471 = vmatprep.subr.bf16.mxu0 0
      %2472 = vmatpush1.bf16.msra.mxu0 0
      %2473 = vmatprep.subr.bf16.mxu0 0
      %2474 = vmatpush1.bf16.msra.mxu0 0
      %2475 = vmatprep.subr.bf16.mxu0 0
      %2476 = vmatpush1.bf16.msra.mxu0 0
      %2477 = vmatprep.subr.bf16.mxu0 0
      %2478 = vmatpush1.bf16.msra.mxu0 0
      %2479 = vmatprep.subr.bf16.mxu0 0
      %2480 = vmatpush1.bf16.msra.mxu0 0
      %2481 = vmatprep.subr.bf16.mxu0 0
      %2482 = vmatpush1.bf16.msra.mxu0 0
      %2483 = vmatprep.subr.bf16.mxu0 0
      %2484 = vmatpush1.bf16.msra.mxu0 0
      %2485 = vmatprep.subr.bf16.mxu0 0
      %2486 = vmatpush1.bf16.msra.mxu0 0
      %2487 = vmatprep.subr.bf16.mxu0 0
      %2488 = vmatpush1.bf16.msra.mxu0 0
      %2489 = vmatprep.subr.bf16.mxu0 0
      %2490 = vmatpush1.bf16.msra.mxu0 0
      %2491 = vmatprep.subr.bf16.mxu0 0
      %2492 = vmatpush1.bf16.msra.mxu0 0
      %2493 = vmatprep.mubr.bf16.mxu0 0
      %2494 = vmatmul.mubr.bf16.gmra.mrb[0].mxu0 %v1574
      %v2495 = vpop.f32.mrb[0].mxu0
      %v2496 = vadd.f32 0.0, %v2495
      %v2497 = vpop.f32.mrb[0].mxu0
      %v2498 = vpop.f32.mrb[0].mxu0
      %v2499 = vadd.f32 0.0, %v2498
      %v2500 = vpop.f32.mrb[0].mxu0
      %2501 = vmatprep.mubr.bf16.mxu0 0
      %2502 = vmatmul.mubr.bf16.gmra.mrb[0].mxu0 %v1577
      %v2503 = vpop.f32.mrb[0].mxu0
      %v2504 = vadd.f32 0.0, %v2503
      %v2505 = vpop.f32.mrb[0].mxu0
      %v2506 = vpop.f32.mrb[0].mxu0
      %v2507 = vadd.f32 0.0, %v2506
      %v2508 = vpop.f32.mrb[0].mxu0
      %2509 = vmatprep.mubr.bf16.mxu0 0
      %2510 = vmatmul.mubr.bf16.gmra.mrb[0].mxu0 %v1580
      %v2511 = vpop.f32.mrb[0].mxu0
      %v2512 = vadd.f32 0.0, %v2511
      %v2513 = vpop.f32.mrb[0].mxu0
      %v2514 = vpop.f32.mrb[0].mxu0
      %v2515 = vadd.f32 0.0, %v2514
      %v2516 = vpop.f32.mrb[0].mxu0
      %2517 = vmatprep.mubr.bf16.mxu0 0
      %2518 = vmatmul.mubr.bf16.gmra.mrb[0].mxu0 %v1583
      %v2519 = vpop.f32.mrb[0].mxu0
      %v2520 = vadd.f32 0.0, %v2519
      %v2521 = vpop.f32.mrb[0].mxu0
      %v2522 = vpop.f32.mrb[0].mxu0
      %v2523 = vadd.f32 0.0, %v2522
      %v2524 = vpop.f32.mrb[0].mxu0
      %2525 = vmatprep.mubr.bf16.mxu0 0
      %2526 = vmatmul.mubr.bf16.gmra.mrb[0].mxu0 %v1586
      %v2527 = vpop.f32.mrb[0].mxu0
      %v2528 = vadd.f32 0.0, %v2527
      %v2529 = vpop.f32.mrb[0].mxu0
      %v2530 = vpop.f32.mrb[0].mxu0
      %v2531 = vadd.f32 0.0, %v2530
      %v2532 = vpop.f32.mrb[0].mxu0
      %2533 = vmatprep.mubr.bf16.mxu0 0
      %2534 = vmatmul.mubr.bf16.gmra.mrb[0].mxu0 %v1589
      %v2535 = vpop.f32.mrb[0].mxu0
      %v2536 = vadd.f32 0.0, %v2535
      %v2537 = vpop.f32.mrb[0].mxu0
      %v2538 = vpop.f32.mrb[0].mxu0
      %v2539 = vadd.f32 0.0, %v2538
      %v2540 = vpop.f32.mrb[0].mxu0
      %2541 = vmatprep.mubr.bf16.mxu0 0
      %2542 = vmatmul.mubr.bf16.gmra.mrb[0].mxu0 %v1592
      %v2543 = vpop.f32.mrb[0].mxu0
      %v2544 = vadd.f32 0.0, %v2543
      %v2545 = vpop.f32.mrb[0].mxu0
      %v2546 = vpop.f32.mrb[0].mxu0
      %v2547 = vadd.f32 0.0, %v2546
      %v2548 = vpop.f32.mrb[0].mxu0
      %2549 = vmatprep.mubr.bf16.mxu0 0
      %2550 = vmatmul.mubr.bf16.gmra.mrb[0].mxu0 %v1595
      %v2551 = vpop.f32.mrb[0].mxu0
      %v2552 = vadd.f32 0.0, %v2551
      %v2553 = vpop.f32.mrb[0].mxu0
      %v2554 = vpop.f32.mrb[0].mxu0
      %v2555 = vadd.f32 0.0, %v2554
      %v2556 = vpop.f32.mrb[0].mxu0
      %2557 = vmatprep.mubr.bf16.mxu0 0
      %2558 = vmatmul.mubr.bf16.gmra.mrb[0].mxu0 %v1598
      %v2559 = vpop.f32.mrb[0].mxu0
      %v2560 = vadd.f32 0.0, %v2559
      %v2561 = vpop.f32.mrb[0].mxu0
      %v2562 = vpop.f32.mrb[0].mxu0
      %v2563 = vadd.f32 0.0, %v2562
      %v2564 = vpop.f32.mrb[0].mxu0
      %2565 = vmatprep.mubr.bf16.mxu0 0
      %2566 = vmatmul.mubr.bf16.gmra.mrb[0].mxu0 %v1601
      %v2567 = vpop.f32.mrb[0].mxu0
      %v2568 = vadd.f32 0.0, %v2567
      %v2569 = vpop.f32.mrb[0].mxu0
      %v2570 = vpop.f32.mrb[0].mxu0
      %v2571 = vadd.f32 0.0, %v2570
      %v2572 = vpop.f32.mrb[0].mxu0
      %2573 = vmatprep.mubr.bf16.mxu0 0
      %2574 = vmatmul.mubr.bf16.gmra.mrb[0].mxu0 %v1604
      %v2575 = vpop.f32.mrb[0].mxu0
      %v2576 = vadd.f32 0.0, %v2575
      %v2577 = vpop.f32.mrb[0].mxu0
      %v2578 = vpop.f32.mrb[0].mxu0
      %v2579 = vadd.f32 0.0, %v2578
      %v2580 = vpop.f32.mrb[0].mxu0
      %2581 = vmatprep.mubr.bf16.mxu0 0
      %2582 = vmatmul.mubr.bf16.gmra.mrb[0].mxu0 %v1607
      %v2583 = vpop.f32.mrb[0].mxu0
      %v2584 = vadd.f32 0.0, %v2583
      %v2585 = vpop.f32.mrb[0].mxu0
      %v2586 = vpop.f32.mrb[0].mxu0
      %v2587 = vadd.f32 0.0, %v2586
      %v2588 = vpop.f32.mrb[0].mxu0
      %2589 = vmatprep.mubr.bf16.mxu0 0
      %2590 = vmatmul.mubr.bf16.gmra.mrb[0].mxu0 %v1610
      %v2591 = vpop.f32.mrb[0].mxu0
      %v2592 = vadd.f32 0.0, %v2591
      %v2593 = vpop.f32.mrb[0].mxu0
      %v2594 = vpop.f32.mrb[0].mxu0
      %v2595 = vadd.f32 0.0, %v2594
      %v2596 = vpop.f32.mrb[0].mxu0
      %2597 = vmatprep.mubr.bf16.mxu0 0
      %2598 = vmatmul.mubr.bf16.gmra.mrb[0].mxu0 %v1613
      %v2599 = vpop.f32.mrb[0].mxu0
      %v2600 = vadd.f32 0.0, %v2599
      %v2601 = vpop.f32.mrb[0].mxu0
      %v2602 = vpop.f32.mrb[0].mxu0
      %v2603 = vadd.f32 0.0, %v2602
      %v2604 = vpop.f32.mrb[0].mxu0
      %2605 = vmatprep.mubr.bf16.mxu0 0
      %2606 = vmatmul.mubr.bf16.gmra.mrb[0].mxu0 %v1616
      %v2607 = vpop.f32.mrb[0].mxu0
      %v2608 = vadd.f32 0.0, %v2607
      %v2609 = vpop.f32.mrb[0].mxu0
      %v2610 = vpop.f32.mrb[0].mxu0
      %v2611 = vadd.f32 0.0, %v2610
      %v2612 = vpop.f32.mrb[0].mxu0
      %2613 = vmatprep.mubr.bf16.mxu0 0
      %2614 = vmatmul.mubr.bf16.gmra.mrb[0].mxu0 %v2456
      %v2615 = vpop.f32.mrb[0].mxu0
      %v2616 = vadd.f32 0.0, %v2615
      %v2617 = vpop.f32.mrb[0].mxu0
      %v2618 = vpop.f32.mrb[0].mxu0
      %v2619 = vadd.f32 0.0, %v2618
      %v2620 = vpop.f32.mrb[0].mxu0
      %2621 = vdwg.mxu0
      %v2622 = vadd.f32 %v2408, %v2496
      %v2623 = vadd.f32 %v2409, %v2499
      %v2624 = vadd.f32 %v2410, %v2504
      %v2625 = vadd.f32 %v2411, %v2507
      %v2626 = vadd.f32 %v2412, %v2512
      %v2627 = vadd.f32 %v2413, %v2515
      %v2628 = vadd.f32 %v2414, %v2520
      %v2629 = vadd.f32 %v2415, %v2523
      %v2630 = vadd.f32 %v2416, %v2528
      %v2631 = vadd.f32 %v2417, %v2531
      %v2632 = vadd.f32 %v2418, %v2536
      %v2633 = vadd.f32 %v2419, %v2539
      %v2634 = vadd.f32 %v2420, %v2544
      %v2635 = vadd.f32 %v2421, %v2547
      %v2636 = vadd.f32 %v2422, %v2552
      %v2637 = vadd.f32 %v2423, %v2555
      %v2638 = vadd.f32 %v2424, %v2560
      %v2639 = vadd.f32 %v2425, %v2563
      %v2640 = vadd.f32 %v2426, %v2568
      %v2641 = vadd.f32 %v2427, %v2571
      %v2642 = vadd.f32 %v2428, %v2576
      %v2643 = vadd.f32 %v2429, %v2579
      %v2644 = vadd.f32 %v2430, %v2584
      %v2645 = vadd.f32 %v2431, %v2587
      %v2646 = vadd.f32 %v2432, %v2592
      %v2647 = vadd.f32 %v2433, %v2595
      %v2648 = vadd.f32 %v2434, %v2600
      %v2649 = vadd.f32 %v2435, %v2603
      %v2650 = vadd.f32 %v2436, %v2608
      %v2651 = vadd.f32 %v2437, %v2611
      %v2652 = vadd.f32 %v2438, %v2616
      %v2653 = vadd.f32 %v2439, %v2619
      %2654 = vst [vmem:[%s218] sm:$0xff] %v2622
      %2655 = vst [vmem:[%s218 + $0x8] sm:$0xff] %v2623
      %2656 = vst [vmem:[%s218 + $0x10] sm:$0xff] %v2624
      %2657 = vst [vmem:[%s218 + $0x18] sm:$0xff] %v2625
      %2658 = vst [vmem:[%s218 + $0x20] sm:$0xff] %v2626
      %2659 = vst [vmem:[%s218 + $0x28] sm:$0xff] %v2627
      %2660 = vst [vmem:[%s218 + $0x30] sm:$0xff] %v2628
      %2661 = vst [vmem:[%s218 + $0x38] sm:$0xff] %v2629
      %2662 = vst [vmem:[%s218 + $0x40] sm:$0xff] %v2630
      %2663 = vst [vmem:[%s218 + $0x48] sm:$0xff] %v2631
      %2664 = vst [vmem:[%s218 + $0x50] sm:$0xff] %v2632
      %2665 = vst [vmem:[%s218 + $0x58] sm:$0xff] %v2633
      %2666 = vst [vmem:[%s218 + $0x60] sm:$0xff] %v2634
      %2667 = vst [vmem:[%s218 + $0x68] sm:$0xff] %v2635
      %2668 = vst [vmem:[%s218 + $0x70] sm:$0xff] %v2636
      %2669 = vst [vmem:[%s218 + $0x78] sm:$0xff] %v2637
      %2670 = vst [vmem:[%s218 + $0x80] sm:$0xff] %v2638
      %2671 = vst [vmem:[%s218 + $0x88] sm:$0xff] %v2639
      %2672 = vst [vmem:[%s218 + $0x90] sm:$0xff] %v2640
      %2673 = vst [vmem:[%s218 + $0x98] sm:$0xff] %v2641
      %2674 = vst [vmem:[%s218 + $0xa0] sm:$0xff] %v2642
      %2675 = vst [vmem:[%s218 + $0xa8] sm:$0xff] %v2643
      %2676 = vst [vmem:[%s218 + $0xb0] sm:$0xff] %v2644
      %2677 = vst [vmem:[%s218 + $0xb8] sm:$0xff] %v2645
      %2678 = vst [vmem:[%s218 + $0xc0] sm:$0xff] %v2646
      %2679 = vst [vmem:[%s218 + $0xc8] sm:$0xff] %v2647
      %2680 = vst [vmem:[%s218 + $0xd0] sm:$0xff] %v2648
      %2681 = vst [vmem:[%s218 + $0xd8] sm:$0xff] %v2649
      %2682 = vst [vmem:[%s218 + $0xe0] sm:$0xff] %v2650
      %2683 = vst [vmem:[%s218 + $0xe8] sm:$0xff] %v2651
      %2684 = vst [vmem:[%s218 + $0xf0] sm:$0xff] %v2652
      %2685 = vst [vmem:[%s218 + $0xf8] sm:$0xff] %v2653
      %v2686 = vld [vmem:[%s218] sm:$0xff]
      %v2687 = vld [vmem:[%s218 + $0x8] sm:$0xff]
      %v2688 = vld [vmem:[%s218 + $0x10] sm:$0xff]
      %v2689 = vld [vmem:[%s218 + $0x18] sm:$0xff]
      %v2690 = vld [vmem:[%s218 + $0x20] sm:$0xff]
      %v2691 = vld [vmem:[%s218 + $0x28] sm:$0xff]
      %v2692 = vld [vmem:[%s218 + $0x30] sm:$0xff]
      %v2693 = vld [vmem:[%s218 + $0x38] sm:$0xff]
      %v2694 = vld [vmem:[%s218 + $0x40] sm:$0xff]
      %v2695 = vld [vmem:[%s218 + $0x48] sm:$0xff]
      %v2696 = vld [vmem:[%s218 + $0x50] sm:$0xff]
      %v2697 = vld [vmem:[%s218 + $0x58] sm:$0xff]
      %v2698 = vld [vmem:[%s218 + $0x60] sm:$0xff]
      %v2699 = vld [vmem:[%s218 + $0x68] sm:$0xff]
      %v2700 = vld [vmem:[%s218 + $0x70] sm:$0xff]
      %v2701 = vld [vmem:[%s218 + $0x78] sm:$0xff]
      %v2702 = vld [vmem:[%s218 + $0x80] sm:$0xff]
      %v2703 = vld [vmem:[%s218 + $0x88] sm:$0xff]
      %v2704 = vld [vmem:[%s218 + $0x90] sm:$0xff]
      %v2705 = vld [vmem:[%s218 + $0x98] sm:$0xff]
      %v2706 = vld [vmem:[%s218 + $0xa0] sm:$0xff]
      %v2707 = vld [vmem:[%s218 + $0xa8] sm:$0xff]
      %v2708 = vld [vmem:[%s218 + $0xb0] sm:$0xff]
      %v2709 = vld [vmem:[%s218 + $0xb8] sm:$0xff]
      %v2710 = vld [vmem:[%s218 + $0xc0] sm:$0xff]
      %v2711 = vld [vmem:[%s218 + $0xc8] sm:$0xff]
      %v2712 = vld [vmem:[%s218 + $0xd0] sm:$0xff]
      %v2713 = vld [vmem:[%s218 + $0xd8] sm:$0xff]
      %v2714 = vld [vmem:[%s218 + $0xe0] sm:$0xff]
      %v2715 = vld [vmem:[%s218 + $0xe8] sm:$0xff]
      %v2716 = vld [vmem:[%s218 + $0xf0] sm:$0xff]
      %v2717 = vld [vmem:[%s218 + $0xf8] sm:$0xff]
      %v2720 = vunpack.c.l.b16 %v278
      %v2721 = vunpack.c.l.b16 %v279
      %v2722 = vpack.c.b16 %v2721, %v2720
      %v2724 = vsel %vm366, %v2722, 0
      %v2727 = vsel %vm415, %v284, 0
      %2729 = vmatprep.subr.bf16.mxu0 0
      %2730 = vmatpush1.bf16.msra.mxu0 %v2727
      %2731 = vmatprep.subr.bf16.mxu0 0
      %2732 = vmatpush1.bf16.msra.mxu0 0
      %2733 = vmatprep.subr.bf16.mxu0 0
      %2734 = vmatpush1.bf16.msra.mxu0 0
      %2735 = vmatprep.subr.bf16.mxu0 0
      %2736 = vmatpush1.bf16.msra.mxu0 0
      %2737 = vmatprep.subr.bf16.mxu0 0
      %2738 = vmatpush1.bf16.msra.mxu0 0
      %2739 = vmatprep.subr.bf16.mxu0 0
      %2740 = vmatpush1.bf16.msra.mxu0 0
      %2741 = vmatprep.subr.bf16.mxu0 0
      %2742 = vmatpush1.bf16.msra.mxu0 0
      %2743 = vmatprep.subr.bf16.mxu0 0
      %2744 = vmatpush1.bf16.msra.mxu0 0
      %2745 = vmatprep.subr.bf16.mxu0 0
      %2746 = vmatpush1.bf16.msra.mxu0 0
      %2747 = vmatprep.subr.bf16.mxu0 0
      %2748 = vmatpush1.bf16.msra.mxu0 0
      %2749 = vmatprep.subr.bf16.mxu0 0
      %2750 = vmatpush1.bf16.msra.mxu0 0
      %2751 = vmatprep.subr.bf16.mxu0 0
      %2752 = vmatpush1.bf16.msra.mxu0 0
      %2753 = vmatprep.subr.bf16.mxu0 0
      %2754 = vmatpush1.bf16.msra.mxu0 0
      %2755 = vmatprep.subr.bf16.mxu0 0
      %2756 = vmatpush1.bf16.msra.mxu0 0
      %2757 = vmatprep.subr.bf16.mxu0 0
      %2758 = vmatpush1.bf16.msra.mxu0 0
      %2759 = vmatprep.subr.bf16.mxu0 0
      %2760 = vmatpush1.bf16.msra.mxu0 0
      %2761 = vmatprep.mubr.bf16.mxu0 0
      %2762 = vmatmul.mubr.bf16.gmra.mrb[0].mxu0 %v374
      %v2763 = vpop.f32.mrb[0].mxu0
      %v2764 = vadd.f32 0.0, %v2763
      %v2765 = vpop.f32.mrb[0].mxu0
      %v2766 = vpop.f32.mrb[0].mxu0
      %v2767 = vadd.f32 0.0, %v2766
      %v2768 = vpop.f32.mrb[0].mxu0
      %2769 = vmatprep.mubr.bf16.mxu0 0
      %2770 = vmatmul.mubr.bf16.gmra.mrb[0].mxu0 %v377
      %v2771 = vpop.f32.mrb[0].mxu0
      %v2772 = vadd.f32 0.0, %v2771
      %v2773 = vpop.f32.mrb[0].mxu0
      %v2774 = vpop.f32.mrb[0].mxu0
      %v2775 = vadd.f32 0.0, %v2774
      %v2776 = vpop.f32.mrb[0].mxu0
      %2777 = vmatprep.mubr.bf16.mxu0 0
      %2778 = vmatmul.mubr.bf16.gmra.mrb[0].mxu0 %v380
      %v2779 = vpop.f32.mrb[0].mxu0
      %v2780 = vadd.f32 0.0, %v2779
      %v2781 = vpop.f32.mrb[0].mxu0
      %v2782 = vpop.f32.mrb[0].mxu0
      %v2783 = vadd.f32 0.0, %v2782
      %v2784 = vpop.f32.mrb[0].mxu0
      %2785 = vmatprep.mubr.bf16.mxu0 0
      %2786 = vmatmul.mubr.bf16.gmra.mrb[0].mxu0 %v383
      %v2787 = vpop.f32.mrb[0].mxu0
      %v2788 = vadd.f32 0.0, %v2787
      %v2789 = vpop.f32.mrb[0].mxu0
      %v2790 = vpop.f32.mrb[0].mxu0
      %v2791 = vadd.f32 0.0, %v2790
      %v2792 = vpop.f32.mrb[0].mxu0
      %2793 = vmatprep.mubr.bf16.mxu0 0
      %2794 = vmatmul.mubr.bf16.gmra.mrb[0].mxu0 %v386
      %v2795 = vpop.f32.mrb[0].mxu0
      %v2796 = vadd.f32 0.0, %v2795
      %v2797 = vpop.f32.mrb[0].mxu0
      %v2798 = vpop.f32.mrb[0].mxu0
      %v2799 = vadd.f32 0.0, %v2798
      %v2800 = vpop.f32.mrb[0].mxu0
      %2801 = vmatprep.mubr.bf16.mxu0 0
      %2802 = vmatmul.mubr.bf16.gmra.mrb[0].mxu0 %v389
      %v2803 = vpop.f32.mrb[0].mxu0
      %v2804 = vadd.f32 0.0, %v2803
      %v2805 = vpop.f32.mrb[0].mxu0
      %v2806 = vpop.f32.mrb[0].mxu0
      %v2807 = vadd.f32 0.0, %v2806
      %v2808 = vpop.f32.mrb[0].mxu0
      %2809 = vmatprep.mubr.bf16.mxu0 0
      %2810 = vmatmul.mubr.bf16.gmra.mrb[0].mxu0 %v392
      %v2811 = vpop.f32.mrb[0].mxu0
      %v2812 = vadd.f32 0.0, %v2811
      %v2813 = vpop.f32.mrb[0].mxu0
      %v2814 = vpop.f32.mrb[0].mxu0
      %v2815 = vadd.f32 0.0, %v2814
      %v2816 = vpop.f32.mrb[0].mxu0
      %2817 = vmatprep.mubr.bf16.mxu0 0
      %2818 = vmatmul.mubr.bf16.gmra.mrb[0].mxu0 %v395
      %v2819 = vpop.f32.mrb[0].mxu0
      %v2820 = vadd.f32 0.0, %v2819
      %v2821 = vpop.f32.mrb[0].mxu0
      %v2822 = vpop.f32.mrb[0].mxu0
      %v2823 = vadd.f32 0.0, %v2822
      %v2824 = vpop.f32.mrb[0].mxu0
      %2825 = vmatprep.mubr.bf16.mxu0 0
      %2826 = vmatmul.mubr.bf16.gmra.mrb[0].mxu0 %v398
      %v2827 = vpop.f32.mrb[0].mxu0
      %v2828 = vadd.f32 0.0, %v2827
      %v2829 = vpop.f32.mrb[0].mxu0
      %v2830 = vpop.f32.mrb[0].mxu0
      %v2831 = vadd.f32 0.0, %v2830
      %v2832 = vpop.f32.mrb[0].mxu0
      %2833 = vmatprep.mubr.bf16.mxu0 0
      %2834 = vmatmul.mubr.bf16.gmra.mrb[0].mxu0 %v401
      %v2835 = vpop.f32.mrb[0].mxu0
      %v2836 = vadd.f32 0.0, %v2835
      %v2837 = vpop.f32.mrb[0].mxu0
      %v2838 = vpop.f32.mrb[0].mxu0
      %v2839 = vadd.f32 0.0, %v2838
      %v2840 = vpop.f32.mrb[0].mxu0
      %2841 = vmatprep.mubr.bf16.mxu0 0
      %2842 = vmatmul.mubr.bf16.gmra.mrb[0].mxu0 %v404
      %v2843 = vpop.f32.mrb[0].mxu0
      %v2844 = vadd.f32 0.0, %v2843
      %v2845 = vpop.f32.mrb[0].mxu0
      %v2846 = vpop.f32.mrb[0].mxu0
      %v2847 = vadd.f32 0.0, %v2846
      %v2848 = vpop.f32.mrb[0].mxu0
      %2849 = vmatprep.mubr.bf16.mxu0 0
      %2850 = vmatmul.mubr.bf16.gmra.mrb[0].mxu0 %v407
      %v2851 = vpop.f32.mrb[0].mxu0
      %v2852 = vadd.f32 0.0, %v2851
      %v2853 = vpop.f32.mrb[0].mxu0
      %v2854 = vpop.f32.mrb[0].mxu0
      %v2855 = vadd.f32 0.0, %v2854
      %v2856 = vpop.f32.mrb[0].mxu0
      %2857 = vmatprep.mubr.bf16.mxu0 0
      %2858 = vmatmul.mubr.bf16.gmra.mrb[0].mxu0 %v410
      %v2859 = vpop.f32.mrb[0].mxu0
      %v2860 = vadd.f32 0.0, %v2859
      %v2861 = vpop.f32.mrb[0].mxu0
      %v2862 = vpop.f32.mrb[0].mxu0
      %v2863 = vadd.f32 0.0, %v2862
      %v2864 = vpop.f32.mrb[0].mxu0
      %2865 = vmatprep.mubr.bf16.mxu0 0
      %2866 = vmatmul.mubr.bf16.gmra.mrb[0].mxu0 %v413
      %v2867 = vpop.f32.mrb[0].mxu0
      %v2868 = vadd.f32 0.0, %v2867
      %v2869 = vpop.f32.mrb[0].mxu0
      %v2870 = vpop.f32.mrb[0].mxu0
      %v2871 = vadd.f32 0.0, %v2870
      %v2872 = vpop.f32.mrb[0].mxu0
      %2873 = vmatprep.mubr.bf16.mxu0 0
      %2874 = vmatmul.mubr.bf16.gmra.mrb[0].mxu0 %v1888
      %v2875 = vpop.f32.mrb[0].mxu0
      %v2876 = vadd.f32 0.0, %v2875
      %v2877 = vpop.f32.mrb[0].mxu0
      %v2878 = vpop.f32.mrb[0].mxu0
      %v2879 = vadd.f32 0.0, %v2878
      %v2880 = vpop.f32.mrb[0].mxu0
      %2881 = vmatprep.mubr.bf16.mxu0 0
      %2882 = vmatmul.mubr.bf16.gmra.mrb[0].mxu0 %v2724
      %v2883 = vpop.f32.mrb[0].mxu0
      %v2884 = vadd.f32 0.0, %v2883
      %v2885 = vpop.f32.mrb[0].mxu0
      %v2886 = vpop.f32.mrb[0].mxu0
      %v2887 = vadd.f32 0.0, %v2886
      %v2888 = vpop.f32.mrb[0].mxu0
      %2889 = vdwg.mxu0
      %v2890 = vadd.f32 %v2686, %v2764
      %v2891 = vadd.f32 %v2687, %v2767
      %v2892 = vadd.f32 %v2688, %v2772
      %v2893 = vadd.f32 %v2689, %v2775
      %v2894 = vadd.f32 %v2690, %v2780
      %v2895 = vadd.f32 %v2691, %v2783
      %v2896 = vadd.f32 %v2692, %v2788
      %v2897 = vadd.f32 %v2693, %v2791
      %v2898 = vadd.f32 %v2694, %v2796
      %v2899 = vadd.f32 %v2695, %v2799
      %v2900 = vadd.f32 %v2696, %v2804
      %v2901 = vadd.f32 %v2697, %v2807
      %v2902 = vadd.f32 %v2698, %v2812
      %v2903 = vadd.f32 %v2699, %v2815
      %v2904 = vadd.f32 %v2700, %v2820
      %v2905 = vadd.f32 %v2701, %v2823
      %v2906 = vadd.f32 %v2702, %v2828
      %v2907 = vadd.f32 %v2703, %v2831
      %v2908 = vadd.f32 %v2704, %v2836
      %v2909 = vadd.f32 %v2705, %v2839
      %v2910 = vadd.f32 %v2706, %v2844
      %v2911 = vadd.f32 %v2707, %v2847
      %v2912 = vadd.f32 %v2708, %v2852
      %v2913 = vadd.f32 %v2709, %v2855
      %v2914 = vadd.f32 %v2710, %v2860
      %v2915 = vadd.f32 %v2711, %v2863
      %v2916 = vadd.f32 %v2712, %v2868
      %v2917 = vadd.f32 %v2713, %v2871
      %v2918 = vadd.f32 %v2714, %v2876
      %v2919 = vadd.f32 %v2715, %v2879
      %v2920 = vadd.f32 %v2716, %v2884
      %v2921 = vadd.f32 %v2717, %v2887
      %2922 = vst [vmem:[%s218] sm:$0xff] %v2890
      %2923 = vst [vmem:[%s218 + $0x8] sm:$0xff] %v2891
      %2924 = vst [vmem:[%s218 + $0x10] sm:$0xff] %v2892
      %2925 = vst [vmem:[%s218 + $0x18] sm:$0xff] %v2893
      %2926 = vst [vmem:[%s218 + $0x20] sm:$0xff] %v2894
      %2927 = vst [vmem:[%s218 + $0x28] sm:$0xff] %v2895
      %2928 = vst [vmem:[%s218 + $0x30] sm:$0xff] %v2896
      %2929 = vst [vmem:[%s218 + $0x38] sm:$0xff] %v2897
      %2930 = vst [vmem:[%s218 + $0x40] sm:$0xff] %v2898
      %2931 = vst [vmem:[%s218 + $0x48] sm:$0xff] %v2899
      %2932 = vst [vmem:[%s218 + $0x50] sm:$0xff] %v2900
      %2933 = vst [vmem:[%s218 + $0x58] sm:$0xff] %v2901
      %2934 = vst [vmem:[%s218 + $0x60] sm:$0xff] %v2902
      %2935 = vst [vmem:[%s218 + $0x68] sm:$0xff] %v2903
      %2936 = vst [vmem:[%s218 + $0x70] sm:$0xff] %v2904
      %2937 = vst [vmem:[%s218 + $0x78] sm:$0xff] %v2905
      %2938 = vst [vmem:[%s218 + $0x80] sm:$0xff] %v2906
      %2939 = vst [vmem:[%s218 + $0x88] sm:$0xff] %v2907
      %2940 = vst [vmem:[%s218 + $0x90] sm:$0xff] %v2908
      %2941 = vst [vmem:[%s218 + $0x98] sm:$0xff] %v2909
      %2942 = vst [vmem:[%s218 + $0xa0] sm:$0xff] %v2910
      %2943 = vst [vmem:[%s218 + $0xa8] sm:$0xff] %v2911
      %2944 = vst [vmem:[%s218 + $0xb0] sm:$0xff] %v2912
      %2945 = vst [vmem:[%s218 + $0xb8] sm:$0xff] %v2913
      %2946 = vst [vmem:[%s218 + $0xc0] sm:$0xff] %v2914
      %2947 = vst [vmem:[%s218 + $0xc8] sm:$0xff] %v2915
      %2948 = vst [vmem:[%s218 + $0xd0] sm:$0xff] %v2916
      %2949 = vst [vmem:[%s218 + $0xd8] sm:$0xff] %v2917
      %2950 = vst [vmem:[%s218 + $0xe0] sm:$0xff] %v2918
      %2951 = vst [vmem:[%s218 + $0xe8] sm:$0xff] %v2919
      %2952 = vst [vmem:[%s218 + $0xf0] sm:$0xff] %v2920
      %2953 = vst [vmem:[%s218 + $0xf8] sm:$0xff] %v2921
      %v2954 = vld [vmem:[%s218] sm:$0xff]
      %v2955 = vld [vmem:[%s218 + $0x8] sm:$0xff]
      %v2956 = vld [vmem:[%s218 + $0x10] sm:$0xff]
      %v2957 = vld [vmem:[%s218 + $0x18] sm:$0xff]
      %v2958 = vld [vmem:[%s218 + $0x20] sm:$0xff]
      %v2959 = vld [vmem:[%s218 + $0x28] sm:$0xff]
      %v2960 = vld [vmem:[%s218 + $0x30] sm:$0xff]
      %v2961 = vld [vmem:[%s218 + $0x38] sm:$0xff]
      %v2962 = vld [vmem:[%s218 + $0x40] sm:$0xff]
      %v2963 = vld [vmem:[%s218 + $0x48] sm:$0xff]
      %v2964 = vld [vmem:[%s218 + $0x50] sm:$0xff]
      %v2965 = vld [vmem:[%s218 + $0x58] sm:$0xff]
      %v2966 = vld [vmem:[%s218 + $0x60] sm:$0xff]
      %v2967 = vld [vmem:[%s218 + $0x68] sm:$0xff]
      %v2968 = vld [vmem:[%s218 + $0x70] sm:$0xff]
      %v2969 = vld [vmem:[%s218 + $0x78] sm:$0xff]
      %v2970 = vld [vmem:[%s218 + $0x80] sm:$0xff]
      %v2971 = vld [vmem:[%s218 + $0x88] sm:$0xff]
      %v2972 = vld [vmem:[%s218 + $0x90] sm:$0xff]
      %v2973 = vld [vmem:[%s218 + $0x98] sm:$0xff]
      %v2974 = vld [vmem:[%s218 + $0xa0] sm:$0xff]
      %v2975 = vld [vmem:[%s218 + $0xa8] sm:$0xff]
      %v2976 = vld [vmem:[%s218 + $0xb0] sm:$0xff]
      %v2977 = vld [vmem:[%s218 + $0xb8] sm:$0xff]
      %v2978 = vld [vmem:[%s218 + $0xc0] sm:$0xff]
      %v2979 = vld [vmem:[%s218 + $0xc8] sm:$0xff]
      %v2980 = vld [vmem:[%s218 + $0xd0] sm:$0xff]
      %v2981 = vld [vmem:[%s218 + $0xd8] sm:$0xff]
      %v2982 = vld [vmem:[%s218 + $0xe0] sm:$0xff]
      %v2983 = vld [vmem:[%s218 + $0xe8] sm:$0xff]
      %v2984 = vld [vmem:[%s218 + $0xf0] sm:$0xff]
      %v2985 = vld [vmem:[%s218 + $0xf8] sm:$0xff]
      %v2987 = vshrl.u32 %v278, 16
      %v2989 = vrot.slane %v2987, 4
      %v2990 = vshll.u32 %v278, 16
      %v2992 = vrot.slane %v2990, 5
      %v2993 = vor.u32 %v2989, %v2992
      %v2994 = vrot.slane %v2993, 4
      %v2996 = vshll.u32 %v279, 16
      %v2998 = vrot.slane %v2996, 5
      %v2999 = vsel %vm646, %v2994, %v2998
      %v3000 = vshrl.u32 %v279, 16
      %v3002 = vrot.slane %v3000, 4
      %v3003 = vor.u32 %v3002, %v2998
      %v3004 = vrot.slane %v3003, 4
      %v3006 = vshll.u32 %v280, 16
      %v3008 = vrot.slane %v3006, 5
      %v3009 = vsel %vm646, %v3004, %v3008
      %v3010 = vunpack.c.l.b16 %v2999
      %v3011 = vunpack.c.l.b16 %v3009
      %v3012 = vpack.c.b16 %v3011, %v3010
      %v3014 = vunpack.c.l.b16 %v284
      %v3015 = vpack.c.b16 %v3014, %v3014
      %v3016 = vrot.slane %v3015, 2
      %v3018 = vsel %vm366, %v3012, 0
      %v3021 = vsel %vm415, %v3016, 0
      %3023 = vmatprep.subr.bf16.mxu0 0
      %3024 = vmatpush1.bf16.msra.mxu0 %v3021
      %3025 = vmatprep.subr.bf16.mxu0 0
      %3026 = vmatpush1.bf16.msra.mxu0 0
      %3027 = vmatprep.subr.bf16.mxu0 0
      %3028 = vmatpush1.bf16.msra.mxu0 0
      %3029 = vmatprep.subr.bf16.mxu0 0
      %3030 = vmatpush1.bf16.msra.mxu0 0
      %3031 = vmatprep.subr.bf16.mxu0 0
      %3032 = vmatpush1.bf16.msra.mxu0 0
      %3033 = vmatprep.subr.bf16.mxu0 0
      %3034 = vmatpush1.bf16.msra.mxu0 0
      %3035 = vmatprep.subr.bf16.mxu0 0
      %3036 = vmatpush1.bf16.msra.mxu0 0
      %3037 = vmatprep.subr.bf16.mxu0 0
      %3038 = vmatpush1.bf16.msra.mxu0 0
      %3039 = vmatprep.subr.bf16.mxu0 0
      %3040 = vmatpush1.bf16.msra.mxu0 0
      %3041 = vmatprep.subr.bf16.mxu0 0
      %3042 = vmatpush1.bf16.msra.mxu0 0
      %3043 = vmatprep.subr.bf16.mxu0 0
      %3044 = vmatpush1.bf16.msra.mxu0 0
      %3045 = vmatprep.subr.bf16.mxu0 0
      %3046 = vmatpush1.bf16.msra.mxu0 0
      %3047 = vmatprep.subr.bf16.mxu0 0
      %3048 = vmatpush1.bf16.msra.mxu0 0
      %3049 = vmatprep.subr.bf16.mxu0 0
      %3050 = vmatpush1.bf16.msra.mxu0 0
      %3051 = vmatprep.subr.bf16.mxu0 0
      %3052 = vmatpush1.bf16.msra.mxu0 0
      %3053 = vmatprep.subr.bf16.mxu0 0
      %3054 = vmatpush1.bf16.msra.mxu0 0
      %3055 = vmatprep.mubr.bf16.mxu0 0
      %3056 = vmatmul.mubr.bf16.gmra.mrb[0].mxu0 %v1090
      %v3057 = vpop.f32.mrb[0].mxu0
      %v3058 = vadd.f32 0.0, %v3057
      %v3059 = vpop.f32.mrb[0].mxu0
      %v3060 = vpop.f32.mrb[0].mxu0
      %v3061 = vadd.f32 0.0, %v3060
      %v3062 = vpop.f32.mrb[0].mxu0
      %3063 = vmatprep.mubr.bf16.mxu0 0
      %3064 = vmatmul.mubr.bf16.gmra.mrb[0].mxu0 %v1093
      %v3065 = vpop.f32.mrb[0].mxu0
      %v3066 = vadd.f32 0.0, %v3065
      %v3067 = vpop.f32.mrb[0].mxu0
      %v3068 = vpop.f32.mrb[0].mxu0
      %v3069 = vadd.f32 0.0, %v3068
      %v3070 = vpop.f32.mrb[0].mxu0
      %3071 = vmatprep.mubr.bf16.mxu0 0
      %3072 = vmatmul.mubr.bf16.gmra.mrb[0].mxu0 %v1096
      %v3073 = vpop.f32.mrb[0].mxu0
      %v3074 = vadd.f32 0.0, %v3073
      %v3075 = vpop.f32.mrb[0].mxu0
      %v3076 = vpop.f32.mrb[0].mxu0
      %v3077 = vadd.f32 0.0, %v3076
      %v3078 = vpop.f32.mrb[0].mxu0
      %3079 = vmatprep.mubr.bf16.mxu0 0
      %3080 = vmatmul.mubr.bf16.gmra.mrb[0].mxu0 %v1099
      %v3081 = vpop.f32.mrb[0].mxu0
      %v3082 = vadd.f32 0.0, %v3081
      %v3083 = vpop.f32.mrb[0].mxu0
      %v3084 = vpop.f32.mrb[0].mxu0
      %v3085 = vadd.f32 0.0, %v3084
      %v3086 = vpop.f32.mrb[0].mxu0
      %3087 = vmatprep.mubr.bf16.mxu0 0
      %3088 = vmatmul.mubr.bf16.gmra.mrb[0].mxu0 %v1102
      %v3089 = vpop.f32.mrb[0].mxu0
      %v3090 = vadd.f32 0.0, %v3089
      %v3091 = vpop.f32.mrb[0].mxu0
      %v3092 = vpop.f32.mrb[0].mxu0
      %v3093 = vadd.f32 0.0, %v3092
      %v3094 = vpop.f32.mrb[0].mxu0
      %3095 = vmatprep.mubr.bf16.mxu0 0
      %3096 = vmatmul.mubr.bf16.gmra.mrb[0].mxu0 %v1105
      %v3097 = vpop.f32.mrb[0].mxu0
      %v3098 = vadd.f32 0.0, %v3097
      %v3099 = vpop.f32.mrb[0].mxu0
      %v3100 = vpop.f32.mrb[0].mxu0
      %v3101 = vadd.f32 0.0, %v3100
      %v3102 = vpop.f32.mrb[0].mxu0
      %3103 = vmatprep.mubr.bf16.mxu0 0
      %3104 = vmatmul.mubr.bf16.gmra.mrb[0].mxu0 %v1108
      %v3105 = vpop.f32.mrb[0].mxu0
      %v3106 = vadd.f32 0.0, %v3105
      %v3107 = vpop.f32.mrb[0].mxu0
      %v3108 = vpop.f32.mrb[0].mxu0
      %v3109 = vadd.f32 0.0, %v3108
      %v3110 = vpop.f32.mrb[0].mxu0
      %3111 = vmatprep.mubr.bf16.mxu0 0
      %3112 = vmatmul.mubr.bf16.gmra.mrb[0].mxu0 %v1111
      %v3113 = vpop.f32.mrb[0].mxu0
      %v3114 = vadd.f32 0.0, %v3113
      %v3115 = vpop.f32.mrb[0].mxu0
      %v3116 = vpop.f32.mrb[0].mxu0
      %v3117 = vadd.f32 0.0, %v3116
      %v3118 = vpop.f32.mrb[0].mxu0
      %3119 = vmatprep.mubr.bf16.mxu0 0
      %3120 = vmatmul.mubr.bf16.gmra.mrb[0].mxu0 %v1114
      %v3121 = vpop.f32.mrb[0].mxu0
      %v3122 = vadd.f32 0.0, %v3121
      %v3123 = vpop.f32.mrb[0].mxu0
      %v3124 = vpop.f32.mrb[0].mxu0
      %v3125 = vadd.f32 0.0, %v3124
      %v3126 = vpop.f32.mrb[0].mxu0
      %3127 = vmatprep.mubr.bf16.mxu0 0
      %3128 = vmatmul.mubr.bf16.gmra.mrb[0].mxu0 %v1117
      %v3129 = vpop.f32.mrb[0].mxu0
      %v3130 = vadd.f32 0.0, %v3129
      %v3131 = vpop.f32.mrb[0].mxu0
      %v3132 = vpop.f32.mrb[0].mxu0
      %v3133 = vadd.f32 0.0, %v3132
      %v3134 = vpop.f32.mrb[0].mxu0
      %3135 = vmatprep.mubr.bf16.mxu0 0
      %3136 = vmatmul.mubr.bf16.gmra.mrb[0].mxu0 %v1120
      %v3137 = vpop.f32.mrb[0].mxu0
      %v3138 = vadd.f32 0.0, %v3137
      %v3139 = vpop.f32.mrb[0].mxu0
      %v3140 = vpop.f32.mrb[0].mxu0
      %v3141 = vadd.f32 0.0, %v3140
      %v3142 = vpop.f32.mrb[0].mxu0
      %3143 = vmatprep.mubr.bf16.mxu0 0
      %3144 = vmatmul.mubr.bf16.gmra.mrb[0].mxu0 %v1123
      %v3145 = vpop.f32.mrb[0].mxu0
      %v3146 = vadd.f32 0.0, %v3145
      %v3147 = vpop.f32.mrb[0].mxu0
      %v3148 = vpop.f32.mrb[0].mxu0
      %v3149 = vadd.f32 0.0, %v3148
      %v3150 = vpop.f32.mrb[0].mxu0
      %3151 = vmatprep.mubr.bf16.mxu0 0
      %3152 = vmatmul.mubr.bf16.gmra.mrb[0].mxu0 %v1126
      %v3153 = vpop.f32.mrb[0].mxu0
      %v3154 = vadd.f32 0.0, %v3153
      %v3155 = vpop.f32.mrb[0].mxu0
      %v3156 = vpop.f32.mrb[0].mxu0
      %v3157 = vadd.f32 0.0, %v3156
      %v3158 = vpop.f32.mrb[0].mxu0
      %3159 = vmatprep.mubr.bf16.mxu0 0
      %3160 = vmatmul.mubr.bf16.gmra.mrb[0].mxu0 %v1129
      %v3161 = vpop.f32.mrb[0].mxu0
      %v3162 = vadd.f32 0.0, %v3161
      %v3163 = vpop.f32.mrb[0].mxu0
      %v3164 = vpop.f32.mrb[0].mxu0
      %v3165 = vadd.f32 0.0, %v3164
      %v3166 = vpop.f32.mrb[0].mxu0
      %3167 = vmatprep.mubr.bf16.mxu0 0
      %3168 = vmatmul.mubr.bf16.gmra.mrb[0].mxu0 %v2178
      %v3169 = vpop.f32.mrb[0].mxu0
      %v3170 = vadd.f32 0.0, %v3169
      %v3171 = vpop.f32.mrb[0].mxu0
      %v3172 = vpop.f32.mrb[0].mxu0
      %v3173 = vadd.f32 0.0, %v3172
      %v3174 = vpop.f32.mrb[0].mxu0
      %3175 = vmatprep.mubr.bf16.mxu0 0
      %3176 = vmatmul.mubr.bf16.gmra.mrb[0].mxu0 %v3018
      %v3177 = vpop.f32.mrb[0].mxu0
      %v3178 = vadd.f32 0.0, %v3177
      %v3179 = vpop.f32.mrb[0].mxu0
      %v3180 = vpop.f32.mrb[0].mxu0
      %v3181 = vadd.f32 0.0, %v3180
      %v3182 = vpop.f32.mrb[0].mxu0
      %3183 = vdwg.mxu0
      %v3184 = vadd.f32 %v2954, %v3058
      %v3185 = vadd.f32 %v2955, %v3061
      %v3186 = vadd.f32 %v2956, %v3066
      %v3187 = vadd.f32 %v2957, %v3069
      %v3188 = vadd.f32 %v2958, %v3074
      %v3189 = vadd.f32 %v2959, %v3077
      %v3190 = vadd.f32 %v2960, %v3082
      %v3191 = vadd.f32 %v2961, %v3085
      %v3192 = vadd.f32 %v2962, %v3090
      %v3193 = vadd.f32 %v2963, %v3093
      %v3194 = vadd.f32 %v2964, %v3098
      %v3195 = vadd.f32 %v2965, %v3101
      %v3196 = vadd.f32 %v2966, %v3106
      %v3197 = vadd.f32 %v2967, %v3109
      %v3198 = vadd.f32 %v2968, %v3114
      %v3199 = vadd.f32 %v2969, %v3117
      %v3200 = vadd.f32 %v2970, %v3122
      %v3201 = vadd.f32 %v2971, %v3125
      %v3202 = vadd.f32 %v2972, %v3130
      %v3203 = vadd.f32 %v2973, %v3133
      %v3204 = vadd.f32 %v2974, %v3138
      %v3205 = vadd.f32 %v2975, %v3141
      %v3206 = vadd.f32 %v2976, %v3146
      %v3207 = vadd.f32 %v2977, %v3149
      %v3208 = vadd.f32 %v2978, %v3154
      %v3209 = vadd.f32 %v2979, %v3157
      %v3210 = vadd.f32 %v2980, %v3162
      %v3211 = vadd.f32 %v2981, %v3165
      %v3212 = vadd.f32 %v2982, %v3170
      %v3213 = vadd.f32 %v2983, %v3173
      %v3214 = vadd.f32 %v2984, %v3178
      %v3215 = vadd.f32 %v2985, %v3181
      %3216 = vst [vmem:[%s218] sm:$0xff] %v3184
      %3217 = vst [vmem:[%s218 + $0x8] sm:$0xff] %v3185
      %3218 = vst [vmem:[%s218 + $0x10] sm:$0xff] %v3186
      %3219 = vst [vmem:[%s218 + $0x18] sm:$0xff] %v3187
      %3220 = vst [vmem:[%s218 + $0x20] sm:$0xff] %v3188
      %3221 = vst [vmem:[%s218 + $0x28] sm:$0xff] %v3189
      %3222 = vst [vmem:[%s218 + $0x30] sm:$0xff] %v3190
      %3223 = vst [vmem:[%s218 + $0x38] sm:$0xff] %v3191
      %3224 = vst [vmem:[%s218 + $0x40] sm:$0xff] %v3192
      %3225 = vst [vmem:[%s218 + $0x48] sm:$0xff] %v3193
      %3226 = vst [vmem:[%s218 + $0x50] sm:$0xff] %v3194
      %3227 = vst [vmem:[%s218 + $0x58] sm:$0xff] %v3195
      %3228 = vst [vmem:[%s218 + $0x60] sm:$0xff] %v3196
      %3229 = vst [vmem:[%s218 + $0x68] sm:$0xff] %v3197
      %3230 = vst [vmem:[%s218 + $0x70] sm:$0xff] %v3198
      %3231 = vst [vmem:[%s218 + $0x78] sm:$0xff] %v3199
      %3232 = vst [vmem:[%s218 + $0x80] sm:$0xff] %v3200
      %3233 = vst [vmem:[%s218 + $0x88] sm:$0xff] %v3201
      %3234 = vst [vmem:[%s218 + $0x90] sm:$0xff] %v3202
      %3235 = vst [vmem:[%s218 + $0x98] sm:$0xff] %v3203
      %3236 = vst [vmem:[%s218 + $0xa0] sm:$0xff] %v3204
      %3237 = vst [vmem:[%s218 + $0xa8] sm:$0xff] %v3205
      %3238 = vst [vmem:[%s218 + $0xb0] sm:$0xff] %v3206
      %3239 = vst [vmem:[%s218 + $0xb8] sm:$0xff] %v3207
      %3240 = vst [vmem:[%s218 + $0xc0] sm:$0xff] %v3208
      %3241 = vst [vmem:[%s218 + $0xc8] sm:$0xff] %v3209
      %3242 = vst [vmem:[%s218 + $0xd0] sm:$0xff] %v3210
      %3243 = vst [vmem:[%s218 + $0xd8] sm:$0xff] %v3211
      %3244 = vst [vmem:[%s218 + $0xe0] sm:$0xff] %v3212
      %3245 = vst [vmem:[%s218 + $0xe8] sm:$0xff] %v3213
      %3246 = vst [vmem:[%s218 + $0xf0] sm:$0xff] %v3214
      %3247 = vst [vmem:[%s218 + $0xf8] sm:$0xff] %v3215
      %v3248 = vld [vmem:[%s218] sm:$0xff]
      %v3249 = vld [vmem:[%s218 + $0x8] sm:$0xff]
      %v3250 = vld [vmem:[%s218 + $0x10] sm:$0xff]
      %v3251 = vld [vmem:[%s218 + $0x18] sm:$0xff]
      %v3252 = vld [vmem:[%s218 + $0x20] sm:$0xff]
      %v3253 = vld [vmem:[%s218 + $0x28] sm:$0xff]
      %v3254 = vld [vmem:[%s218 + $0x30] sm:$0xff]
      %v3255 = vld [vmem:[%s218 + $0x38] sm:$0xff]
      %v3256 = vld [vmem:[%s218 + $0x40] sm:$0xff]
      %v3257 = vld [vmem:[%s218 + $0x48] sm:$0xff]
      %v3258 = vld [vmem:[%s218 + $0x50] sm:$0xff]
      %v3259 = vld [vmem:[%s218 + $0x58] sm:$0xff]
      %v3260 = vld [vmem:[%s218 + $0x60] sm:$0xff]
      %v3261 = vld [vmem:[%s218 + $0x68] sm:$0xff]
      %v3262 = vld [vmem:[%s218 + $0x70] sm:$0xff]
      %v3263 = vld [vmem:[%s218 + $0x78] sm:$0xff]
      %v3264 = vld [vmem:[%s218 + $0x80] sm:$0xff]
      %v3265 = vld [vmem:[%s218 + $0x88] sm:$0xff]
      %v3266 = vld [vmem:[%s218 + $0x90] sm:$0xff]
      %v3267 = vld [vmem:[%s218 + $0x98] sm:$0xff]
      %v3268 = vld [vmem:[%s218 + $0xa0] sm:$0xff]
      %v3269 = vld [vmem:[%s218 + $0xa8] sm:$0xff]
      %v3270 = vld [vmem:[%s218 + $0xb0] sm:$0xff]
      %v3271 = vld [vmem:[%s218 + $0xb8] sm:$0xff]
      %v3272 = vld [vmem:[%s218 + $0xc0] sm:$0xff]
      %v3273 = vld [vmem:[%s218 + $0xc8] sm:$0xff]
      %v3274 = vld [vmem:[%s218 + $0xd0] sm:$0xff]
      %v3275 = vld [vmem:[%s218 + $0xd8] sm:$0xff]
      %v3276 = vld [vmem:[%s218 + $0xe0] sm:$0xff]
      %v3277 = vld [vmem:[%s218 + $0xe8] sm:$0xff]
      %v3278 = vld [vmem:[%s218 + $0xf0] sm:$0xff]
      %v3279 = vld [vmem:[%s218 + $0xf8] sm:$0xff]
      %v3281 = vrot.slane %v278, 5
      %v3282 = vrot.slane %v3281, 4
      %v3283 = vrot.slane %v279, 5
      %v3284 = vsel %vm1409, %v3282, %v3283
      %v3285 = vrot.slane %v3283, 4
      %v3286 = vrot.slane %v280, 5
      %v3287 = vsel %vm1409, %v3285, %v3286
      %v3288 = vunpack.c.l.b16 %v3284
      %v3289 = vunpack.c.l.b16 %v3287
      %v3290 = vpack.c.b16 %v3289, %v3288
      %v3292 = vsel %vm366, %v3290, 0
      %v3295 = vsel %vm415, %v285, 0
      %3297 = vmatprep.subr.bf16.mxu0 0
      %3298 = vmatpush1.bf16.msra.mxu0 %v3295
      %3299 = vmatprep.subr.bf16.mxu0 0
      %3300 = vmatpush1.bf16.msra.mxu0 0
      %3301 = vmatprep.subr.bf16.mxu0 0
      %3302 = vmatpush1.bf16.msra.mxu0 0
      %3303 = vmatprep.subr.bf16.mxu0 0
      %3304 = vmatpush1.bf16.msra.mxu0 0
      %3305 = vmatprep.subr.bf16.mxu0 0
      %3306 = vmatpush1.bf16.msra.mxu0 0
      %3307 = vmatprep.subr.bf16.mxu0 0
      %3308 = vmatpush1.bf16.msra.mxu0 0
      %3309 = vmatprep.subr.bf16.mxu0 0
      %3310 = vmatpush1.bf16.msra.mxu0 0
      %3311 = vmatprep.subr.bf16.mxu0 0
      %3312 = vmatpush1.bf16.msra.mxu0 0
      %3313 = vmatprep.subr.bf16.mxu0 0
      %3314 = vmatpush1.bf16.msra.mxu0 0
      %3315 = vmatprep.subr.bf16.mxu0 0
      %3316 = vmatpush1.bf16.msra.mxu0 0
      %3317 = vmatprep.subr.bf16.mxu0 0
      %3318 = vmatpush1.bf16.msra.mxu0 0
      %3319 = vmatprep.subr.bf16.mxu0 0
      %3320 = vmatpush1.bf16.msra.mxu0 0
      %3321 = vmatprep.subr.bf16.mxu0 0
      %3322 = vmatpush1.bf16.msra.mxu0 0
      %3323 = vmatprep.subr.bf16.mxu0 0
      %3324 = vmatpush1.bf16.msra.mxu0 0
      %3325 = vmatprep.subr.bf16.mxu0 0
      %3326 = vmatpush1.bf16.msra.mxu0 0
      %3327 = vmatprep.subr.bf16.mxu0 0
      %3328 = vmatpush1.bf16.msra.mxu0 0
      %3329 = vmatprep.mubr.bf16.mxu0 0
      %3330 = vmatmul.mubr.bf16.gmra.mrb[0].mxu0 %v1577
      %v3331 = vpop.f32.mrb[0].mxu0
      %v3332 = vadd.f32 0.0, %v3331
      %v3333 = vpop.f32.mrb[0].mxu0
      %v3334 = vpop.f32.mrb[0].mxu0
      %v3335 = vadd.f32 0.0, %v3334
      %v3336 = vpop.f32.mrb[0].mxu0
      %3337 = vmatprep.mubr.bf16.mxu0 0
      %3338 = vmatmul.mubr.bf16.gmra.mrb[0].mxu0 %v1580
      %v3339 = vpop.f32.mrb[0].mxu0
      %v3340 = vadd.f32 0.0, %v3339
      %v3341 = vpop.f32.mrb[0].mxu0
      %v3342 = vpop.f32.mrb[0].mxu0
      %v3343 = vadd.f32 0.0, %v3342
      %v3344 = vpop.f32.mrb[0].mxu0
      %3345 = vmatprep.mubr.bf16.mxu0 0
      %3346 = vmatmul.mubr.bf16.gmra.mrb[0].mxu0 %v1583
      %v3347 = vpop.f32.mrb[0].mxu0
      %v3348 = vadd.f32 0.0, %v3347
      %v3349 = vpop.f32.mrb[0].mxu0
      %v3350 = vpop.f32.mrb[0].mxu0
      %v3351 = vadd.f32 0.0, %v3350
      %v3352 = vpop.f32.mrb[0].mxu0
      %3353 = vmatprep.mubr.bf16.mxu0 0
      %3354 = vmatmul.mubr.bf16.gmra.mrb[0].mxu0 %v1586
      %v3355 = vpop.f32.mrb[0].mxu0
      %v3356 = vadd.f32 0.0, %v3355
      %v3357 = vpop.f32.mrb[0].mxu0
      %v3358 = vpop.f32.mrb[0].mxu0
      %v3359 = vadd.f32 0.0, %v3358
      %v3360 = vpop.f32.mrb[0].mxu0
      %3361 = vmatprep.mubr.bf16.mxu0 0
      %3362 = vmatmul.mubr.bf16.gmra.mrb[0].mxu0 %v1589
      %v3363 = vpop.f32.mrb[0].mxu0
      %v3364 = vadd.f32 0.0, %v3363
      %v3365 = vpop.f32.mrb[0].mxu0
      %v3366 = vpop.f32.mrb[0].mxu0
      %v3367 = vadd.f32 0.0, %v3366
      %v3368 = vpop.f32.mrb[0].mxu0
      %3369 = vmatprep.mubr.bf16.mxu0 0
      %3370 = vmatmul.mubr.bf16.gmra.mrb[0].mxu0 %v1592
      %v3371 = vpop.f32.mrb[0].mxu0
      %v3372 = vadd.f32 0.0, %v3371
      %v3373 = vpop.f32.mrb[0].mxu0
      %v3374 = vpop.f32.mrb[0].mxu0
      %v3375 = vadd.f32 0.0, %v3374
      %v3376 = vpop.f32.mrb[0].mxu0
      %3377 = vmatprep.mubr.bf16.mxu0 0
      %3378 = vmatmul.mubr.bf16.gmra.mrb[0].mxu0 %v1595
      %v3379 = vpop.f32.mrb[0].mxu0
      %v3380 = vadd.f32 0.0, %v3379
      %v3381 = vpop.f32.mrb[0].mxu0
      %v3382 = vpop.f32.mrb[0].mxu0
      %v3383 = vadd.f32 0.0, %v3382
      %v3384 = vpop.f32.mrb[0].mxu0
      %3385 = vmatprep.mubr.bf16.mxu0 0
      %3386 = vmatmul.mubr.bf16.gmra.mrb[0].mxu0 %v1598
      %v3387 = vpop.f32.mrb[0].mxu0
      %v3388 = vadd.f32 0.0, %v3387
      %v3389 = vpop.f32.mrb[0].mxu0
      %v3390 = vpop.f32.mrb[0].mxu0
      %v3391 = vadd.f32 0.0, %v3390
      %v3392 = vpop.f32.mrb[0].mxu0
      %3393 = vmatprep.mubr.bf16.mxu0 0
      %3394 = vmatmul.mubr.bf16.gmra.mrb[0].mxu0 %v1601
      %v3395 = vpop.f32.mrb[0].mxu0
      %v3396 = vadd.f32 0.0, %v3395
      %v3397 = vpop.f32.mrb[0].mxu0
      %v3398 = vpop.f32.mrb[0].mxu0
      %v3399 = vadd.f32 0.0, %v3398
      %v3400 = vpop.f32.mrb[0].mxu0
      %3401 = vmatprep.mubr.bf16.mxu0 0
      %3402 = vmatmul.mubr.bf16.gmra.mrb[0].mxu0 %v1604
      %v3403 = vpop.f32.mrb[0].mxu0
      %v3404 = vadd.f32 0.0, %v3403
      %v3405 = vpop.f32.mrb[0].mxu0
      %v3406 = vpop.f32.mrb[0].mxu0
      %v3407 = vadd.f32 0.0, %v3406
      %v3408 = vpop.f32.mrb[0].mxu0
      %3409 = vmatprep.mubr.bf16.mxu0 0
      %3410 = vmatmul.mubr.bf16.gmra.mrb[0].mxu0 %v1607
      %v3411 = vpop.f32.mrb[0].mxu0
      %v3412 = vadd.f32 0.0, %v3411
      %v3413 = vpop.f32.mrb[0].mxu0
      %v3414 = vpop.f32.mrb[0].mxu0
      %v3415 = vadd.f32 0.0, %v3414
      %v3416 = vpop.f32.mrb[0].mxu0
      %3417 = vmatprep.mubr.bf16.mxu0 0
      %3418 = vmatmul.mubr.bf16.gmra.mrb[0].mxu0 %v1610
      %v3419 = vpop.f32.mrb[0].mxu0
      %v3420 = vadd.f32 0.0, %v3419
      %v3421 = vpop.f32.mrb[0].mxu0
      %v3422 = vpop.f32.mrb[0].mxu0
      %v3423 = vadd.f32 0.0, %v3422
      %v3424 = vpop.f32.mrb[0].mxu0
      %3425 = vmatprep.mubr.bf16.mxu0 0
      %3426 = vmatmul.mubr.bf16.gmra.mrb[0].mxu0 %v1613
      %v3427 = vpop.f32.mrb[0].mxu0
      %v3428 = vadd.f32 0.0, %v3427
      %v3429 = vpop.f32.mrb[0].mxu0
      %v3430 = vpop.f32.mrb[0].mxu0
      %v3431 = vadd.f32 0.0, %v3430
      %v3432 = vpop.f32.mrb[0].mxu0
      %3433 = vmatprep.mubr.bf16.mxu0 0
      %3434 = vmatmul.mubr.bf16.gmra.mrb[0].mxu0 %v1616
      %v3435 = vpop.f32.mrb[0].mxu0
      %v3436 = vadd.f32 0.0, %v3435
      %v3437 = vpop.f32.mrb[0].mxu0
      %v3438 = vpop.f32.mrb[0].mxu0
      %v3439 = vadd.f32 0.0, %v3438
      %v3440 = vpop.f32.mrb[0].mxu0
      %3441 = vmatprep.mubr.bf16.mxu0 0
      %3442 = vmatmul.mubr.bf16.gmra.mrb[0].mxu0 %v2456
      %v3443 = vpop.f32.mrb[0].mxu0
      %v3444 = vadd.f32 0.0, %v3443
      %v3445 = vpop.f32.mrb[0].mxu0
      %v3446 = vpop.f32.mrb[0].mxu0
      %v3447 = vadd.f32 0.0, %v3446
      %v3448 = vpop.f32.mrb[0].mxu0
      %3449 = vmatprep.mubr.bf16.mxu0 0
      %3450 = vmatmul.mubr.bf16.gmra.mrb[0].mxu0 %v3292
      %v3451 = vpop.f32.mrb[0].mxu0
      %v3452 = vadd.f32 0.0, %v3451
      %v3453 = vpop.f32.mrb[0].mxu0
      %v3454 = vpop.f32.mrb[0].mxu0
      %v3455 = vadd.f32 0.0, %v3454
      %v3456 = vpop.f32.mrb[0].mxu0
      %3457 = vdwg.mxu0
      %v3458 = vadd.f32 %v3248, %v3332
      %v3459 = vadd.f32 %v3249, %v3335
      %v3460 = vadd.f32 %v3250, %v3340
      %v3461 = vadd.f32 %v3251, %v3343
      %v3462 = vadd.f32 %v3252, %v3348
      %v3463 = vadd.f32 %v3253, %v3351
      %v3464 = vadd.f32 %v3254, %v3356
      %v3465 = vadd.f32 %v3255, %v3359
      %v3466 = vadd.f32 %v3256, %v3364
      %v3467 = vadd.f32 %v3257, %v3367
      %v3468 = vadd.f32 %v3258, %v3372
      %v3469 = vadd.f32 %v3259, %v3375
      %v3470 = vadd.f32 %v3260, %v3380
      %v3471 = vadd.f32 %v3261, %v3383
      %v3472 = vadd.f32 %v3262, %v3388
      %v3473 = vadd.f32 %v3263, %v3391
      %v3474 = vadd.f32 %v3264, %v3396
      %v3475 = vadd.f32 %v3265, %v3399
      %v3476 = vadd.f32 %v3266, %v3404
      %v3477 = vadd.f32 %v3267, %v3407
      %v3478 = vadd.f32 %v3268, %v3412
      %v3479 = vadd.f32 %v3269, %v3415
      %v3480 = vadd.f32 %v3270, %v3420
      %v3481 = vadd.f32 %v3271, %v3423
      %v3482 = vadd.f32 %v3272, %v3428
      %v3483 = vadd.f32 %v3273, %v3431
      %v3484 = vadd.f32 %v3274, %v3436
      %v3485 = vadd.f32 %v3275, %v3439
      %v3486 = vadd.f32 %v3276, %v3444
      %v3487 = vadd.f32 %v3277, %v3447
      %v3488 = vadd.f32 %v3278, %v3452
      %v3489 = vadd.f32 %v3279, %v3455
      %3490 = vst [vmem:[%s218] sm:$0xff] %v3458
      %3491 = vst [vmem:[%s218 + $0x8] sm:$0xff] %v3459
      %3492 = vst [vmem:[%s218 + $0x10] sm:$0xff] %v3460
      %3493 = vst [vmem:[%s218 + $0x18] sm:$0xff] %v3461
      %3494 = vst [vmem:[%s218 + $0x20] sm:$0xff] %v3462
      %3495 = vst [vmem:[%s218 + $0x28] sm:$0xff] %v3463
      %3496 = vst [vmem:[%s218 + $0x30] sm:$0xff] %v3464
      %3497 = vst [vmem:[%s218 + $0x38] sm:$0xff] %v3465
      %3498 = vst [vmem:[%s218 + $0x40] sm:$0xff] %v3466
      %3499 = vst [vmem:[%s218 + $0x48] sm:$0xff] %v3467
      %3500 = vst [vmem:[%s218 + $0x50] sm:$0xff] %v3468
      %3501 = vst [vmem:[%s218 + $0x58] sm:$0xff] %v3469
      %3502 = vst [vmem:[%s218 + $0x60] sm:$0xff] %v3470
      %3503 = vst [vmem:[%s218 + $0x68] sm:$0xff] %v3471
      %3504 = vst [vmem:[%s218 + $0x70] sm:$0xff] %v3472
      %3505 = vst [vmem:[%s218 + $0x78] sm:$0xff] %v3473
      %3506 = vst [vmem:[%s218 + $0x80] sm:$0xff] %v3474
      %3507 = vst [vmem:[%s218 + $0x88] sm:$0xff] %v3475
      %3508 = vst [vmem:[%s218 + $0x90] sm:$0xff] %v3476
      %3509 = vst [vmem:[%s218 + $0x98] sm:$0xff] %v3477
      %3510 = vst [vmem:[%s218 + $0xa0] sm:$0xff] %v3478
      %3511 = vst [vmem:[%s218 + $0xa8] sm:$0xff] %v3479
      %3512 = vst [vmem:[%s218 + $0xb0] sm:$0xff] %v3480
      %3513 = vst [vmem:[%s218 + $0xb8] sm:$0xff] %v3481
      %3514 = vst [vmem:[%s218 + $0xc0] sm:$0xff] %v3482
      %3515 = vst [vmem:[%s218 + $0xc8] sm:$0xff] %v3483
      %3516 = vst [vmem:[%s218 + $0xd0] sm:$0xff] %v3484
      %3517 = vst [vmem:[%s218 + $0xd8] sm:$0xff] %v3485
      %3518 = vst [vmem:[%s218 + $0xe0] sm:$0xff] %v3486
      %3519 = vst [vmem:[%s218 + $0xe8] sm:$0xff] %v3487
      %3520 = vst [vmem:[%s218 + $0xf0] sm:$0xff] %v3488
      %3521 = vst [vmem:[%s218 + $0xf8] sm:$0xff] %v3489
      %v3522 = vld [vmem:[%s218] sm:$0xff]
      %v3523 = vld [vmem:[%s218 + $0x8] sm:$0xff]
      %v3524 = vld [vmem:[%s218 + $0x10] sm:$0xff]
      %v3525 = vld [vmem:[%s218 + $0x18] sm:$0xff]
      %v3526 = vld [vmem:[%s218 + $0x20] sm:$0xff]
      %v3527 = vld [vmem:[%s218 + $0x28] sm:$0xff]
      %v3528 = vld [vmem:[%s218 + $0x30] sm:$0xff]
      %v3529 = vld [vmem:[%s218 + $0x38] sm:$0xff]
      %v3530 = vld [vmem:[%s218 + $0x40] sm:$0xff]
      %v3531 = vld [vmem:[%s218 + $0x48] sm:$0xff]
      %v3532 = vld [vmem:[%s218 + $0x50] sm:$0xff]
      %v3533 = vld [vmem:[%s218 + $0x58] sm:$0xff]
      %v3534 = vld [vmem:[%s218 + $0x60] sm:$0xff]
      %v3535 = vld [vmem:[%s218 + $0x68] sm:$0xff]
      %v3536 = vld [vmem:[%s218 + $0x70] sm:$0xff]
      %v3537 = vld [vmem:[%s218 + $0x78] sm:$0xff]
      %v3538 = vld [vmem:[%s218 + $0x80] sm:$0xff]
      %v3539 = vld [vmem:[%s218 + $0x88] sm:$0xff]
      %v3540 = vld [vmem:[%s218 + $0x90] sm:$0xff]
      %v3541 = vld [vmem:[%s218 + $0x98] sm:$0xff]
      %v3542 = vld [vmem:[%s218 + $0xa0] sm:$0xff]
      %v3543 = vld [vmem:[%s218 + $0xa8] sm:$0xff]
      %v3544 = vld [vmem:[%s218 + $0xb0] sm:$0xff]
      %v3545 = vld [vmem:[%s218 + $0xb8] sm:$0xff]
      %v3546 = vld [vmem:[%s218 + $0xc0] sm:$0xff]
      %v3547 = vld [vmem:[%s218 + $0xc8] sm:$0xff]
      %v3548 = vld [vmem:[%s218 + $0xd0] sm:$0xff]
      %v3549 = vld [vmem:[%s218 + $0xd8] sm:$0xff]
      %v3550 = vld [vmem:[%s218 + $0xe0] sm:$0xff]
      %v3551 = vld [vmem:[%s218 + $0xe8] sm:$0xff]
      %v3552 = vld [vmem:[%s218 + $0xf0] sm:$0xff]
      %v3553 = vld [vmem:[%s218 + $0xf8] sm:$0xff]
      %v3554 = vadd.f32 %v3522, %v3523
      %v3555 = vadd.f32 %v3554, %v3524
      %v3556 = vadd.f32 %v3555, %v3525
      %v3557 = vadd.f32 %v3556, %v3526
      %v3558 = vadd.f32 %v3557, %v3527
      %v3559 = vadd.f32 %v3558, %v3528
      %v3560 = vadd.f32 %v3559, %v3529
      %v3561 = vadd.f32 %v3560, %v3530
      %v3562 = vadd.f32 %v3561, %v3531
      %v3563 = vadd.f32 %v3562, %v3532
      %v3564 = vadd.f32 %v3563, %v3533
      %v3565 = vadd.f32 %v3564, %v3534
      %v3566 = vadd.f32 %v3565, %v3535
      %v3567 = vadd.f32 %v3566, %v3536
      %v3568 = vadd.f32 %v3567, %v3537
      %v3569 = vadd.f32 %v3568, %v3538
      %v3570 = vadd.f32 %v3569, %v3539
      %v3571 = vadd.f32 %v3570, %v3540
      %v3572 = vadd.f32 %v3571, %v3541
      %v3573 = vadd.f32 %v3572, %v3542
      %v3574 = vadd.f32 %v3573, %v3543
      %v3575 = vadd.f32 %v3574, %v3544
      %v3576 = vadd.f32 %v3575, %v3545
      %v3577 = vadd.f32 %v3576, %v3546
      %v3578 = vadd.f32 %v3577, %v3547
      %v3579 = vadd.f32 %v3578, %v3548
      %v3580 = vadd.f32 %v3579, %v3549
      %v3581 = vadd.f32 %v3580, %v3550
      %v3582 = vadd.f32 %v3581, %v3551
      %v3583 = vadd.f32 %v3582, %v3552
      %v3584 = vadd.f32 %v3583, %v3553
      %v3585 = vrot.slane %v3584, 4
      %v3586 = vadd.f32 %v3584, %v3585
      %v3587 = vrot.slane %v3586, 2
      %v3588 = vadd.f32 %v3586, %v3587
      %v3589 = vrot.slane %v3588, 1
      %v3590 = vadd.f32 %v3588, %v3589
      %3591 = vst [vmem:[%s225] sm:$0x1] %v3590
      %v3592 = vmul.f32 %v3522, %v3522
      %v3593 = vmul.f32 %v3523, %v3523
      %v3594 = vmul.f32 %v3524, %v3524
      %v3595 = vmul.f32 %v3525, %v3525
      %v3596 = vmul.f32 %v3526, %v3526
      %v3597 = vmul.f32 %v3527, %v3527
      %v3598 = vmul.f32 %v3528, %v3528
      %v3599 = vmul.f32 %v3529, %v3529
      %v3600 = vmul.f32 %v3530, %v3530
      %v3601 = vmul.f32 %v3531, %v3531
      %v3602 = vmul.f32 %v3532, %v3532
      %v3603 = vmul.f32 %v3533, %v3533
      %v3604 = vmul.f32 %v3534, %v3534
      %v3605 = vmul.f32 %v3535, %v3535
      %v3606 = vmul.f32 %v3536, %v3536
      %v3607 = vmul.f32 %v3537, %v3537
      %v3608 = vmul.f32 %v3538, %v3538
      %v3609 = vmul.f32 %v3539, %v3539
      %v3610 = vmul.f32 %v3540, %v3540
      %v3611 = vmul.f32 %v3541, %v3541
      %v3612 = vmul.f32 %v3542, %v3542
      %v3613 = vmul.f32 %v3543, %v3543
      %v3614 = vmul.f32 %v3544, %v3544
      %v3615 = vmul.f32 %v3545, %v3545
      %v3616 = vmul.f32 %v3546, %v3546
      %v3617 = vmul.f32 %v3547, %v3547
      %v3618 = vmul.f32 %v3548, %v3548
      %v3619 = vmul.f32 %v3549, %v3549
      %v3620 = vmul.f32 %v3550, %v3550
      %v3621 = vmul.f32 %v3551, %v3551
      %v3622 = vmul.f32 %v3552, %v3552
      %v3623 = vmul.f32 %v3553, %v3553
      %v3624 = vadd.f32 %v3592, %v3593
      %v3625 = vadd.f32 %v3624, %v3594
      %v3626 = vadd.f32 %v3625, %v3595
      %v3627 = vadd.f32 %v3626, %v3596
      %v3628 = vadd.f32 %v3627, %v3597
      %v3629 = vadd.f32 %v3628, %v3598
      %v3630 = vadd.f32 %v3629, %v3599
      %v3631 = vadd.f32 %v3630, %v3600
      %v3632 = vadd.f32 %v3631, %v3601
      %v3633 = vadd.f32 %v3632, %v3602
      %v3634 = vadd.f32 %v3633, %v3603
      %v3635 = vadd.f32 %v3634, %v3604
      %v3636 = vadd.f32 %v3635, %v3605
      %v3637 = vadd.f32 %v3636, %v3606
      %v3638 = vadd.f32 %v3637, %v3607
      %v3639 = vadd.f32 %v3638, %v3608
      %v3640 = vadd.f32 %v3639, %v3609
      %v3641 = vadd.f32 %v3640, %v3610
      %v3642 = vadd.f32 %v3641, %v3611
      %v3643 = vadd.f32 %v3642, %v3612
      %v3644 = vadd.f32 %v3643, %v3613
      %v3645 = vadd.f32 %v3644, %v3614
      %v3646 = vadd.f32 %v3645, %v3615
      %v3647 = vadd.f32 %v3646, %v3616
      %v3648 = vadd.f32 %v3647, %v3617
      %v3649 = vadd.f32 %v3648, %v3618
      %v3650 = vadd.f32 %v3649, %v3619
      %v3651 = vadd.f32 %v3650, %v3620
      %v3652 = vadd.f32 %v3651, %v3621
      %v3653 = vadd.f32 %v3652, %v3622
      %v3654 = vadd.f32 %v3653, %v3623
      %v3655 = vrot.slane %v3654, 4
      %v3656 = vadd.f32 %v3654, %v3655
      %v3657 = vrot.slane %v3656, 2
      %v3658 = vadd.f32 %v3656, %v3657
      %v3659 = vrot.slane %v3658, 1
      %v3660 = vadd.f32 %v3658, %v3659
      %3661 = vst [vmem:[%s225 + $0x1] sm:$0x1] %v3660
      %p3662 = scmp.lt.s32.totalorder %s19, 1
      %s3663 = scalar_select %p3662, %s19, 1
      %p3664 = scmp.lt.s32.totalorder %s20, 0
      %s3665 = scalar_select %p3664, %s20, 0
      %s3666 = smul.addr %s3665, 32
      %s3667 = smul.addr %s3663, 32
      %s3668 = sadd.s32 %s3666, %s3667
      %s3669 = smul.addr %s3668, 8
      %s3670 = scalar_lea.vmem %s2, %s3669
      %p3671 = scmp.lt.s32.totalorder %s19, 1
      %s3672 = scalar_select %p3671, %s19, 1
      %p3673 = scmp.lt.s32.totalorder %s20, 0
      %s3674 = scalar_select %p3673, %s20, 0
      %s3675 = sadd.s32 %s3674, %s3672
      %s3676 = smul.addr %s3675, 2
      %s3677 = scalar_lea.vmem %s3, %s3676
      // Predicated region
      $region29: #{conv_block_forward.2} parent=27 // pred_check
        %p3678 = pneg %p96
      $region30: #{conv_block_forward.2} parent=27 // pred_check_branch
        %3680 = sbr.rel (%p3678) target = $region32
      $region31: #{conv_block_forward.2} parent=27 // pred_region
        _
      $region32: #{conv_block_forward.2} parent=27 // pred_fallthru
        _
      // Predicated region
      $region33: #{conv_block_forward.2} parent=27 // pred_check
        %p3681 = pneg %p124
      $region34: #{conv_block_forward.2} parent=27 // pred_check_branch
        %3683 = sbr.rel (%p3681) target = $region36
      $region35: #{conv_block_forward.2} parent=27 // pred_region
        _
      $region36: #{conv_block_forward.2} parent=27 // pred_fallthru
        _
    $region28: #{conv_block_forward.2} parent=5 // pred_fallthru
      _
    %p3684 = scmp.le.s32.totalorder 2, %s10
    // Predicated region
    $region37: #{conv_block_forward.2} parent=5 // pred_check
      %p3685 = pneg %p3684
    $region38: #{conv_block_forward.2} parent=5 // pred_check_branch
      %3687 = sbr.rel (%p3685) target = $region40
    $region39: #{conv_block_forward.2} parent=5 // pred_region
      %s3688 = ssub.s32 %s10, 2
      // Predicated region
      $region41: #{conv_block_forward.2} parent=39 // pred_check
        %p3689 = pneg %p102
      $region42: #{conv_block_forward.2} parent=39 // pred_check_branch
        %3691 = sbr.rel (%p3689) target = $region44
      $region43: #{conv_block_forward.2} parent=39 // pred_region
        %p3692 = scmp.lt.s32.totalorder %s21, 1
        %s3693 = scalar_select %p3692, %s21, 1
        %p3694 = scmp.lt.s32.totalorder %s22, 0
        %s3695 = scalar_select %p3694, %s22, 0
        %s3696 = smul.addr %s3695, 32
        %s3697 = smul.addr %s3693, 32
        %s3698 = sadd.s32 %s3696, %s3697
        %s3699 = smul.addr %s3698, 8
        %s3700 = scalar_lea.vmem %s2, %s3699
      $region44: #{conv_block_forward.2} parent=39 // pred_fallthru
        _
      // Predicated region
      $region45: #{conv_block_forward.2} parent=39 // pred_check
        %p3701 = pneg %p130
      $region46: #{conv_block_forward.2} parent=39 // pred_check_branch
        %3703 = sbr.rel (%p3701) target = $region48
      $region47: #{conv_block_forward.2} parent=39 // pred_region
        %p3704 = scmp.lt.s32.totalorder %s21, 1
        %s3705 = scalar_select %p3704, %s21, 1
        %p3706 = scmp.lt.s32.totalorder %s22, 0
        %s3707 = scalar_select %p3706, %s22, 0
        %s3708 = sadd.s32 %s3707, %s3705
        %s3709 = smul.addr %s3708, 2
        %s3710 = scalar_lea.vmem %s3, %s3709
      $region48: #{conv_block_forward.2} parent=39 // pred_fallthru
        _
    $region40: #{conv_block_forward.2} parent=5 // pred_fallthru
      _
  $region6: #{conv_block_forward.2} parent=0 // loop_footer
    %s14 = sadd.s32 1, %s10
  $region7: #{conv_block_forward.2} parent=0 // loop_footer_branch
    %9 = sbr.rel target = $region3
  $region8: #{conv_block_forward.2} parent=0 // loop_exit
    _

</llo_original>
